<compile_context>
chip_gen: v6e
topology: v6e:2x2x1
jax: 0.10.0
libtpu: 0.0.40
codegen_flags: <defaults>
</compile_context>

<pallas_src>
import functools

import jax
import jax.numpy as jnp
from jax import lax
from jax.experimental import pallas as pl
from jax.experimental.pallas import tpu as pltpu

LPAD = 128  # lane-dense width used for the gate-logits block


def _round_up(x, m):
    return (x + m - 1) // m * m


def moe_linear_kernel(x_ref, wb_ref, bb_ref, wga_ref, wbv_ref, e_ref,
                      out_ref, logits_ref,
                      acc_ref, ga_ref, hs_ref, *, n_loras):
    j = pl.program_id(1)                      # output-column tile
    k = pl.program_id(2)                      # reduction (hidden) tile
    nk = pl.num_programs(2)
    lpad = logits_ref.shape[-1]

    # ---- init accumulators --------------------------------------------------
    @pl.when(k == 0)
    def _():
        acc_ref[...] = jnp.zeros_like(acc_ref)

    @pl.when(jnp.logical_and(j == 0, k == 0))
    def _():
        ga_ref[...] = jnp.zeros_like(ga_ref)

    x = x_ref[...]                            # (tm, tk)

    # ---- base linear accumulation ------------------------------------------
    acc_ref[...] += jnp.dot(x, wb_ref[...], preferred_element_type=jnp.float32)

    # ---- fused gate + lora_A accumulation (only needed once per row tile) ---
    @pl.when(j == 0)
    def _():
        ga_ref[...] += jnp.dot(x, wga_ref[...],
                               preferred_element_type=jnp.float32)

    # ---- finalize gating + gated hidden state at end of the K loop ----------
    @pl.when(jnp.logical_and(j == 0, k == nk - 1))
    def _():
        ga = ga_ref[...]                      # (tm, lpad + R) f32
        logits = ga[:, :lpad]                 # lane-padded gate logits
        h = ga[:, lpad:]                      # (tm, R) lora_A output

        logits_ref[...] = logits.astype(logits_ref.dtype)   # lane-dense store

        col = lax.broadcasted_iota(jnp.int32, logits.shape, 1)
        neg = jnp.float32(-jnp.inf)
        lg = jnp.where(col < n_loras, logits, neg)           # mask padded lanes

        # top-2 directly on the logits (softmax is monotone; its denominator
        # cancels in the top-k renormalization, so no full-width exp needed).
        m1 = jnp.max(lg, axis=-1, keepdims=True)
        i1 = jnp.min(jnp.where(lg == m1, col, lpad), axis=-1, keepdims=True)
        sel1 = col == i1
        lg2 = jnp.where(sel1, neg, lg)
        m2 = jnp.max(lg2, axis=-1, keepdims=True)
        i2 = jnp.min(jnp.where(lg2 == m2, col, lpad), axis=-1, keepdims=True)
        sel2 = col == i2

        e2 = jnp.exp(m2 - m1)                 # (tm, 1)
        inv = 1.0 / (1.0 + e2)
        gate = jnp.where(sel1, inv, jnp.where(sel2, e2 * inv, 0.0))
        gate = gate.astype(hs_ref.dtype)      # (tm, lpad)

        # expand gate per rank chunk via the (lpad, R) block-expansion matrix
        gate_exp = jnp.dot(gate, e_ref[...], preferred_element_type=jnp.float32)
        # gated/scaled hidden state kept in the compute dtype (no per-N cast).
        hs_ref[...] = h.astype(hs_ref.dtype) * gate_exp.astype(hs_ref.dtype)

    # ---- finalize this output tile ------------------------------------------
    @pl.when(k == nk - 1)
    def _():
        lora = jnp.dot(hs_ref[...], wbv_ref[...],
                       preferred_element_type=jnp.float32)    # (tm, tn)
        out_ref[...] = (acc_ref[...] + lora +
                        bb_ref[...].astype(jnp.float32)).astype(out_ref.dtype)


def moe_linear_forward(x, w_base, b_base, w_gate, w_a, w_b, expand, scaling,
                       *, tm=256, tn=256, tk=256):
    """x: (B, S, H); weights pre-transposed to (in, out).

    Returns (result, moe_logits) matching the torch module's eval forward.
    """
    B, S, H = x.shape
    T = B * S
    OUT = w_base.shape[1]
    L = w_gate.shape[1]          # number of adapters
    R = w_a.shape[1]             # concatenated rank (rmoe)
    assert 2 <= L <= LPAD, "top-2 gating needs 2 <= n_loras <= 128"

    dt = x.dtype
    itemsize = jnp.dtype(dt).itemsize

    # Effective tile sizes, clamped to the padded problem size.
    tm = min(tm, _round_up(T, 8))
    tk = min(tk, _round_up(H, 128))
    tn = min(tn, _round_up(OUT, 128))
    Tp = _round_up(T, tm)
    Hp = _round_up(H, tk)
    OUTp = _round_up(OUT, tn)
    nk = Hp // tk

    # --- wrapper-side constant folding / padding (done once) -----------------
    xf = jnp.pad(x.reshape(T, H), ((0, Tp - T), (0, Hp - H)))
    wb = jnp.pad(w_base, ((0, Hp - H), (0, OUTp - OUT)))
    bb = jnp.pad(b_base, (0, OUTp - OUT)).reshape(1, OUTp).astype(dt)
    # Fuse gate + lora_A weights into one wide operand: cols [0, LPAD) are the
    # lane-padded gate, cols [LPAD, LPAD+R) are lora_A.
    wg = jnp.pad(w_gate, ((0, Hp - H), (0, LPAD - L)))
    wa = jnp.pad(w_a, ((0, Hp - H), (0, 0)))
    wga = jnp.concatenate([wg, wa], axis=1)                  # (Hp, LPAD + R)
    # Fold LoRA scaling into lora_B once.
    wbv = jnp.pad(w_b.astype(dt) * jnp.asarray(scaling, dt),
                  ((0, 0), (0, OUTp - OUT)))                 # (R, OUTp)
    ex = jnp.pad(expand.astype(dt), ((0, LPAD - L), (0, 0))) # (LPAD, R)

    # gate/A K-tile: only advanced while j == 0 (where it is consumed); hold
    # the index at nk-1 for j > 0 so the operand is not re-fetched per N tile.
    def wga_map(i, j, k):
        return (jnp.where(j == 0, k, nk - 1), 0)

    # VMEM budget: double-buffered inputs/outputs + scratch, with headroom.
    vmem_est = 2 * (tm * tk + tk * tn + tn + tk * (LPAD + R) + R * tn +
                    LPAD * R + tm * tn + tm * LPAD) * itemsize
    vmem_est += 4 * (tm * tn + tm * (LPAD + R)) + itemsize * tm * R
    vmem_limit = int(min(64 * 2**20, max(1.5 * vmem_est + (2 << 20), 16 << 20)))

    out, logits = pl.pallas_call(
        functools.partial(moe_linear_kernel, n_loras=L),
        out_shape=(jax.ShapeDtypeStruct((Tp, OUTp), dt),
                   jax.ShapeDtypeStruct((Tp, LPAD), dt)),
        grid_spec=pltpu.PrefetchScalarGridSpec(
            num_scalar_prefetch=0,
            grid=(Tp // tm, OUTp // tn, nk),
            in_specs=[
                pl.BlockSpec((tm, tk), lambda i, j, k: (i, k)),      # x tile
                pl.BlockSpec((tk, tn), lambda i, j, k: (k, j)),      # base W
                pl.BlockSpec((1, tn), lambda i, j, k: (0, j)),       # base bias
                pl.BlockSpec((tk, LPAD + R), wga_map),               # [Wg | Wa]
                pl.BlockSpec((R, tn), lambda i, j, k: (0, j)),       # Wb * scale
                pl.BlockSpec((LPAD, R), lambda i, j, k: (0, 0)),     # expand E
            ],
            out_specs=[
                pl.BlockSpec((tm, tn), lambda i, j, k: (i, j)),      # result
                pl.BlockSpec((tm, LPAD), lambda i, j, k: (i, 0)),    # logits
            ],
            scratch_shapes=[
                pltpu.VMEM((tm, tn), jnp.float32),          # base accumulator
                pltpu.VMEM((tm, LPAD + R), jnp.float32),    # fused gate+A acc
                pltpu.VMEM((tm, R), dt),                    # gated/scaled h
            ],
        ),
        compiler_params=pltpu.CompilerParams(
            # The N axis carries state (gating computed at j == 0), so only the
            # row axis is megacore-parallel; K is the reduction axis.
            dimension_semantics=("parallel", "arbitrary", "arbitrary"),
            vmem_limit_bytes=vmem_limit,
        ),
    )(xf, wb, bb, wga, wbv, ex)

    return out[:T, :OUT].reshape(B, S, OUT), logits[:T, :L].reshape(B, S, L)


def moe_linear_reference(x, w_base, b_base, w_gate, w_a, w_b, scaling, r, top_k):
    """Pure-JAX reference mirroring the torch forward (eval mode)."""
    B, S, H = x.shape
    xf = x.reshape(-1, H)
    L = w_gate.shape[1]
    logits = xf @ w_gate
    probs = jax.nn.softmax(logits.astype(jnp.float32), axis=-1)
    w, idx = lax.top_k(probs, top_k)
    w = w / jnp.sum(w, axis=-1, keepdims=True)
    gate = jnp.zeros((xf.shape[0], L), probs.dtype)
    gate = gate.at[jnp.arange(xf.shape[0])[:, None], idx].set(w)
    gate = gate.astype(x.dtype)
    h = xf @ w_a
    gate_exp = jnp.repeat(gate, r, axis=-1)
    lora = (h * gate_exp * scaling) @ w_b
    base = xf @ w_base + b_base
    out = (base + lora).reshape(B, S, -1)
    return out, logits.astype(x.dtype).reshape(B, S, L)


def _make_inputs(key, B, S, H, OUT, n_loras, r_per, dtype):
    k_x, k_wb, k_bb, k_wg, k_wa, k_wbv = jax.random.split(key, 6)
    rmoe = n_loras * r_per
    x = jax.random.normal(k_x, (B, S, H), dtype)
    w_base = jax.random.normal(k_wb, (H, OUT), dtype) * 0.1
    b_base = jax.random.normal(k_bb, (OUT,), dtype) * 0.1
    w_gate = jax.random.normal(k_wg, (H, n_loras), dtype)              # nn.init.normal_
    w_a = jax.random.uniform(k_wa, (H, rmoe), dtype, -0.2, 0.2)        # ~kaiming_uniform
    # Torch zero-inits lora_B; use small random values to exercise the LoRA path.
    w_b = jax.random.normal(k_wbv, (rmoe, OUT), dtype) * 0.05
    # Block-expansion matrix: E[i, j] = 1 iff rank column j belongs to lora i.
    expand = jnp.repeat(jnp.eye(n_loras, dtype=jnp.float32), r_per, axis=1)
    return x, w_base, b_base, w_gate, w_a, w_b, expand


if __name__ == "__main__":
    # Keep kernel and pure-JAX reference numerically aligned for f32 inputs.
    jax.config.update("jax_default_matmul_precision", "highest")

    TOP_K = 2
    LORA_ALPHA = 16
    key = jax.random.PRNGKey(0)
    k1, k2 = jax.random.split(key)

    # --- test 1: tiny, single-tile grid --------------------------------------
    B, S, H, OUT, N_LORAS, R_PER = 2, 16, 32, 48, 4, 8
    scaling = LORA_ALPHA / R_PER        # use_rslora=False
    x, w_base, b_base, w_gate, w_a, w_b, expand = _make_inputs(
        k1, B, S, H, OUT, N_LORAS, R_PER, jnp.float32)

    out, logits = moe_linear_forward(x, w_base, b_base, w_gate, w_a, w_b,
                                     expand, scaling)
    jax.block_until_ready((out, logits))
    ref_out, ref_logits = moe_linear_reference(x, w_base, b_base, w_gate, w_a,
                                               w_b, scaling, R_PER, TOP_K)
    assert out.shape == (B, S, OUT) and logits.shape == (B, S, N_LORAS)
    assert jnp.allclose(out, ref_out, atol=1e-4, rtol=1e-4)
    assert jnp.allclose(logits, ref_logits, atol=1e-4, rtol=1e-4)

    # --- test 2: multi-tile grid (exercises i>0, j>0, k>0 state carry) -------
    B2, S2, H2, OUT2, N_LORAS2, R_PER2 = 2, 24, 256, 256, 4, 8
    scaling2 = LORA_ALPHA / R_PER2
    x2, wb2, bb2, wg2, wa2, wv2, ex2 = _make_inputs(
        k2, B2, S2, H2, OUT2, N_LORAS2, R_PER2, jnp.float32)

    out2, logits2 = moe_linear_forward(x2, wb2, bb2, wg2, wa2, wv2, ex2,
                                       scaling2, tm=16, tn=128, tk=128)
    jax.block_until_ready((out2, logits2))
    ref_out2, ref_logits2 = moe_linear_reference(x2, wb2, bb2, wg2, wa2, wv2,
                                                 scaling2, R_PER2, TOP_K)
    assert out2.shape == (B2, S2, OUT2) and logits2.shape == (B2, S2, N_LORAS2)
    assert jnp.allclose(out2, ref_out2, atol=1e-3, rtol=1e-3)
    assert jnp.allclose(logits2, ref_logits2, atol=1e-3, rtol=1e-3)

    print("KERNEL_OK")
</pallas_src>

<mosaic_0001>
module attributes {stable_mosaic.version = 11 : i64} {
  func.func @moe_linear_kernel(%arg0: i32, %arg1: i32, %arg2: i32, %arg3: memref<32x128xf32, #tpu.memory_space<vmem>>, %arg4: memref<128x128xf32, #tpu.memory_space<vmem>>, %arg5: memref<1x128xf32, #tpu.memory_space<vmem>>, %arg6: memref<128x160xf32, #tpu.memory_space<vmem>>, %arg7: memref<32x128xf32, #tpu.memory_space<vmem>>, %arg8: memref<128x32xf32, #tpu.memory_space<vmem>>, %arg9: memref<32x128xf32, #tpu.memory_space<vmem>>, %arg10: memref<32x128xf32, #tpu.memory_space<vmem>>, %arg11: memref<32x128xf32, #tpu.memory_space<vmem>>, %arg12: memref<32x160xf32, #tpu.memory_space<vmem>>, %arg13: memref<32x32xf32, #tpu.memory_space<vmem>>) attributes {dimension_semantics = [#tpu.dimension_semantics<parallel>, #tpu.dimension_semantics<arbitrary>, #tpu.dimension_semantics<arbitrary>], iteration_bounds = array<i64: 1, 1, 1>, scalar_prefetch = 0 : i64, scratch_operands = 3 : i64, tpu.core_type = #tpu.core_type<tc>, window_params = [{transform_indices = @transform_0, window_bounds = array<i64: 32, 128>}, {transform_indices = @transform_1, window_bounds = array<i64: 128, 128>}, {transform_indices = @transform_2, window_bounds = array<i64: 1, 128>}, {transform_indices = @transform_3, window_bounds = array<i64: 128, 160>}, {transform_indices = @transform_4, window_bounds = array<i64: 32, 128>}, {pipeline_mode = #tpu.pipeline_mode<synchronous>, transform_indices = @transform_5, window_bounds = array<i64: 128, 32>}, {transform_indices = @transform_6, window_bounds = array<i64: 32, 128>}, {transform_indices = @transform_7, window_bounds = array<i64: 32, 128>}]} {
    %c0_i32 = arith.constant 0 : i32
    %0 = arith.cmpi eq, %arg2, %c0_i32 : i32
    %1 = arith.extui %0 : i1 to i32
    %c0_i32_0 = arith.constant 0 : i32
    %2 = arith.cmpi ne, %1, %c0_i32_0 : i32
    scf.if %2 {
      %cst_18 = arith.constant 0.000000e+00 : f32
      %25 = vector.broadcast %cst_18 : f32 to vector<32x128xf32>
      %c0_19 = arith.constant 0 : index
      %c0_20 = arith.constant 0 : index
      %26 = vector.load %arg11[%c0_19, %c0_20] : memref<32x128xf32, #tpu.memory_space<vmem>>, vector<32x128xf32>
      tpu.vector_store %arg11[%c0_19, %c0_20], %25 {strides = array<i32>} : memref<32x128xf32, #tpu.memory_space<vmem>>, vector<32x128xf32>,
    } else {
    }
    %c0_i32_1 = arith.constant 0 : i32
    %3 = arith.cmpi eq, %arg1, %c0_i32_1 : i32
    %c0_i32_2 = arith.constant 0 : i32
    %4 = arith.cmpi eq, %arg2, %c0_i32_2 : i32
    %5 = arith.andi %3, %4 : i1
    %6 = arith.extui %5 : i1 to i32
    %c0_i32_3 = arith.constant 0 : i32
    %7 = arith.cmpi ne, %6, %c0_i32_3 : i32
    scf.if %7 {
      %cst_18 = arith.constant 0.000000e+00 : f32
      %25 = vector.broadcast %cst_18 : f32 to vector<32x160xf32>
      %c0_19 = arith.constant 0 : index
      %c0_20 = arith.constant 0 : index
      %26 = vector.load %arg12[%c0_19, %c0_20] : memref<32x160xf32, #tpu.memory_space<vmem>>, vector<32x160xf32>
      tpu.vector_store %arg12[%c0_19, %c0_20], %25 {strides = array<i32>} : memref<32x160xf32, #tpu.memory_space<vmem>>, vector<32x160xf32>,
    } else {
    }
    %c0 = arith.constant 0 : index
    %c0_4 = arith.constant 0 : index
    %8 = vector.load %arg3[%c0, %c0_4] : memref<32x128xf32, #tpu.memory_space<vmem>>, vector<32x128xf32>
    %c0_5 = arith.constant 0 : index
    %c0_6 = arith.constant 0 : index
    %9 = vector.load %arg11[%c0_5, %c0_6] : memref<32x128xf32, #tpu.memory_space<vmem>>, vector<32x128xf32>
    %c0_7 = arith.constant 0 : index
    %c0_8 = arith.constant 0 : index
    %10 = vector.load %arg4[%c0_7, %c0_8] : memref<128x128xf32, #tpu.memory_space<vmem>>, vector<128x128xf32>
    %cst = arith.constant dense<0.000000e+00> : vector<32x128xf32>
    %11 = tpu.matmul %8, %10, %cst {dimension_numbers = #tpu.dot_dimension_numbers<[1], [0], [0], [1], [0, 0, 1, 1], [], []>, precision = #tpu.contract_precision<fp32>} : vector<32x128xf32>, vector<128x128xf32>, vector<32x128xf32> -> vector<32x128xf32>
    %12 = arith.addf %9, %11 : vector<32x128xf32>
    %c0_9 = arith.constant 0 : index
    %c0_10 = arith.constant 0 : index
    %13 = vector.load %arg11[%c0_9, %c0_10] : memref<32x128xf32, #tpu.memory_space<vmem>>, vector<32x128xf32>
    tpu.vector_store %arg11[%c0_9, %c0_10], %12 {strides = array<i32>} : memref<32x128xf32, #tpu.memory_space<vmem>>, vector<32x128xf32>,
    %c0_i32_11 = arith.constant 0 : i32
    %14 = arith.cmpi eq, %arg1, %c0_i32_11 : i32
    %15 = arith.extui %14 : i1 to i32
    %c0_i32_12 = arith.constant 0 : i32
    %16 = arith.cmpi ne, %15, %c0_i32_12 : i32
    scf.if %16 {
      %c0_18 = arith.constant 0 : index
      %c0_19 = arith.constant 0 : index
      %25 = vector.load %arg12[%c0_18, %c0_19] : memref<32x160xf32, #tpu.memory_space<vmem>>, vector<32x160xf32>
      %c0_20 = arith.constant 0 : index
      %c0_21 = arith.constant 0 : index
      %26 = vector.load %arg6[%c0_20, %c0_21] : memref<128x160xf32, #tpu.memory_space<vmem>>, vector<128x160xf32>
      %cst_22 = arith.constant dense<0.000000e+00> : vector<32x160xf32>
      %27 = tpu.matmul %8, %26, %cst_22 {dimension_numbers = #tpu.dot_dimension_numbers<[1], [0], [0], [1], [0, 0, 1, 1], [], []>, precision = #tpu.contract_precision<fp32>} : vector<32x128xf32>, vector<128x160xf32>, vector<32x160xf32> -> vector<32x160xf32>
      %28 = arith.addf %25, %27 : vector<32x160xf32>
      %c0_23 = arith.constant 0 : index
      %c0_24 = arith.constant 0 : index
      %29 = vector.load %arg12[%c0_23, %c0_24] : memref<32x160xf32, #tpu.memory_space<vmem>>, vector<32x160xf32>
      tpu.vector_store %arg12[%c0_23, %c0_24], %28 {strides = array<i32>} : memref<32x160xf32, #tpu.memory_space<vmem>>, vector<32x160xf32>,
    } else {
    }
    %c0_i32_13 = arith.constant 0 : i32
    %17 = arith.cmpi eq, %arg1, %c0_i32_13 : i32
    %c0_i32_14 = arith.constant 0 : i32
    %18 = arith.cmpi eq, %arg2, %c0_i32_14 : i32
    %19 = arith.andi %17, %18 : i1
    %20 = arith.extui %19 : i1 to i32
    %c0_i32_15 = arith.constant 0 : i32
    %21 = arith.cmpi ne, %20, %c0_i32_15 : i32
    scf.if %21 {
      %c0_18 = arith.constant 0 : index
      %c0_19 = arith.constant 0 : index
      %25 = vector.load %arg12[%c0_18, %c0_19] : memref<32x160xf32, #tpu.memory_space<vmem>>, vector<32x160xf32>
      %26 = vector.extract_strided_slice %25 {offsets = [0, 0], sizes = [32, 128], strides = [1, 1]} : vector<32x160xf32> to vector<32x128xf32>
      %27 = vector.extract_strided_slice %25 {offsets = [0, 128], sizes = [32, 32], strides = [1, 1]} : vector<32x160xf32> to vector<32x32xf32>
      %c0_20 = arith.constant 0 : index
      %c0_21 = arith.constant 0 : index
      %28 = vector.load %arg10[%c0_20, %c0_21] : memref<32x128xf32, #tpu.memory_space<vmem>>, vector<32x128xf32>
      tpu.vector_store %arg10[%c0_20, %c0_21], %26 {strides = array<i32>} : memref<32x128xf32, #tpu.memory_space<vmem>>, vector<32x128xf32>,
      %29 = tpu.iota {dimensions = array<i32: 1>} : vector<32x128xi32>
      %c4_i32 = arith.constant 4 : i32
      %30 = vector.broadcast %c4_i32 : i32 to vector<32x128xi32>
      %31 = arith.cmpi slt, %29, %30 : vector<32x128xi32>
      %cst_22 = arith.constant 0xFF800000 : f32
      %32 = vector.broadcast %cst_22 : f32 to vector<32x128xf32>
      %33 = arith.select %31, %26, %32 : vector<32x128xi1>, vector<32x128xf32>
      %cst_23 = arith.constant dense<0xFF800000> : vector<32xf32>
      %34 = vector.multi_reduction <maximumf>, %33, %cst_23 [1] : vector<32x128xf32> to vector<32xf32>
      %35 = vector.shape_cast %34 : vector<32xf32> to vector<32x1xf32>
      %36 = vector.broadcast %35 : vector<32x1xf32> to vector<32x128xf32>
      %37 = arith.cmpf oeq, %33, %36 : vector<32x128xf32>
      %c128_i32 = arith.constant 128 : i32
      %38 = vector.broadcast %c128_i32 : i32 to vector<32x128xi32>
      %39 = arith.select %37, %29, %38 : vector<32x128xi1>, vector<32x128xi32>
      %cst_24 = arith.constant dense<2147483647> : vector<32xi32>
      %40 = vector.multi_reduction <minsi>, %39, %cst_24 [1] : vector<32x128xi32> to vector<32xi32>
      %41 = vector.shape_cast %40 : vector<32xi32> to vector<32x1xi32>
      %42 = vector.broadcast %41 : vector<32x1xi32> to vector<32x128xi32>
      %43 = arith.cmpi eq, %29, %42 : vector<32x128xi32>
      %cst_25 = arith.constant 0xFF800000 : f32
      %44 = vector.broadcast %cst_25 : f32 to vector<32x128xf32>
      %45 = arith.select %43, %44, %33 : vector<32x128xi1>, vector<32x128xf32>
      %cst_26 = arith.constant dense<0xFF800000> : vector<32xf32>
      %46 = vector.multi_reduction <maximumf>, %45, %cst_26 [1] : vector<32x128xf32> to vector<32xf32>
      %47 = vector.shape_cast %46 : vector<32xf32> to vector<32x1xf32>
      %48 = vector.broadcast %47 : vector<32x1xf32> to vector<32x128xf32>
      %49 = arith.cmpf oeq, %45, %48 : vector<32x128xf32>
      %c128_i32_27 = arith.constant 128 : i32
      %50 = vector.broadcast %c128_i32_27 : i32 to vector<32x128xi32>
      %51 = arith.select %49, %29, %50 : vector<32x128xi1>, vector<32x128xi32>
      %cst_28 = arith.constant dense<2147483647> : vector<32xi32>
      %52 = vector.multi_reduction <minsi>, %51, %cst_28 [1] : vector<32x128xi32> to vector<32xi32>
      %53 = vector.shape_cast %52 : vector<32xi32> to vector<32x1xi32>
      %54 = vector.broadcast %53 : vector<32x1xi32> to vector<32x128xi32>
      %55 = arith.cmpi eq, %29, %54 : vector<32x128xi32>
      %56 = arith.subf %47, %35 : vector<32x1xf32>
      %57 = math.exp %56 : vector<32x1xf32>
      %cst_29 = arith.constant 1.000000e+00 : f32
      %58 = vector.broadcast %cst_29 : f32 to vector<32x1xf32>
      %59 = arith.addf %58, %57 : vector<32x1xf32>
      %cst_30 = arith.constant 1.000000e+00 : f32
      %60 = vector.broadcast %cst_30 : f32 to vector<32x1xf32>
      %61 = arith.divf %60, %59 : vector<32x1xf32>
      %62 = arith.mulf %57, %61 : vector<32x1xf32>
      %cst_31 = arith.constant 0.000000e+00 : f32
      %63 = vector.shape_cast %62 : vector<32x1xf32> to vector<32x1xf32>
      %64 = vector.broadcast %63 : vector<32x1xf32> to vector<32x128xf32>
      %65 = vector.broadcast %cst_31 : f32 to vector<32x128xf32>
      %66 = arith.select %55, %64, %65 : vector<32x128xi1>, vector<32x128xf32>
      %67 = vector.shape_cast %61 : vector<32x1xf32> to vector<32x1xf32>
      %68 = vector.broadcast %67 : vector<32x1xf32> to vector<32x128xf32>
      %69 = arith.select %43, %68, %66 : vector<32x128xi1>, vector<32x128xf32>
      %c0_32 = arith.constant 0 : index
      %c0_33 = arith.constant 0 : index
      %70 = vector.load %arg8[%c0_32, %c0_33] : memref<128x32xf32, #tpu.memory_space<vmem>>, vector<128x32xf32>
      %cst_34 = arith.constant dense<0.000000e+00> : vector<32x32xf32>
      %71 = tpu.matmul %69, %70, %cst_34 {dimension_numbers = #tpu.dot_dimension_numbers<[1], [0], [0], [1], [0, 0, 1, 1], [], []>, precision = #tpu.contract_precision<fp32>} : vector<32x128xf32>, vector<128x32xf32>, vector<32x32xf32> -> vector<32x32xf32>
      %72 = arith.mulf %27, %71 : vector<32x32xf32>
      %c0_35 = arith.constant 0 : index
      %c0_36 = arith.constant 0 : index
      %73 = vector.load %arg13[%c0_35, %c0_36] : memref<32x32xf32, #tpu.memory_space<vmem>>, vector<32x32xf32>
      tpu.vector_store %arg13[%c0_35, %c0_36], %72 {strides = array<i32>} : memref<32x32xf32, #tpu.memory_space<vmem>>, vector<32x32xf32>,
    } else {
    }
    %c0_i32_16 = arith.constant 0 : i32
    %22 = arith.cmpi eq, %arg2, %c0_i32_16 : i32
    %23 = arith.extui %22 : i1 to i32
    %c0_i32_17 = arith.constant 0 : i32
    %24 = arith.cmpi ne, %23, %c0_i32_17 : i32
    scf.if %24 {
      %c0_18 = arith.constant 0 : index
      %c0_19 = arith.constant 0 : index
      %25 = vector.load %arg13[%c0_18, %c0_19] : memref<32x32xf32, #tpu.memory_space<vmem>>, vector<32x32xf32>
      %c0_20 = arith.constant 0 : index
      %c0_21 = arith.constant 0 : index
      %26 = vector.load %arg7[%c0_20, %c0_21] : memref<32x128xf32, #tpu.memory_space<vmem>>, vector<32x128xf32>
      %cst_22 = arith.constant dense<0.000000e+00> : vector<32x128xf32>
      %27 = tpu.matmul %25, %26, %cst_22 {dimension_numbers = #tpu.dot_dimension_numbers<[1], [0], [0], [1], [0, 0, 1, 1], [], []>, precision = #tpu.contract_precision<fp32>} : vector<32x32xf32>, vector<32x128xf32>, vector<32x128xf32> -> vector<32x128xf32>
      %c0_23 = arith.constant 0 : index
      %c0_24 = arith.constant 0 : index
      %28 = vector.load %arg11[%c0_23, %c0_24] : memref<32x128xf32, #tpu.memory_space<vmem>>, vector<32x128xf32>
      %29 = arith.addf %28, %27 : vector<32x128xf32>
      %c0_25 = arith.constant 0 : index
      %c0_26 = arith.constant 0 : index
      %30 = vector.load %arg5[%c0_25, %c0_26] : memref<1x128xf32, #tpu.memory_space<vmem>>, vector<1x128xf32>
      %31 = vector.broadcast %30 : vector<1x128xf32> to vector<32x128xf32>
      %32 = arith.addf %29, %31 : vector<32x128xf32>
      %c0_27 = arith.constant 0 : index
      %c0_28 = arith.constant 0 : index
      %33 = vector.load %arg9[%c0_27, %c0_28] : memref<32x128xf32, #tpu.memory_space<vmem>>, vector<32x128xf32>
      tpu.vector_store %arg9[%c0_27, %c0_28], %32 {strides = array<i32>} : memref<32x128xf32, #tpu.memory_space<vmem>>, vector<32x128xf32>,
    } else {
    }
    return
  }
  func.func @transform_0(%arg0: i32, %arg1: i32, %arg2: i32) -> (i32, i32) {
    %c0_i32 = arith.constant 0 : i32
    return %arg0, %arg2 : i32, i32
  }
  func.func @transform_1(%arg0: i32, %arg1: i32, %arg2: i32) -> (i32, i32) {
    %c0_i32 = arith.constant 0 : i32
    return %arg2, %arg1 : i32, i32
  }
  func.func @transform_2(%arg0: i32, %arg1: i32, %arg2: i32) -> (i32, i32) {
    %c0_i32 = arith.constant 0 : i32
    %c0_i32_0 = arith.constant 0 : i32
    return %c0_i32, %arg1 : i32, i32
  }
  func.func @transform_3(%arg0: i32, %arg1: i32, %arg2: i32) -> (i32, i32) {
    %c0_i32 = arith.constant 0 : i32
    %0 = arith.cmpi eq, %arg1, %c0_i32 : i32
    %c0_i32_0 = arith.constant 0 : i32
    %1 = arith.select %0, %arg2, %c0_i32_0 : i32
    %c0_i32_1 = arith.constant 0 : i32
    %c0_i32_2 = arith.constant 0 : i32
    return %1, %c0_i32_1 : i32, i32
  }
  func.func @transform_4(%arg0: i32, %arg1: i32, %arg2: i32) -> (i32, i32) {
    %c0_i32 = arith.constant 0 : i32
    %c0_i32_0 = arith.constant 0 : i32
    return %c0_i32, %arg1 : i32, i32
  }
  func.func @transform_5(%arg0: i32, %arg1: i32, %arg2: i32) -> (i32, i32) {
    %c0_i32 = arith.constant 0 : i32
    %c0_i32_0 = arith.constant 0 : i32
    %c0_i32_1 = arith.constant 0 : i32
    return %c0_i32, %c0_i32_0 : i32, i32
  }
  func.func @transform_6(%arg0: i32, %arg1: i32, %arg2: i32) -> (i32, i32) {
    %c0_i32 = arith.constant 0 : i32
    return %arg0, %arg1 : i32, i32
  }
  func.func @transform_7(%arg0: i32, %arg1: i32, %arg2: i32) -> (i32, i32) {
    %c0_i32 = arith.constant 0 : i32
    %c0_i32_0 = arith.constant 0 : i32
    return %arg0, %c0_i32 : i32, i32
  }
}

</mosaic_0001>

<llo_original>
// kernel: tpu_custom_call.1
$region0: #{tpu_custom_call.1}
  #allocation0 [shape = 'u32[]', space=smem, size = 0x4, offset = 0x4, fixed_abs, tag = 'smem constant byte address 0x4 - core index']
  #allocation1 [shape = 'u32[144,128]{1,0:T(1,128)}', space=vmem, size = 0x12000, scoped, tag = 'internal scratch']
  #allocation2 [shape = 'f32[32,128]{1,0:T(8,128)}', space=vmem, size = 0x4000, scoped, tag = 'scratch operand']
  #allocation3 [shape = 'f32[32,160]{1,0:T(8,128)}', space=vmem, size = 0x8000, scoped, tag = 'scratch operand']
  #allocation4 [shape = 'f32[32,32]{1,0:T(8,128)}', space=vmem, size = 0x4000, scoped, tag = 'scratch operand']
  %s0 = inlined_call_operand.vmem [shape: f32[32,128], index: 0, kind: input, shape index: {}]
  %s1 = inlined_call_operand.vmem [shape: f32[128,128], index: 1, kind: input, shape index: {}]
  %s2 = inlined_call_operand.vmem [shape: f32[1,128], index: 2, kind: input, shape index: {}]
  %s3 = inlined_call_operand.vmem [shape: f32[128,160], index: 3, kind: input, shape index: {}]
  %s4 = inlined_call_operand.vmem [shape: f32[32,128], index: 4, kind: input, shape index: {}]
  %s5 = inlined_call_operand.vmem [shape: f32[128,32], index: 5, kind: input, shape index: {}]
  %s6 = inlined_call_operand.hbm [shape: f32[32,128], index: 6, kind: output, shape index: {0}]
  %s7 = inlined_call_operand.hbm [shape: f32[32,128], index: 7, kind: output, shape index: {1}]
  %8 = xla_tuple %s6, %s7
  %s9 = sld [smem:[#allocation0]]
  $region62: #{tpu_custom_call.1} parent=0
    _
  %s11 = ssub.s32 1, %s9
  %s12 = scalar_select 0, %s11, %s9
  $region1: #{tpu_custom_call.1} parent=0
    #allocation5 [shape = 'u8[16384]{0}', space=vmem, size = 0x4000, scoped, tag = 'output window, operand 0, single buffered']
    #allocation6 [shape = 's32[1]{0}', space=sflag, size = 0x4, scoped, tag = 'scoped memory for tpu_custom_call.1']
    #allocation7 [shape = 'u8[16384]{0}', space=vmem, size = 0x4000, scoped, tag = 'output window, operand 1, single buffered']
    #allocation8 [shape = 's32[1]{0}', space=sflag, size = 0x4, scoped, tag = 'scoped memory for tpu_custom_call.1']
    %13 = vsyncpa [#allocation6], 0
    %14 = vsyncpa [#allocation8], 0
    // Predicated region
    $region2: #{tpu_custom_call.1} parent=1 // pred_check
      _
    $region3: #{tpu_custom_call.1} parent=1 // pred_check_branch
      %16 = sbr.rel (0) target = $region5
    $region4: #{tpu_custom_call.1} parent=1 // pred_region
      _
    $region5: #{tpu_custom_call.1} parent=1 // pred_fallthru
      _
    // Predicated region
    $region6: #{tpu_custom_call.1} parent=1 // pred_check
      _
    $region7: #{tpu_custom_call.1} parent=1 // pred_check_branch
      %18 = sbr.rel (0) target = $region9
    $region8: #{tpu_custom_call.1} parent=1 // pred_region
      _
    $region9: #{tpu_custom_call.1} parent=1 // pred_fallthru
      _
    // Predicated region
    $region10: #{tpu_custom_call.1} parent=1 // pred_check
      _
    $region11: #{tpu_custom_call.1} parent=1 // pred_check_branch
      %20 = sbr.rel (0) target = $region13
    $region12: #{tpu_custom_call.1} parent=1 // pred_region
      _
    $region13: #{tpu_custom_call.1} parent=1 // pred_fallthru
      _
    // Predicated region
    $region14: #{tpu_custom_call.1} parent=1 // pred_check
      _
    $region15: #{tpu_custom_call.1} parent=1 // pred_check_branch
      %22 = sbr.rel (0) target = $region17
    $region16: #{tpu_custom_call.1} parent=1 // pred_region
      %p23 = scmp.eq.s32.totalorder 0, 0
      %s24 = scalar_select %p23, 0, 0
      %s25 = smul.u32 16, %s24
      %p26 = scmp.lt.s32.totalorder %s25, 15
      %s27 = scalar_select %p26, %s25, 15
      %s28 = smul.addr %s27, 2
      %s29 = smul.addr %s28, 8
      %s30 = scalar_lea.vmem %s3, %s29
      %p31 = scmp.eq.s32.totalorder 0, 0
      %s32 = scalar_select %p31, 0, 0
      %s33 = smul.u32 16, %s32
    $region17: #{tpu_custom_call.1} parent=1 // pred_fallthru
      _
    // Predicated region
    $region18: #{tpu_custom_call.1} parent=1 // pred_check
      _
    $region19: #{tpu_custom_call.1} parent=1 // pred_check_branch
      %35 = sbr.rel (0) target = $region21
    $region20: #{tpu_custom_call.1} parent=1 // pred_region
      _
    $region21: #{tpu_custom_call.1} parent=1 // pred_fallthru
      _
    // Predicated region
    $region22: #{tpu_custom_call.1} parent=1 // pred_check
      _
    $region23: #{tpu_custom_call.1} parent=1 // pred_check_branch
      %37 = sbr.rel (0) target = $region25
    $region24: #{tpu_custom_call.1} parent=1 // pred_region
      _
    $region25: #{tpu_custom_call.1} parent=1 // pred_fallthru
      _
    %p38 = scmp.eq.s32.totalorder 0, 0
    %s39 = scalar_select %p38, 0, 0
    %s40 = smul.u32 16, %s39
    %p41 = scmp.lt.s32.totalorder %s40, 15
    %s42 = scalar_select %p41, %s40, 15
    %s43 = smul.addr %s42, 2
    %s44 = smul.addr %s43, 8
    %s45 = scalar_lea.vmem %s3, %s44
    %p46 = scmp.eq.s32.totalorder 0, 0
    %s47 = scalar_select %p46, 0, 0
    %s48 = smul.u32 16, %s47
    %p49 = scmp.lt.s32.totalorder %s48, 15
    %s50 = scalar_select %p49, %s48, 15
    %s51 = smul.addr %s50, 2
    %s52 = smul.addr %s51, 8
    %s53 = scalar_lea.vmem %s3, %s52
    %p54 = scmp.eq.s32.totalorder 0, 0
    %s55 = scalar_select %p54, 0, 0
    %s56 = smul.u32 16, %s55
    %p57 = scmp.eq.s32.totalorder 0, 0
    // Predicated region
    $region26: #{tpu_custom_call.1} parent=1 // pred_check
      %p58 = pneg %p57
    $region27: #{tpu_custom_call.1} parent=1 // pred_check_branch
      %60 = sbr.rel (%p58) target = $region29
    $region28: #{tpu_custom_call.1} parent=1 // pred_region
      %61 = vst [vmem:[#allocation2] sm:$0xff] 0.0
      %62 = vst [vmem:[#allocation2 + $0x8] sm:$0xff] 0.0
      %63 = vst [vmem:[#allocation2 + $0x10] sm:$0xff] 0.0
      %64 = vst [vmem:[#allocation2 + $0x18] sm:$0xff] 0.0
    $region29: #{tpu_custom_call.1} parent=1 // pred_fallthru
      _
    %p65 = scmp.eq.s32.totalorder 0, 0
    %p66 = pnand %p65, %p57
    %p67 = pneg %p66
    // Predicated region
    $region30: #{tpu_custom_call.1} parent=1 // pred_check
      _
    $region31: #{tpu_custom_call.1} parent=1 // pred_check_branch
      %69 = sbr.rel (%p66) target = $region33
    $region32: #{tpu_custom_call.1} parent=1 // pred_region
      %70 = vst [vmem:[#allocation3] sm:$0xff] 0.0
      %vm71 = vcmask 261120
      %72 = vst.msk [vmem:[#allocation3 + $0x8] sm:$0xff] %vm71, 0.0
      %73 = vst [vmem:[#allocation3 + $0x10] sm:$0xff] 0.0
      %74 = vst.msk [vmem:[#allocation3 + $0x18] sm:$0xff] %vm71, 0.0
      %75 = vst [vmem:[#allocation3 + $0x20] sm:$0xff] 0.0
      %76 = vst.msk [vmem:[#allocation3 + $0x28] sm:$0xff] %vm71, 0.0
      %77 = vst [vmem:[#allocation3 + $0x30] sm:$0xff] 0.0
      %78 = vst.msk [vmem:[#allocation3 + $0x38] sm:$0xff] %vm71, 0.0
    $region33: #{tpu_custom_call.1} parent=1 // pred_fallthru
      _
    %v79 = vld [vmem:[%s0] sm:$0xff]
    %v80 = vld [vmem:[%s0 + $0x8] sm:$0xff]
    %v81 = vld [vmem:[%s0 + $0x10] sm:$0xff]
    %v82 = vld [vmem:[%s0 + $0x18] sm:$0xff]
    %v83 = vld [vmem:[#allocation2] sm:$0xff]
    %v84 = vld [vmem:[#allocation2 + $0x8] sm:$0xff]
    %v85 = vld [vmem:[#allocation2 + $0x10] sm:$0xff]
    %v86 = vld [vmem:[#allocation2 + $0x18] sm:$0xff]
    %v87 = vld [vmem:[%s1] sm:$0xff]
    %v88 = vld [vmem:[%s1 + $0x8] sm:$0xff]
    %v89 = vld [vmem:[%s1 + $0x10] sm:$0xff]
    %v90 = vld [vmem:[%s1 + $0x18] sm:$0xff]
    %v91 = vld [vmem:[%s1 + $0x20] sm:$0xff]
    %v92 = vld [vmem:[%s1 + $0x28] sm:$0xff]
    %v93 = vld [vmem:[%s1 + $0x30] sm:$0xff]
    %v94 = vld [vmem:[%s1 + $0x38] sm:$0xff]
    %v95 = vld [vmem:[%s1 + $0x40] sm:$0xff]
    %v96 = vld [vmem:[%s1 + $0x48] sm:$0xff]
    %v97 = vld [vmem:[%s1 + $0x50] sm:$0xff]
    %v98 = vld [vmem:[%s1 + $0x58] sm:$0xff]
    %v99 = vld [vmem:[%s1 + $0x60] sm:$0xff]
    %v100 = vld [vmem:[%s1 + $0x68] sm:$0xff]
    %v101 = vld [vmem:[%s1 + $0x70] sm:$0xff]
    %v102 = vld [vmem:[%s1 + $0x78] sm:$0xff]
    %103 = vmatprep.subr.mxu0 0.0
    %v104 = vand.u32 %v102, 4294901760
    %105 = vmatpush1.msra.mxu0 %v104
    %106 = vmatprep.subr.mxu0 0.0
    %v107 = vand.u32 %v101, 4294901760
    %108 = vmatpush1.msra.mxu0 %v107
    %109 = vmatprep.subr.mxu0 0.0
    %v110 = vand.u32 %v100, 4294901760
    %111 = vmatpush1.msra.mxu0 %v110
    %112 = vmatprep.subr.mxu0 0.0
    %v113 = vand.u32 %v99, 4294901760
    %114 = vmatpush1.msra.mxu0 %v113
    %115 = vmatprep.subr.mxu0 0.0
    %v116 = vand.u32 %v98, 4294901760
    %117 = vmatpush1.msra.mxu0 %v116
    %118 = vmatprep.subr.mxu0 0.0
    %v119 = vand.u32 %v97, 4294901760
    %120 = vmatpush1.msra.mxu0 %v119
    %121 = vmatprep.subr.mxu0 0.0
    %v122 = vand.u32 %v96, 4294901760
    %123 = vmatpush1.msra.mxu0 %v122
    %124 = vmatprep.subr.mxu0 0.0
    %v125 = vand.u32 %v95, 4294901760
    %126 = vmatpush1.msra.mxu0 %v125
    %127 = vmatprep.subr.mxu0 0.0
    %v128 = vand.u32 %v94, 4294901760
    %129 = vmatpush1.msra.mxu0 %v128
    %130 = vmatprep.subr.mxu0 0.0
    %v131 = vand.u32 %v93, 4294901760
    %132 = vmatpush1.msra.mxu0 %v131
    %133 = vmatprep.subr.mxu0 0.0
    %v134 = vand.u32 %v92, 4294901760
    %135 = vmatpush1.msra.mxu0 %v134
    %136 = vmatprep.subr.mxu0 0.0
    %v137 = vand.u32 %v91, 4294901760
    %138 = vmatpush1.msra.mxu0 %v137
    %139 = vmatprep.subr.mxu0 0.0
    %v140 = vand.u32 %v90, 4294901760
    %141 = vmatpush1.msra.mxu0 %v140
    %142 = vmatprep.subr.mxu0 0.0
    %v143 = vand.u32 %v89, 4294901760
    %144 = vmatpush1.msra.mxu0 %v143
    %145 = vmatprep.subr.mxu0 0.0
    %v146 = vand.u32 %v88, 4294901760
    %147 = vmatpush1.msra.mxu0 %v146
    %148 = vmatprep.subr.mxu0 0.0
    %v149 = vand.u32 %v87, 4294901760
    %150 = vmatpush1.msra.mxu0 %v149
    %151 = vmatprep.subr.mxu0 0.0
    %152 = vmatpush2.msra.mxu0 0.0
    %153 = vmatprep.subr.mxu0 0.0
    %154 = vmatpush2.msra.mxu0 0.0
    %155 = vmatprep.subr.mxu0 0.0
    %156 = vmatpush2.msra.mxu0 0.0
    %157 = vmatprep.subr.mxu0 0.0
    %158 = vmatpush2.msra.mxu0 0.0
    %159 = vmatprep.subr.mxu0 0.0
    %160 = vmatpush2.msra.mxu0 0.0
    %161 = vmatprep.subr.mxu0 0.0
    %162 = vmatpush2.msra.mxu0 0.0
    %163 = vmatprep.subr.mxu0 0.0
    %164 = vmatpush2.msra.mxu0 0.0
    %165 = vmatprep.subr.mxu0 0.0
    %166 = vmatpush2.msra.mxu0 0.0
    %167 = vmatprep.subr.mxu0 0.0
    %168 = vmatpush2.msra.mxu0 0.0
    %169 = vmatprep.subr.mxu0 0.0
    %170 = vmatpush2.msra.mxu0 0.0
    %171 = vmatprep.subr.mxu0 0.0
    %172 = vmatpush2.msra.mxu0 0.0
    %173 = vmatprep.subr.mxu0 0.0
    %174 = vmatpush2.msra.mxu0 0.0
    %175 = vmatprep.subr.mxu0 0.0
    %176 = vmatpush2.msra.mxu0 0.0
    %177 = vmatprep.subr.mxu0 0.0
    %178 = vmatpush2.msra.mxu0 0.0
    %179 = vmatprep.subr.mxu0 0.0
    %180 = vmatpush2.msra.mxu0 0.0
    %181 = vmatprep.subr.mxu0 0.0
    %182 = vmatpush2.msra.mxu0 0.0
    %183 = vmatprep.mubr.f32.mxu0 0.0
    %v184 = vand.u32 %v79, 4294901760
    %v185 = vsub.f32 %v79, %v184
    %v186 = vand.u32 %v185, 4294901760
    %v187 = vsub.f32 %v185, %v186
    %v188 = vand.u32 %v187, 4294901760
    %189 = vmatmul.mubr.f32.gmra.mxu0 %v188
    %v190 = vpop.f32.mrf.mxu0
    %v191 = vadd.f32 0.0, %v190
    %v192 = vpop.f32.mrf.mxu0
    %193 = vmatprep.mubr.f32.mxu0 0.0
    %v194 = vand.u32 %v80, 4294901760
    %v195 = vsub.f32 %v80, %v194
    %v196 = vand.u32 %v195, 4294901760
    %v197 = vsub.f32 %v195, %v196
    %v198 = vand.u32 %v197, 4294901760
    %199 = vmatmul.mubr.f32.gmra.mxu0 %v198
    %v200 = vpop.f32.mrf.mxu0
    %v201 = vadd.f32 0.0, %v200
    %v202 = vpop.f32.mrf.mxu0
    %203 = vmatprep.mubr.f32.mxu0 0.0
    %v204 = vand.u32 %v81, 4294901760
    %v205 = vsub.f32 %v81, %v204
    %v206 = vand.u32 %v205, 4294901760
    %v207 = vsub.f32 %v205, %v206
    %v208 = vand.u32 %v207, 4294901760
    %209 = vmatmul.mubr.f32.gmra.mxu0 %v208
    %v210 = vpop.f32.mrf.mxu0
    %v211 = vadd.f32 0.0, %v210
    %v212 = vpop.f32.mrf.mxu0
    %213 = vmatprep.mubr.f32.mxu0 0.0
    %v214 = vand.u32 %v82, 4294901760
    %v215 = vsub.f32 %v82, %v214
    %v216 = vand.u32 %v215, 4294901760
    %v217 = vsub.f32 %v215, %v216
    %v218 = vand.u32 %v217, 4294901760
    %219 = vmatmul.mubr.f32.gmra.mxu0 %v218
    %v220 = vpop.f32.mrf.mxu0
    %v221 = vadd.f32 0.0, %v220
    %v222 = vpop.f32.mrf.mxu0
    %223 = vdwg.mxu0
    %224 = vmatprep.subr.mxu0 0.0
    %v225 = vand.u32 %v102, 4294901760
    %v226 = vsub.f32 %v102, %v225
    %v227 = vand.u32 %v226, 4294901760
    %v228 = vsub.f32 %v226, %v227
    %v229 = vand.u32 %v228, 4294901760
    %230 = vmatpush1.msra.mxu0 %v229
    %231 = vmatprep.subr.mxu0 0.0
    %v232 = vand.u32 %v101, 4294901760
    %v233 = vsub.f32 %v101, %v232
    %v234 = vand.u32 %v233, 4294901760
    %v235 = vsub.f32 %v233, %v234
    %v236 = vand.u32 %v235, 4294901760
    %237 = vmatpush1.msra.mxu0 %v236
    %238 = vmatprep.subr.mxu0 0.0
    %v239 = vand.u32 %v100, 4294901760
    %v240 = vsub.f32 %v100, %v239
    %v241 = vand.u32 %v240, 4294901760
    %v242 = vsub.f32 %v240, %v241
    %v243 = vand.u32 %v242, 4294901760
    %244 = vmatpush1.msra.mxu0 %v243
    %245 = vmatprep.subr.mxu0 0.0
    %v246 = vand.u32 %v99, 4294901760
    %v247 = vsub.f32 %v99, %v246
    %v248 = vand.u32 %v247, 4294901760
    %v249 = vsub.f32 %v247, %v248
    %v250 = vand.u32 %v249, 4294901760
    %251 = vmatpush1.msra.mxu0 %v250
    %252 = vmatprep.subr.mxu0 0.0
    %v253 = vand.u32 %v98, 4294901760
    %v254 = vsub.f32 %v98, %v253
    %v255 = vand.u32 %v254, 4294901760
    %v256 = vsub.f32 %v254, %v255
    %v257 = vand.u32 %v256, 4294901760
    %258 = vmatpush1.msra.mxu0 %v257
    %259 = vmatprep.subr.mxu0 0.0
    %v260 = vand.u32 %v97, 4294901760
    %v261 = vsub.f32 %v97, %v260
    %v262 = vand.u32 %v261, 4294901760
    %v263 = vsub.f32 %v261, %v262
    %v264 = vand.u32 %v263, 4294901760
    %265 = vmatpush1.msra.mxu0 %v264
    %266 = vmatprep.subr.mxu0 0.0
    %v267 = vand.u32 %v96, 4294901760
    %v268 = vsub.f32 %v96, %v267
    %v269 = vand.u32 %v268, 4294901760
    %v270 = vsub.f32 %v268, %v269
    %v271 = vand.u32 %v270, 4294901760
    %272 = vmatpush1.msra.mxu0 %v271
    %273 = vmatprep.subr.mxu0 0.0
    %v274 = vand.u32 %v95, 4294901760
    %v275 = vsub.f32 %v95, %v274
    %v276 = vand.u32 %v275, 4294901760
    %v277 = vsub.f32 %v275, %v276
    %v278 = vand.u32 %v277, 4294901760
    %279 = vmatpush1.msra.mxu0 %v278
    %280 = vmatprep.subr.mxu0 0.0
    %v281 = vand.u32 %v94, 4294901760
    %v282 = vsub.f32 %v94, %v281
    %v283 = vand.u32 %v282, 4294901760
    %v284 = vsub.f32 %v282, %v283
    %v285 = vand.u32 %v284, 4294901760
    %286 = vmatpush1.msra.mxu0 %v285
    %287 = vmatprep.subr.mxu0 0.0
    %v288 = vand.u32 %v93, 4294901760
    %v289 = vsub.f32 %v93, %v288
    %v290 = vand.u32 %v289, 4294901760
    %v291 = vsub.f32 %v289, %v290
    %v292 = vand.u32 %v291, 4294901760
    %293 = vmatpush1.msra.mxu0 %v292
    %294 = vmatprep.subr.mxu0 0.0
    %v295 = vand.u32 %v92, 4294901760
    %v296 = vsub.f32 %v92, %v295
    %v297 = vand.u32 %v296, 4294901760
    %v298 = vsub.f32 %v296, %v297
    %v299 = vand.u32 %v298, 4294901760
    %300 = vmatpush1.msra.mxu0 %v299
    %301 = vmatprep.subr.mxu0 0.0
    %v302 = vand.u32 %v91, 4294901760
    %v303 = vsub.f32 %v91, %v302
    %v304 = vand.u32 %v303, 4294901760
    %v305 = vsub.f32 %v303, %v304
    %v306 = vand.u32 %v305, 4294901760
    %307 = vmatpush1.msra.mxu0 %v306
    %308 = vmatprep.subr.mxu0 0.0
    %v309 = vand.u32 %v90, 4294901760
    %v310 = vsub.f32 %v90, %v309
    %v311 = vand.u32 %v310, 4294901760
    %v312 = vsub.f32 %v310, %v311
    %v313 = vand.u32 %v312, 4294901760
    %314 = vmatpush1.msra.mxu0 %v313
    %315 = vmatprep.subr.mxu0 0.0
    %v316 = vand.u32 %v89, 4294901760
    %v317 = vsub.f32 %v89, %v316
    %v318 = vand.u32 %v317, 4294901760
    %v319 = vsub.f32 %v317, %v318
    %v320 = vand.u32 %v319, 4294901760
    %321 = vmatpush1.msra.mxu0 %v320
    %322 = vmatprep.subr.mxu0 0.0
    %v323 = vand.u32 %v88, 4294901760
    %v324 = vsub.f32 %v88, %v323
    %v325 = vand.u32 %v324, 4294901760
    %v326 = vsub.f32 %v324, %v325
    %v327 = vand.u32 %v326, 4294901760
    %328 = vmatpush1.msra.mxu0 %v327
    %329 = vmatprep.subr.mxu0 0.0
    %v330 = vand.u32 %v87, 4294901760
    %v331 = vsub.f32 %v87, %v330
    %v332 = vand.u32 %v331, 4294901760
    %v333 = vsub.f32 %v331, %v332
    %v334 = vand.u32 %v333, 4294901760
    %335 = vmatpush1.msra.mxu0 %v334
    %336 = vmatprep.subr.mxu0 0.0
    %337 = vmatpush2.msra.mxu0 0.0
    %338 = vmatprep.subr.mxu0 0.0
    %339 = vmatpush2.msra.mxu0 0.0
    %340 = vmatprep.subr.mxu0 0.0
    %341 = vmatpush2.msra.mxu0 0.0
    %342 = vmatprep.subr.mxu0 0.0
    %343 = vmatpush2.msra.mxu0 0.0
    %344 = vmatprep.subr.mxu0 0.0
    %345 = vmatpush2.msra.mxu0 0.0
    %346 = vmatprep.subr.mxu0 0.0
    %347 = vmatpush2.msra.mxu0 0.0
    %348 = vmatprep.subr.mxu0 0.0
    %349 = vmatpush2.msra.mxu0 0.0
    %350 = vmatprep.subr.mxu0 0.0
    %351 = vmatpush2.msra.mxu0 0.0
    %352 = vmatprep.subr.mxu0 0.0
    %353 = vmatpush2.msra.mxu0 0.0
    %354 = vmatprep.subr.mxu0 0.0
    %355 = vmatpush2.msra.mxu0 0.0
    %356 = vmatprep.subr.mxu0 0.0
    %357 = vmatpush2.msra.mxu0 0.0
    %358 = vmatprep.subr.mxu0 0.0
    %359 = vmatpush2.msra.mxu0 0.0
    %360 = vmatprep.subr.mxu0 0.0
    %361 = vmatpush2.msra.mxu0 0.0
    %362 = vmatprep.subr.mxu0 0.0
    %363 = vmatpush2.msra.mxu0 0.0
    %364 = vmatprep.subr.mxu0 0.0
    %365 = vmatpush2.msra.mxu0 0.0
    %366 = vmatprep.subr.mxu0 0.0
    %367 = vmatpush2.msra.mxu0 0.0
    %368 = vmatprep.mubr.f32.mxu0 0.0
    %v369 = vand.u32 %v79, 4294901760
    %370 = vmatmul.mubr.f32.gmra.mxu0 %v369
    %v371 = vpop.f32.mrf.mxu0
    %v372 = vadd.f32 %v191, %v371
    %v373 = vpop.f32.mrf.mxu0
    %374 = vmatprep.mubr.f32.mxu0 0.0
    %v375 = vand.u32 %v80, 4294901760
    %376 = vmatmul.mubr.f32.gmra.mxu0 %v375
    %v377 = vpop.f32.mrf.mxu0
    %v378 = vadd.f32 %v201, %v377
    %v379 = vpop.f32.mrf.mxu0
    %380 = vmatprep.mubr.f32.mxu0 0.0
    %v381 = vand.u32 %v81, 4294901760
    %382 = vmatmul.mubr.f32.gmra.mxu0 %v381
    %v383 = vpop.f32.mrf.mxu0
    %v384 = vadd.f32 %v211, %v383
    %v385 = vpop.f32.mrf.mxu0
    %386 = vmatprep.mubr.f32.mxu0 0.0
    %v387 = vand.u32 %v82, 4294901760
    %388 = vmatmul.mubr.f32.gmra.mxu0 %v387
    %v389 = vpop.f32.mrf.mxu0
    %v390 = vadd.f32 %v221, %v389
    %v391 = vpop.f32.mrf.mxu0
    %392 = vdwg.mxu0
    %393 = vmatprep.subr.mxu0 0.0
    %v394 = vand.u32 %v102, 4294901760
    %v395 = vsub.f32 %v102, %v394
    %396 = vmatpush1.msra.mxu0 %v395
    %397 = vmatprep.subr.mxu0 0.0
    %v398 = vand.u32 %v101, 4294901760
    %v399 = vsub.f32 %v101, %v398
    %400 = vmatpush1.msra.mxu0 %v399
    %401 = vmatprep.subr.mxu0 0.0
    %v402 = vand.u32 %v100, 4294901760
    %v403 = vsub.f32 %v100, %v402
    %404 = vmatpush1.msra.mxu0 %v403
    %405 = vmatprep.subr.mxu0 0.0
    %v406 = vand.u32 %v99, 4294901760
    %v407 = vsub.f32 %v99, %v406
    %408 = vmatpush1.msra.mxu0 %v407
    %409 = vmatprep.subr.mxu0 0.0
    %v410 = vand.u32 %v98, 4294901760
    %v411 = vsub.f32 %v98, %v410
    %412 = vmatpush1.msra.mxu0 %v411
    %413 = vmatprep.subr.mxu0 0.0
    %v414 = vand.u32 %v97, 4294901760
    %v415 = vsub.f32 %v97, %v414
    %416 = vmatpush1.msra.mxu0 %v415
    %417 = vmatprep.subr.mxu0 0.0
    %v418 = vand.u32 %v96, 4294901760
    %v419 = vsub.f32 %v96, %v418
    %420 = vmatpush1.msra.mxu0 %v419
    %421 = vmatprep.subr.mxu0 0.0
    %v422 = vand.u32 %v95, 4294901760
    %v423 = vsub.f32 %v95, %v422
    %424 = vmatpush1.msra.mxu0 %v423
    %425 = vmatprep.subr.mxu0 0.0
    %v426 = vand.u32 %v94, 4294901760
    %v427 = vsub.f32 %v94, %v426
    %428 = vmatpush1.msra.mxu0 %v427
    %429 = vmatprep.subr.mxu0 0.0
    %v430 = vand.u32 %v93, 4294901760
    %v431 = vsub.f32 %v93, %v430
    %432 = vmatpush1.msra.mxu0 %v431
    %433 = vmatprep.subr.mxu0 0.0
    %v434 = vand.u32 %v92, 4294901760
    %v435 = vsub.f32 %v92, %v434
    %436 = vmatpush1.msra.mxu0 %v435
    %437 = vmatprep.subr.mxu0 0.0
    %v438 = vand.u32 %v91, 4294901760
    %v439 = vsub.f32 %v91, %v438
    %440 = vmatpush1.msra.mxu0 %v439
    %441 = vmatprep.subr.mxu0 0.0
    %v442 = vand.u32 %v90, 4294901760
    %v443 = vsub.f32 %v90, %v442
    %444 = vmatpush1.msra.mxu0 %v443
    %445 = vmatprep.subr.mxu0 0.0
    %v446 = vand.u32 %v89, 4294901760
    %v447 = vsub.f32 %v89, %v446
    %448 = vmatpush1.msra.mxu0 %v447
    %449 = vmatprep.subr.mxu0 0.0
    %v450 = vand.u32 %v88, 4294901760
    %v451 = vsub.f32 %v88, %v450
    %452 = vmatpush1.msra.mxu0 %v451
    %453 = vmatprep.subr.mxu0 0.0
    %v454 = vand.u32 %v87, 4294901760
    %v455 = vsub.f32 %v87, %v454
    %456 = vmatpush1.msra.mxu0 %v455
    %457 = vmatprep.subr.mxu0 0.0
    %458 = vmatpush2.msra.mxu0 0.0
    %459 = vmatprep.subr.mxu0 0.0
    %460 = vmatpush2.msra.mxu0 0.0
    %461 = vmatprep.subr.mxu0 0.0
    %462 = vmatpush2.msra.mxu0 0.0
    %463 = vmatprep.subr.mxu0 0.0
    %464 = vmatpush2.msra.mxu0 0.0
    %465 = vmatprep.subr.mxu0 0.0
    %466 = vmatpush2.msra.mxu0 0.0
    %467 = vmatprep.subr.mxu0 0.0
    %468 = vmatpush2.msra.mxu0 0.0
    %469 = vmatprep.subr.mxu0 0.0
    %470 = vmatpush2.msra.mxu0 0.0
    %471 = vmatprep.subr.mxu0 0.0
    %472 = vmatpush2.msra.mxu0 0.0
    %473 = vmatprep.subr.mxu0 0.0
    %474 = vmatpush2.msra.mxu0 0.0
    %475 = vmatprep.subr.mxu0 0.0
    %476 = vmatpush2.msra.mxu0 0.0
    %477 = vmatprep.subr.mxu0 0.0
    %478 = vmatpush2.msra.mxu0 0.0
    %479 = vmatprep.subr.mxu0 0.0
    %480 = vmatpush2.msra.mxu0 0.0
    %481 = vmatprep.subr.mxu0 0.0
    %482 = vmatpush2.msra.mxu0 0.0
    %483 = vmatprep.subr.mxu0 0.0
    %484 = vmatpush2.msra.mxu0 0.0
    %485 = vmatprep.subr.mxu0 0.0
    %486 = vmatpush2.msra.mxu0 0.0
    %487 = vmatprep.subr.mxu0 0.0
    %488 = vmatpush2.msra.mxu0 0.0
    %489 = vmatprep.mubr.f32.mxu0 0.0
    %v490 = vand.u32 %v79, 4294901760
    %v491 = vsub.f32 %v79, %v490
    %492 = vmatmul.mubr.f32.gmra.mxu0 %v491
    %v493 = vpop.f32.mrf.mxu0
    %v494 = vadd.f32 %v372, %v493
    %v495 = vpop.f32.mrf.mxu0
    %496 = vmatprep.mubr.f32.mxu0 0.0
    %v497 = vand.u32 %v80, 4294901760
    %v498 = vsub.f32 %v80, %v497
    %499 = vmatmul.mubr.f32.gmra.mxu0 %v498
    %v500 = vpop.f32.mrf.mxu0
    %v501 = vadd.f32 %v378, %v500
    %v502 = vpop.f32.mrf.mxu0
    %503 = vmatprep.mubr.f32.mxu0 0.0
    %v504 = vand.u32 %v81, 4294901760
    %v505 = vsub.f32 %v81, %v504
    %506 = vmatmul.mubr.f32.gmra.mxu0 %v505
    %v507 = vpop.f32.mrf.mxu0
    %v508 = vadd.f32 %v384, %v507
    %v509 = vpop.f32.mrf.mxu0
    %510 = vmatprep.mubr.f32.mxu0 0.0
    %v511 = vand.u32 %v82, 4294901760
    %v512 = vsub.f32 %v82, %v511
    %513 = vmatmul.mubr.f32.gmra.mxu0 %v512
    %v514 = vpop.f32.mrf.mxu0
    %v515 = vadd.f32 %v390, %v514
    %v516 = vpop.f32.mrf.mxu0
    %517 = vdwg.mxu0
    %518 = vmatprep.subr.mxu0 0.0
    %v519 = vand.u32 %v102, 4294901760
    %520 = vmatpush1.msra.mxu0 %v519
    %521 = vmatprep.subr.mxu0 0.0
    %v522 = vand.u32 %v101, 4294901760
    %523 = vmatpush1.msra.mxu0 %v522
    %524 = vmatprep.subr.mxu0 0.0
    %v525 = vand.u32 %v100, 4294901760
    %526 = vmatpush1.msra.mxu0 %v525
    %527 = vmatprep.subr.mxu0 0.0
    %v528 = vand.u32 %v99, 4294901760
    %529 = vmatpush1.msra.mxu0 %v528
    %530 = vmatprep.subr.mxu0 0.0
    %v531 = vand.u32 %v98, 4294901760
    %532 = vmatpush1.msra.mxu0 %v531
    %533 = vmatprep.subr.mxu0 0.0
    %v534 = vand.u32 %v97, 4294901760
    %535 = vmatpush1.msra.mxu0 %v534
    %536 = vmatprep.subr.mxu0 0.0
    %v537 = vand.u32 %v96, 4294901760
    %538 = vmatpush1.msra.mxu0 %v537
    %539 = vmatprep.subr.mxu0 0.0
    %v540 = vand.u32 %v95, 4294901760
    %541 = vmatpush1.msra.mxu0 %v540
    %542 = vmatprep.subr.mxu0 0.0
    %v543 = vand.u32 %v94, 4294901760
    %544 = vmatpush1.msra.mxu0 %v543
    %545 = vmatprep.subr.mxu0 0.0
    %v546 = vand.u32 %v93, 4294901760
    %547 = vmatpush1.msra.mxu0 %v546
    %548 = vmatprep.subr.mxu0 0.0
    %v549 = vand.u32 %v92, 4294901760
    %550 = vmatpush1.msra.mxu0 %v549
    %551 = vmatprep.subr.mxu0 0.0
    %v552 = vand.u32 %v91, 4294901760
    %553 = vmatpush1.msra.mxu0 %v552
    %554 = vmatprep.subr.mxu0 0.0
    %v555 = vand.u32 %v90, 4294901760
    %556 = vmatpush1.msra.mxu0 %v555
    %557 = vmatprep.subr.mxu0 0.0
    %v558 = vand.u32 %v89, 4294901760
    %559 = vmatpush1.msra.mxu0 %v558
    %560 = vmatprep.subr.mxu0 0.0
    %v561 = vand.u32 %v88, 4294901760
    %562 = vmatpush1.msra.mxu0 %v561
    %563 = vmatprep.subr.mxu0 0.0
    %v564 = vand.u32 %v87, 4294901760
    %565 = vmatpush1.msra.mxu0 %v564
    %566 = vmatprep.subr.mxu0 0.0
    %567 = vmatpush2.msra.mxu0 0.0
    %568 = vmatprep.subr.mxu0 0.0
    %569 = vmatpush2.msra.mxu0 0.0
    %570 = vmatprep.subr.mxu0 0.0
    %571 = vmatpush2.msra.mxu0 0.0
    %572 = vmatprep.subr.mxu0 0.0
    %573 = vmatpush2.msra.mxu0 0.0
    %574 = vmatprep.subr.mxu0 0.0
    %575 = vmatpush2.msra.mxu0 0.0
    %576 = vmatprep.subr.mxu0 0.0
    %577 = vmatpush2.msra.mxu0 0.0
    %578 = vmatprep.subr.mxu0 0.0
    %579 = vmatpush2.msra.mxu0 0.0
    %580 = vmatprep.subr.mxu0 0.0
    %581 = vmatpush2.msra.mxu0 0.0
    %582 = vmatprep.subr.mxu0 0.0
    %583 = vmatpush2.msra.mxu0 0.0
    %584 = vmatprep.subr.mxu0 0.0
    %585 = vmatpush2.msra.mxu0 0.0
    %586 = vmatprep.subr.mxu0 0.0
    %587 = vmatpush2.msra.mxu0 0.0
    %588 = vmatprep.subr.mxu0 0.0
    %589 = vmatpush2.msra.mxu0 0.0
    %590 = vmatprep.subr.mxu0 0.0
    %591 = vmatpush2.msra.mxu0 0.0
    %592 = vmatprep.subr.mxu0 0.0
    %593 = vmatpush2.msra.mxu0 0.0
    %594 = vmatprep.subr.mxu0 0.0
    %595 = vmatpush2.msra.mxu0 0.0
    %596 = vmatprep.subr.mxu0 0.0
    %597 = vmatpush2.msra.mxu0 0.0
    %598 = vmatprep.mubr.f32.mxu0 0.0
    %v599 = vand.u32 %v79, 4294901760
    %v600 = vsub.f32 %v79, %v599
    %v601 = vand.u32 %v600, 4294901760
    %602 = vmatmul.mubr.f32.gmra.mxu0 %v601
    %v603 = vpop.f32.mrf.mxu0
    %v604 = vadd.f32 %v494, %v603
    %v605 = vpop.f32.mrf.mxu0
    %606 = vmatprep.mubr.f32.mxu0 0.0
    %v607 = vand.u32 %v80, 4294901760
    %v608 = vsub.f32 %v80, %v607
    %v609 = vand.u32 %v608, 4294901760
    %610 = vmatmul.mubr.f32.gmra.mxu0 %v609
    %v611 = vpop.f32.mrf.mxu0
    %v612 = vadd.f32 %v501, %v611
    %v613 = vpop.f32.mrf.mxu0
    %614 = vmatprep.mubr.f32.mxu0 0.0
    %v615 = vand.u32 %v81, 4294901760
    %v616 = vsub.f32 %v81, %v615
    %v617 = vand.u32 %v616, 4294901760
    %618 = vmatmul.mubr.f32.gmra.mxu0 %v617
    %v619 = vpop.f32.mrf.mxu0
    %v620 = vadd.f32 %v508, %v619
    %v621 = vpop.f32.mrf.mxu0
    %622 = vmatprep.mubr.f32.mxu0 0.0
    %v623 = vand.u32 %v82, 4294901760
    %v624 = vsub.f32 %v82, %v623
    %v625 = vand.u32 %v624, 4294901760
    %626 = vmatmul.mubr.f32.gmra.mxu0 %v625
    %v627 = vpop.f32.mrf.mxu0
    %v628 = vadd.f32 %v515, %v627
    %v629 = vpop.f32.mrf.mxu0
    %630 = vdwg.mxu0
    %631 = vmatprep.subr.mxu0 0.0
    %v632 = vand.u32 %v102, 4294901760
    %v633 = vsub.f32 %v102, %v632
    %v634 = vand.u32 %v633, 4294901760
    %635 = vmatpush1.msra.mxu0 %v634
    %636 = vmatprep.subr.mxu0 0.0
    %v637 = vand.u32 %v101, 4294901760
    %v638 = vsub.f32 %v101, %v637
    %v639 = vand.u32 %v638, 4294901760
    %640 = vmatpush1.msra.mxu0 %v639
    %641 = vmatprep.subr.mxu0 0.0
    %v642 = vand.u32 %v100, 4294901760
    %v643 = vsub.f32 %v100, %v642
    %v644 = vand.u32 %v643, 4294901760
    %645 = vmatpush1.msra.mxu0 %v644
    %646 = vmatprep.subr.mxu0 0.0
    %v647 = vand.u32 %v99, 4294901760
    %v648 = vsub.f32 %v99, %v647
    %v649 = vand.u32 %v648, 4294901760
    %650 = vmatpush1.msra.mxu0 %v649
    %651 = vmatprep.subr.mxu0 0.0
    %v652 = vand.u32 %v98, 4294901760
    %v653 = vsub.f32 %v98, %v652
    %v654 = vand.u32 %v653, 4294901760
    %655 = vmatpush1.msra.mxu0 %v654
    %656 = vmatprep.subr.mxu0 0.0
    %v657 = vand.u32 %v97, 4294901760
    %v658 = vsub.f32 %v97, %v657
    %v659 = vand.u32 %v658, 4294901760
    %660 = vmatpush1.msra.mxu0 %v659
    %661 = vmatprep.subr.mxu0 0.0
    %v662 = vand.u32 %v96, 4294901760
    %v663 = vsub.f32 %v96, %v662
    %v664 = vand.u32 %v663, 4294901760
    %665 = vmatpush1.msra.mxu0 %v664
    %666 = vmatprep.subr.mxu0 0.0
    %v667 = vand.u32 %v95, 4294901760
    %v668 = vsub.f32 %v95, %v667
    %v669 = vand.u32 %v668, 4294901760
    %670 = vmatpush1.msra.mxu0 %v669
    %671 = vmatprep.subr.mxu0 0.0
    %v672 = vand.u32 %v94, 4294901760
    %v673 = vsub.f32 %v94, %v672
    %v674 = vand.u32 %v673, 4294901760
    %675 = vmatpush1.msra.mxu0 %v674
    %676 = vmatprep.subr.mxu0 0.0
    %v677 = vand.u32 %v93, 4294901760
    %v678 = vsub.f32 %v93, %v677
    %v679 = vand.u32 %v678, 4294901760
    %680 = vmatpush1.msra.mxu0 %v679
    %681 = vmatprep.subr.mxu0 0.0
    %v682 = vand.u32 %v92, 4294901760
    %v683 = vsub.f32 %v92, %v682
    %v684 = vand.u32 %v683, 4294901760
    %685 = vmatpush1.msra.mxu0 %v684
    %686 = vmatprep.subr.mxu0 0.0
    %v687 = vand.u32 %v91, 4294901760
    %v688 = vsub.f32 %v91, %v687
    %v689 = vand.u32 %v688, 4294901760
    %690 = vmatpush1.msra.mxu0 %v689
    %691 = vmatprep.subr.mxu0 0.0
    %v692 = vand.u32 %v90, 4294901760
    %v693 = vsub.f32 %v90, %v692
    %v694 = vand.u32 %v693, 4294901760
    %695 = vmatpush1.msra.mxu0 %v694
    %696 = vmatprep.subr.mxu0 0.0
    %v697 = vand.u32 %v89, 4294901760
    %v698 = vsub.f32 %v89, %v697
    %v699 = vand.u32 %v698, 4294901760
    %700 = vmatpush1.msra.mxu0 %v699
    %701 = vmatprep.subr.mxu0 0.0
    %v702 = vand.u32 %v88, 4294901760
    %v703 = vsub.f32 %v88, %v702
    %v704 = vand.u32 %v703, 4294901760
    %705 = vmatpush1.msra.mxu0 %v704
    %706 = vmatprep.subr.mxu0 0.0
    %v707 = vand.u32 %v87, 4294901760
    %v708 = vsub.f32 %v87, %v707
    %v709 = vand.u32 %v708, 4294901760
    %710 = vmatpush1.msra.mxu0 %v709
    %711 = vmatprep.subr.mxu0 0.0
    %712 = vmatpush2.msra.mxu0 0.0
    %713 = vmatprep.subr.mxu0 0.0
    %714 = vmatpush2.msra.mxu0 0.0
    %715 = vmatprep.subr.mxu0 0.0
    %716 = vmatpush2.msra.mxu0 0.0
    %717 = vmatprep.subr.mxu0 0.0
    %718 = vmatpush2.msra.mxu0 0.0
    %719 = vmatprep.subr.mxu0 0.0
    %720 = vmatpush2.msra.mxu0 0.0
    %721 = vmatprep.subr.mxu0 0.0
    %722 = vmatpush2.msra.mxu0 0.0
    %723 = vmatprep.subr.mxu0 0.0
    %724 = vmatpush2.msra.mxu0 0.0
    %725 = vmatprep.subr.mxu0 0.0
    %726 = vmatpush2.msra.mxu0 0.0
    %727 = vmatprep.subr.mxu0 0.0
    %728 = vmatpush2.msra.mxu0 0.0
    %729 = vmatprep.subr.mxu0 0.0
    %730 = vmatpush2.msra.mxu0 0.0
    %731 = vmatprep.subr.mxu0 0.0
    %732 = vmatpush2.msra.mxu0 0.0
    %733 = vmatprep.subr.mxu0 0.0
    %734 = vmatpush2.msra.mxu0 0.0
    %735 = vmatprep.subr.mxu0 0.0
    %736 = vmatpush2.msra.mxu0 0.0
    %737 = vmatprep.subr.mxu0 0.0
    %738 = vmatpush2.msra.mxu0 0.0
    %739 = vmatprep.subr.mxu0 0.0
    %740 = vmatpush2.msra.mxu0 0.0
    %741 = vmatprep.subr.mxu0 0.0
    %742 = vmatpush2.msra.mxu0 0.0
    %743 = vmatprep.mubr.f32.mxu0 0.0
    %v744 = vand.u32 %v79, 4294901760
    %745 = vmatmul.mubr.f32.gmra.mxu0 %v744
    %v746 = vpop.f32.mrf.mxu0
    %v747 = vadd.f32 %v604, %v746
    %v748 = vpop.f32.mrf.mxu0
    %749 = vmatprep.mubr.f32.mxu0 0.0
    %v750 = vand.u32 %v80, 4294901760
    %751 = vmatmul.mubr.f32.gmra.mxu0 %v750
    %v752 = vpop.f32.mrf.mxu0
    %v753 = vadd.f32 %v612, %v752
    %v754 = vpop.f32.mrf.mxu0
    %755 = vmatprep.mubr.f32.mxu0 0.0
    %v756 = vand.u32 %v81, 4294901760
    %757 = vmatmul.mubr.f32.gmra.mxu0 %v756
    %v758 = vpop.f32.mrf.mxu0
    %v759 = vadd.f32 %v620, %v758
    %v760 = vpop.f32.mrf.mxu0
    %761 = vmatprep.mubr.f32.mxu0 0.0
    %v762 = vand.u32 %v82, 4294901760
    %763 = vmatmul.mubr.f32.gmra.mxu0 %v762
    %v764 = vpop.f32.mrf.mxu0
    %v765 = vadd.f32 %v628, %v764
    %v766 = vpop.f32.mrf.mxu0
    %767 = vdwg.mxu0
    %768 = vmatprep.subr.mxu0 0.0
    %v769 = vand.u32 %v102, 4294901760
    %770 = vmatpush1.msra.mxu0 %v769
    %771 = vmatprep.subr.mxu0 0.0
    %v772 = vand.u32 %v101, 4294901760
    %773 = vmatpush1.msra.mxu0 %v772
    %774 = vmatprep.subr.mxu0 0.0
    %v775 = vand.u32 %v100, 4294901760
    %776 = vmatpush1.msra.mxu0 %v775
    %777 = vmatprep.subr.mxu0 0.0
    %v778 = vand.u32 %v99, 4294901760
    %779 = vmatpush1.msra.mxu0 %v778
    %780 = vmatprep.subr.mxu0 0.0
    %v781 = vand.u32 %v98, 4294901760
    %782 = vmatpush1.msra.mxu0 %v781
    %783 = vmatprep.subr.mxu0 0.0
    %v784 = vand.u32 %v97, 4294901760
    %785 = vmatpush1.msra.mxu0 %v784
    %786 = vmatprep.subr.mxu0 0.0
    %v787 = vand.u32 %v96, 4294901760
    %788 = vmatpush1.msra.mxu0 %v787
    %789 = vmatprep.subr.mxu0 0.0
    %v790 = vand.u32 %v95, 4294901760
    %791 = vmatpush1.msra.mxu0 %v790
    %792 = vmatprep.subr.mxu0 0.0
    %v793 = vand.u32 %v94, 4294901760
    %794 = vmatpush1.msra.mxu0 %v793
    %795 = vmatprep.subr.mxu0 0.0
    %v796 = vand.u32 %v93, 4294901760
    %797 = vmatpush1.msra.mxu0 %v796
    %798 = vmatprep.subr.mxu0 0.0
    %v799 = vand.u32 %v92, 4294901760
    %800 = vmatpush1.msra.mxu0 %v799
    %801 = vmatprep.subr.mxu0 0.0
    %v802 = vand.u32 %v91, 4294901760
    %803 = vmatpush1.msra.mxu0 %v802
    %804 = vmatprep.subr.mxu0 0.0
    %v805 = vand.u32 %v90, 4294901760
    %806 = vmatpush1.msra.mxu0 %v805
    %807 = vmatprep.subr.mxu0 0.0
    %v808 = vand.u32 %v89, 4294901760
    %809 = vmatpush1.msra.mxu0 %v808
    %810 = vmatprep.subr.mxu0 0.0
    %v811 = vand.u32 %v88, 4294901760
    %812 = vmatpush1.msra.mxu0 %v811
    %813 = vmatprep.subr.mxu0 0.0
    %v814 = vand.u32 %v87, 4294901760
    %815 = vmatpush1.msra.mxu0 %v814
    %816 = vmatprep.subr.mxu0 0.0
    %817 = vmatpush2.msra.mxu0 0.0
    %818 = vmatprep.subr.mxu0 0.0
    %819 = vmatpush2.msra.mxu0 0.0
    %820 = vmatprep.subr.mxu0 0.0
    %821 = vmatpush2.msra.mxu0 0.0
    %822 = vmatprep.subr.mxu0 0.0
    %823 = vmatpush2.msra.mxu0 0.0
    %824 = vmatprep.subr.mxu0 0.0
    %825 = vmatpush2.msra.mxu0 0.0
    %826 = vmatprep.subr.mxu0 0.0
    %827 = vmatpush2.msra.mxu0 0.0
    %828 = vmatprep.subr.mxu0 0.0
    %829 = vmatpush2.msra.mxu0 0.0
    %830 = vmatprep.subr.mxu0 0.0
    %831 = vmatpush2.msra.mxu0 0.0
    %832 = vmatprep.subr.mxu0 0.0
    %833 = vmatpush2.msra.mxu0 0.0
    %834 = vmatprep.subr.mxu0 0.0
    %835 = vmatpush2.msra.mxu0 0.0
    %836 = vmatprep.subr.mxu0 0.0
    %837 = vmatpush2.msra.mxu0 0.0
    %838 = vmatprep.subr.mxu0 0.0
    %839 = vmatpush2.msra.mxu0 0.0
    %840 = vmatprep.subr.mxu0 0.0
    %841 = vmatpush2.msra.mxu0 0.0
    %842 = vmatprep.subr.mxu0 0.0
    %843 = vmatpush2.msra.mxu0 0.0
    %844 = vmatprep.subr.mxu0 0.0
    %845 = vmatpush2.msra.mxu0 0.0
    %846 = vmatprep.subr.mxu0 0.0
    %847 = vmatpush2.msra.mxu0 0.0
    %848 = vmatprep.mubr.f32.mxu0 0.0
    %v849 = vand.u32 %v79, 4294901760
    %850 = vmatmul.mubr.f32.gmra.mxu0 %v849
    %v851 = vpop.f32.mrf.mxu0
    %v852 = vadd.f32 %v747, %v851
    %v853 = vpop.f32.mrf.mxu0
    %854 = vmatprep.mubr.f32.mxu0 0.0
    %v855 = vand.u32 %v80, 4294901760
    %856 = vmatmul.mubr.f32.gmra.mxu0 %v855
    %v857 = vpop.f32.mrf.mxu0
    %v858 = vadd.f32 %v753, %v857
    %v859 = vpop.f32.mrf.mxu0
    %860 = vmatprep.mubr.f32.mxu0 0.0
    %v861 = vand.u32 %v81, 4294901760
    %862 = vmatmul.mubr.f32.gmra.mxu0 %v861
    %v863 = vpop.f32.mrf.mxu0
    %v864 = vadd.f32 %v759, %v863
    %v865 = vpop.f32.mrf.mxu0
    %866 = vmatprep.mubr.f32.mxu0 0.0
    %v867 = vand.u32 %v82, 4294901760
    %868 = vmatmul.mubr.f32.gmra.mxu0 %v867
    %v869 = vpop.f32.mrf.mxu0
    %v870 = vadd.f32 %v765, %v869
    %v871 = vpop.f32.mrf.mxu0
    %872 = vdwg.mxu0
    %v873 = vadd.f32 %v83, %v852
    %v874 = vadd.f32 %v84, %v858
    %v875 = vadd.f32 %v85, %v864
    %v876 = vadd.f32 %v86, %v870
    %877 = vst [vmem:[#allocation2] sm:$0xff] %v873
    %878 = vst [vmem:[#allocation2 + $0x8] sm:$0xff] %v874
    %879 = vst [vmem:[#allocation2 + $0x10] sm:$0xff] %v875
    %880 = vst [vmem:[#allocation2 + $0x18] sm:$0xff] %v876
    // Predicated region
    $region34: #{tpu_custom_call.1} parent=1 // pred_check
      %p881 = pneg %p65
    $region35: #{tpu_custom_call.1} parent=1 // pred_check_branch
      %883 = sbr.rel (%p881) target = $region37
    $region36: #{tpu_custom_call.1} parent=1 // pred_region
      %v884 = vld [vmem:[#allocation3] sm:$0xff]
      %v885 = vld [vmem:[#allocation3 + $0x8] sm:$0xff]
      %v886 = vld [vmem:[#allocation3 + $0x10] sm:$0xff]
      %v887 = vld [vmem:[#allocation3 + $0x18] sm:$0xff]
      %v888 = vld [vmem:[#allocation3 + $0x20] sm:$0xff]
      %v889 = vld [vmem:[#allocation3 + $0x28] sm:$0xff]
      %v890 = vld [vmem:[#allocation3 + $0x30] sm:$0xff]
      %v891 = vld [vmem:[#allocation3 + $0x38] sm:$0xff]
      %v892 = vld [vmem:[%s53] sm:$0xff]
      %v893 = vld [vmem:[%s53 + $0x8] sm:$0xff]
      %v894 = vld [vmem:[%s53 + $0x10] sm:$0xff]
      %v895 = vld [vmem:[%s53 + $0x18] sm:$0xff]
      %v896 = vld [vmem:[%s53 + $0x20] sm:$0xff]
      %v897 = vld [vmem:[%s53 + $0x28] sm:$0xff]
      %v898 = vld [vmem:[%s53 + $0x30] sm:$0xff]
      %v899 = vld [vmem:[%s53 + $0x38] sm:$0xff]
      %v900 = vld [vmem:[%s53 + $0x40] sm:$0xff]
      %v901 = vld [vmem:[%s53 + $0x48] sm:$0xff]
      %v902 = vld [vmem:[%s53 + $0x50] sm:$0xff]
      %v903 = vld [vmem:[%s53 + $0x58] sm:$0xff]
      %v904 = vld [vmem:[%s53 + $0x60] sm:$0xff]
      %v905 = vld [vmem:[%s53 + $0x68] sm:$0xff]
      %v906 = vld [vmem:[%s53 + $0x70] sm:$0xff]
      %v907 = vld [vmem:[%s53 + $0x78] sm:$0xff]
      %v908 = vld [vmem:[%s53 + $0x80] sm:$0xff]
      %v909 = vld [vmem:[%s53 + $0x88] sm:$0xff]
      %v910 = vld [vmem:[%s53 + $0x90] sm:$0xff]
      %v911 = vld [vmem:[%s53 + $0x98] sm:$0xff]
      %v912 = vld [vmem:[%s53 + $0xa0] sm:$0xff]
      %v913 = vld [vmem:[%s53 + $0xa8] sm:$0xff]
      %v914 = vld [vmem:[%s53 + $0xb0] sm:$0xff]
      %v915 = vld [vmem:[%s53 + $0xb8] sm:$0xff]
      %v916 = vld [vmem:[%s53 + $0xc0] sm:$0xff]
      %v917 = vld [vmem:[%s53 + $0xc8] sm:$0xff]
      %v918 = vld [vmem:[%s53 + $0xd0] sm:$0xff]
      %v919 = vld [vmem:[%s53 + $0xd8] sm:$0xff]
      %v920 = vld [vmem:[%s53 + $0xe0] sm:$0xff]
      %v921 = vld [vmem:[%s53 + $0xe8] sm:$0xff]
      %v922 = vld [vmem:[%s53 + $0xf0] sm:$0xff]
      %v923 = vld [vmem:[%s53 + $0xf8] sm:$0xff]
      %v924 = vand.u32 %v923, 4294901760
      %925 = vmatprep.subr.mxu0 %v924
      %v926 = vand.u32 %v922, 4294901760
      %927 = vmatpush1.msra.mxu0 %v926
      %v928 = vand.u32 %v921, 4294901760
      %929 = vmatprep.subr.mxu0 %v928
      %v930 = vand.u32 %v920, 4294901760
      %931 = vmatpush1.msra.mxu0 %v930
      %v932 = vand.u32 %v919, 4294901760
      %933 = vmatprep.subr.mxu0 %v932
      %v934 = vand.u32 %v918, 4294901760
      %935 = vmatpush1.msra.mxu0 %v934
      %v936 = vand.u32 %v917, 4294901760
      %937 = vmatprep.subr.mxu0 %v936
      %v938 = vand.u32 %v916, 4294901760
      %939 = vmatpush1.msra.mxu0 %v938
      %v940 = vand.u32 %v915, 4294901760
      %941 = vmatprep.subr.mxu0 %v940
      %v942 = vand.u32 %v914, 4294901760
      %943 = vmatpush1.msra.mxu0 %v942
      %v944 = vand.u32 %v913, 4294901760
      %945 = vmatprep.subr.mxu0 %v944
      %v946 = vand.u32 %v912, 4294901760
      %947 = vmatpush1.msra.mxu0 %v946
      %v948 = vand.u32 %v911, 4294901760
      %949 = vmatprep.subr.mxu0 %v948
      %v950 = vand.u32 %v910, 4294901760
      %951 = vmatpush1.msra.mxu0 %v950
      %v952 = vand.u32 %v909, 4294901760
      %953 = vmatprep.subr.mxu0 %v952
      %v954 = vand.u32 %v908, 4294901760
      %955 = vmatpush1.msra.mxu0 %v954
      %v956 = vand.u32 %v907, 4294901760
      %957 = vmatprep.subr.mxu0 %v956
      %v958 = vand.u32 %v906, 4294901760
      %959 = vmatpush1.msra.mxu0 %v958
      %v960 = vand.u32 %v905, 4294901760
      %961 = vmatprep.subr.mxu0 %v960
      %v962 = vand.u32 %v904, 4294901760
      %963 = vmatpush1.msra.mxu0 %v962
      %v964 = vand.u32 %v903, 4294901760
      %965 = vmatprep.subr.mxu0 %v964
      %v966 = vand.u32 %v902, 4294901760
      %967 = vmatpush1.msra.mxu0 %v966
      %v968 = vand.u32 %v901, 4294901760
      %969 = vmatprep.subr.mxu0 %v968
      %v970 = vand.u32 %v900, 4294901760
      %971 = vmatpush1.msra.mxu0 %v970
      %v972 = vand.u32 %v899, 4294901760
      %973 = vmatprep.subr.mxu0 %v972
      %v974 = vand.u32 %v898, 4294901760
      %975 = vmatpush1.msra.mxu0 %v974
      %v976 = vand.u32 %v897, 4294901760
      %977 = vmatprep.subr.mxu0 %v976
      %v978 = vand.u32 %v896, 4294901760
      %979 = vmatpush1.msra.mxu0 %v978
      %v980 = vand.u32 %v895, 4294901760
      %981 = vmatprep.subr.mxu0 %v980
      %v982 = vand.u32 %v894, 4294901760
      %983 = vmatpush1.msra.mxu0 %v982
      %v984 = vand.u32 %v893, 4294901760
      %985 = vmatprep.subr.mxu0 %v984
      %v986 = vand.u32 %v892, 4294901760
      %987 = vmatpush1.msra.mxu0 %v986
      %988 = vmatprep.subr.mxu0 0.0
      %989 = vmatpush2.msra.mxu0 0.0
      %990 = vmatprep.subr.mxu0 0.0
      %991 = vmatpush2.msra.mxu0 0.0
      %992 = vmatprep.subr.mxu0 0.0
      %993 = vmatpush2.msra.mxu0 0.0
      %994 = vmatprep.subr.mxu0 0.0
      %995 = vmatpush2.msra.mxu0 0.0
      %996 = vmatprep.subr.mxu0 0.0
      %997 = vmatpush2.msra.mxu0 0.0
      %998 = vmatprep.subr.mxu0 0.0
      %999 = vmatpush2.msra.mxu0 0.0
      %1000 = vmatprep.subr.mxu0 0.0
      %1001 = vmatpush2.msra.mxu0 0.0
      %1002 = vmatprep.subr.mxu0 0.0
      %1003 = vmatpush2.msra.mxu0 0.0
      %1004 = vmatprep.subr.mxu0 0.0
      %1005 = vmatpush2.msra.mxu0 0.0
      %1006 = vmatprep.subr.mxu0 0.0
      %1007 = vmatpush2.msra.mxu0 0.0
      %1008 = vmatprep.subr.mxu0 0.0
      %1009 = vmatpush2.msra.mxu0 0.0
      %1010 = vmatprep.subr.mxu0 0.0
      %1011 = vmatpush2.msra.mxu0 0.0
      %1012 = vmatprep.subr.mxu0 0.0
      %1013 = vmatpush2.msra.mxu0 0.0
      %1014 = vmatprep.subr.mxu0 0.0
      %1015 = vmatpush2.msra.mxu0 0.0
      %1016 = vmatprep.subr.mxu0 0.0
      %1017 = vmatpush2.msra.mxu0 0.0
      %1018 = vmatprep.subr.mxu0 0.0
      %1019 = vmatpush2.msra.mxu0 0.0
      %1020 = vmatprep.mubr.f32.mxu0 0.0
      %v1021 = vand.u32 %v79, 4294901760
      %v1022 = vsub.f32 %v79, %v1021
      %v1023 = vand.u32 %v1022, 4294901760
      %v1024 = vsub.f32 %v1022, %v1023
      %v1025 = vand.u32 %v1024, 4294901760
      %1026 = vmatmul.mubr.f32.gmra.mxu0 %v1025
      %v1027 = vpop.f32.mrf.mxu0
      %v1028 = vadd.f32 0.0, %v1027
      %v1029 = vpop.f32.mrf.mxu0
      %v1030 = vadd.f32 0.0, %v1029
      %1031 = vmatprep.mubr.f32.mxu0 0.0
      %v1032 = vand.u32 %v80, 4294901760
      %v1033 = vsub.f32 %v80, %v1032
      %v1034 = vand.u32 %v1033, 4294901760
      %v1035 = vsub.f32 %v1033, %v1034
      %v1036 = vand.u32 %v1035, 4294901760
      %1037 = vmatmul.mubr.f32.gmra.mxu0 %v1036
      %v1038 = vpop.f32.mrf.mxu0
      %v1039 = vadd.f32 0.0, %v1038
      %v1040 = vpop.f32.mrf.mxu0
      %v1041 = vadd.f32 0.0, %v1040
      %1042 = vmatprep.mubr.f32.mxu0 0.0
      %v1043 = vand.u32 %v81, 4294901760
      %v1044 = vsub.f32 %v81, %v1043
      %v1045 = vand.u32 %v1044, 4294901760
      %v1046 = vsub.f32 %v1044, %v1045
      %v1047 = vand.u32 %v1046, 4294901760
      %1048 = vmatmul.mubr.f32.gmra.mxu0 %v1047
      %v1049 = vpop.f32.mrf.mxu0
      %v1050 = vadd.f32 0.0, %v1049
      %v1051 = vpop.f32.mrf.mxu0
      %v1052 = vadd.f32 0.0, %v1051
      %1053 = vmatprep.mubr.f32.mxu0 0.0
      %v1054 = vand.u32 %v82, 4294901760
      %v1055 = vsub.f32 %v82, %v1054
      %v1056 = vand.u32 %v1055, 4294901760
      %v1057 = vsub.f32 %v1055, %v1056
      %v1058 = vand.u32 %v1057, 4294901760
      %1059 = vmatmul.mubr.f32.gmra.mxu0 %v1058
      %v1060 = vpop.f32.mrf.mxu0
      %v1061 = vadd.f32 0.0, %v1060
      %v1062 = vpop.f32.mrf.mxu0
      %v1063 = vadd.f32 0.0, %v1062
      %1064 = vdwg.mxu0
      %v1065 = vand.u32 %v923, 4294901760
      %v1066 = vsub.f32 %v923, %v1065
      %v1067 = vand.u32 %v1066, 4294901760
      %v1068 = vsub.f32 %v1066, %v1067
      %v1069 = vand.u32 %v1068, 4294901760
      %1070 = vmatprep.subr.mxu0 %v1069
      %v1071 = vand.u32 %v922, 4294901760
      %v1072 = vsub.f32 %v922, %v1071
      %v1073 = vand.u32 %v1072, 4294901760
      %v1074 = vsub.f32 %v1072, %v1073
      %v1075 = vand.u32 %v1074, 4294901760
      %1076 = vmatpush1.msra.mxu0 %v1075
      %v1077 = vand.u32 %v921, 4294901760
      %v1078 = vsub.f32 %v921, %v1077
      %v1079 = vand.u32 %v1078, 4294901760
      %v1080 = vsub.f32 %v1078, %v1079
      %v1081 = vand.u32 %v1080, 4294901760
      %1082 = vmatprep.subr.mxu0 %v1081
      %v1083 = vand.u32 %v920, 4294901760
      %v1084 = vsub.f32 %v920, %v1083
      %v1085 = vand.u32 %v1084, 4294901760
      %v1086 = vsub.f32 %v1084, %v1085
      %v1087 = vand.u32 %v1086, 4294901760
      %1088 = vmatpush1.msra.mxu0 %v1087
      %v1089 = vand.u32 %v919, 4294901760
      %v1090 = vsub.f32 %v919, %v1089
      %v1091 = vand.u32 %v1090, 4294901760
      %v1092 = vsub.f32 %v1090, %v1091
      %v1093 = vand.u32 %v1092, 4294901760
      %1094 = vmatprep.subr.mxu0 %v1093
      %v1095 = vand.u32 %v918, 4294901760
      %v1096 = vsub.f32 %v918, %v1095
      %v1097 = vand.u32 %v1096, 4294901760
      %v1098 = vsub.f32 %v1096, %v1097
      %v1099 = vand.u32 %v1098, 4294901760
      %1100 = vmatpush1.msra.mxu0 %v1099
      %v1101 = vand.u32 %v917, 4294901760
      %v1102 = vsub.f32 %v917, %v1101
      %v1103 = vand.u32 %v1102, 4294901760
      %v1104 = vsub.f32 %v1102, %v1103
      %v1105 = vand.u32 %v1104, 4294901760
      %1106 = vmatprep.subr.mxu0 %v1105
      %v1107 = vand.u32 %v916, 4294901760
      %v1108 = vsub.f32 %v916, %v1107
      %v1109 = vand.u32 %v1108, 4294901760
      %v1110 = vsub.f32 %v1108, %v1109
      %v1111 = vand.u32 %v1110, 4294901760
      %1112 = vmatpush1.msra.mxu0 %v1111
      %v1113 = vand.u32 %v915, 4294901760
      %v1114 = vsub.f32 %v915, %v1113
      %v1115 = vand.u32 %v1114, 4294901760
      %v1116 = vsub.f32 %v1114, %v1115
      %v1117 = vand.u32 %v1116, 4294901760
      %1118 = vmatprep.subr.mxu0 %v1117
      %v1119 = vand.u32 %v914, 4294901760
      %v1120 = vsub.f32 %v914, %v1119
      %v1121 = vand.u32 %v1120, 4294901760
      %v1122 = vsub.f32 %v1120, %v1121
      %v1123 = vand.u32 %v1122, 4294901760
      %1124 = vmatpush1.msra.mxu0 %v1123
      %v1125 = vand.u32 %v913, 4294901760
      %v1126 = vsub.f32 %v913, %v1125
      %v1127 = vand.u32 %v1126, 4294901760
      %v1128 = vsub.f32 %v1126, %v1127
      %v1129 = vand.u32 %v1128, 4294901760
      %1130 = vmatprep.subr.mxu0 %v1129
      %v1131 = vand.u32 %v912, 4294901760
      %v1132 = vsub.f32 %v912, %v1131
      %v1133 = vand.u32 %v1132, 4294901760
      %v1134 = vsub.f32 %v1132, %v1133
      %v1135 = vand.u32 %v1134, 4294901760
      %1136 = vmatpush1.msra.mxu0 %v1135
      %v1137 = vand.u32 %v911, 4294901760
      %v1138 = vsub.f32 %v911, %v1137
      %v1139 = vand.u32 %v1138, 4294901760
      %v1140 = vsub.f32 %v1138, %v1139
      %v1141 = vand.u32 %v1140, 4294901760
      %1142 = vmatprep.subr.mxu0 %v1141
      %v1143 = vand.u32 %v910, 4294901760
      %v1144 = vsub.f32 %v910, %v1143
      %v1145 = vand.u32 %v1144, 4294901760
      %v1146 = vsub.f32 %v1144, %v1145
      %v1147 = vand.u32 %v1146, 4294901760
      %1148 = vmatpush1.msra.mxu0 %v1147
      %v1149 = vand.u32 %v909, 4294901760
      %v1150 = vsub.f32 %v909, %v1149
      %v1151 = vand.u32 %v1150, 4294901760
      %v1152 = vsub.f32 %v1150, %v1151
      %v1153 = vand.u32 %v1152, 4294901760
      %1154 = vmatprep.subr.mxu0 %v1153
      %v1155 = vand.u32 %v908, 4294901760
      %v1156 = vsub.f32 %v908, %v1155
      %v1157 = vand.u32 %v1156, 4294901760
      %v1158 = vsub.f32 %v1156, %v1157
      %v1159 = vand.u32 %v1158, 4294901760
      %1160 = vmatpush1.msra.mxu0 %v1159
      %v1161 = vand.u32 %v907, 4294901760
      %v1162 = vsub.f32 %v907, %v1161
      %v1163 = vand.u32 %v1162, 4294901760
      %v1164 = vsub.f32 %v1162, %v1163
      %v1165 = vand.u32 %v1164, 4294901760
      %1166 = vmatprep.subr.mxu0 %v1165
      %v1167 = vand.u32 %v906, 4294901760
      %v1168 = vsub.f32 %v906, %v1167
      %v1169 = vand.u32 %v1168, 4294901760
      %v1170 = vsub.f32 %v1168, %v1169
      %v1171 = vand.u32 %v1170, 4294901760
      %1172 = vmatpush1.msra.mxu0 %v1171
      %v1173 = vand.u32 %v905, 4294901760
      %v1174 = vsub.f32 %v905, %v1173
      %v1175 = vand.u32 %v1174, 4294901760
      %v1176 = vsub.f32 %v1174, %v1175
      %v1177 = vand.u32 %v1176, 4294901760
      %1178 = vmatprep.subr.mxu0 %v1177
      %v1179 = vand.u32 %v904, 4294901760
      %v1180 = vsub.f32 %v904, %v1179
      %v1181 = vand.u32 %v1180, 4294901760
      %v1182 = vsub.f32 %v1180, %v1181
      %v1183 = vand.u32 %v1182, 4294901760
      %1184 = vmatpush1.msra.mxu0 %v1183
      %v1185 = vand.u32 %v903, 4294901760
      %v1186 = vsub.f32 %v903, %v1185
      %v1187 = vand.u32 %v1186, 4294901760
      %v1188 = vsub.f32 %v1186, %v1187
      %v1189 = vand.u32 %v1188, 4294901760
      %1190 = vmatprep.subr.mxu0 %v1189
      %v1191 = vand.u32 %v902, 4294901760
      %v1192 = vsub.f32 %v902, %v1191
      %v1193 = vand.u32 %v1192, 4294901760
      %v1194 = vsub.f32 %v1192, %v1193
      %v1195 = vand.u32 %v1194, 4294901760
      %1196 = vmatpush1.msra.mxu0 %v1195
      %v1197 = vand.u32 %v901, 4294901760
      %v1198 = vsub.f32 %v901, %v1197
      %v1199 = vand.u32 %v1198, 4294901760
      %v1200 = vsub.f32 %v1198, %v1199
      %v1201 = vand.u32 %v1200, 4294901760
      %1202 = vmatprep.subr.mxu0 %v1201
      %v1203 = vand.u32 %v900, 4294901760
      %v1204 = vsub.f32 %v900, %v1203
      %v1205 = vand.u32 %v1204, 4294901760
      %v1206 = vsub.f32 %v1204, %v1205
      %v1207 = vand.u32 %v1206, 4294901760
      %1208 = vmatpush1.msra.mxu0 %v1207
      %v1209 = vand.u32 %v899, 4294901760
      %v1210 = vsub.f32 %v899, %v1209
      %v1211 = vand.u32 %v1210, 4294901760
      %v1212 = vsub.f32 %v1210, %v1211
      %v1213 = vand.u32 %v1212, 4294901760
      %1214 = vmatprep.subr.mxu0 %v1213
      %v1215 = vand.u32 %v898, 4294901760
      %v1216 = vsub.f32 %v898, %v1215
      %v1217 = vand.u32 %v1216, 4294901760
      %v1218 = vsub.f32 %v1216, %v1217
      %v1219 = vand.u32 %v1218, 4294901760
      %1220 = vmatpush1.msra.mxu0 %v1219
      %v1221 = vand.u32 %v897, 4294901760
      %v1222 = vsub.f32 %v897, %v1221
      %v1223 = vand.u32 %v1222, 4294901760
      %v1224 = vsub.f32 %v1222, %v1223
      %v1225 = vand.u32 %v1224, 4294901760
      %1226 = vmatprep.subr.mxu0 %v1225
      %v1227 = vand.u32 %v896, 4294901760
      %v1228 = vsub.f32 %v896, %v1227
      %v1229 = vand.u32 %v1228, 4294901760
      %v1230 = vsub.f32 %v1228, %v1229
      %v1231 = vand.u32 %v1230, 4294901760
      %1232 = vmatpush1.msra.mxu0 %v1231
      %v1233 = vand.u32 %v895, 4294901760
      %v1234 = vsub.f32 %v895, %v1233
      %v1235 = vand.u32 %v1234, 4294901760
      %v1236 = vsub.f32 %v1234, %v1235
      %v1237 = vand.u32 %v1236, 4294901760
      %1238 = vmatprep.subr.mxu0 %v1237
      %v1239 = vand.u32 %v894, 4294901760
      %v1240 = vsub.f32 %v894, %v1239
      %v1241 = vand.u32 %v1240, 4294901760
      %v1242 = vsub.f32 %v1240, %v1241
      %v1243 = vand.u32 %v1242, 4294901760
      %1244 = vmatpush1.msra.mxu0 %v1243
      %v1245 = vand.u32 %v893, 4294901760
      %v1246 = vsub.f32 %v893, %v1245
      %v1247 = vand.u32 %v1246, 4294901760
      %v1248 = vsub.f32 %v1246, %v1247
      %v1249 = vand.u32 %v1248, 4294901760
      %1250 = vmatprep.subr.mxu0 %v1249
      %v1251 = vand.u32 %v892, 4294901760
      %v1252 = vsub.f32 %v892, %v1251
      %v1253 = vand.u32 %v1252, 4294901760
      %v1254 = vsub.f32 %v1252, %v1253
      %v1255 = vand.u32 %v1254, 4294901760
      %1256 = vmatpush1.msra.mxu0 %v1255
      %1257 = vmatprep.subr.mxu0 0.0
      %1258 = vmatpush2.msra.mxu0 0.0
      %1259 = vmatprep.subr.mxu0 0.0
      %1260 = vmatpush2.msra.mxu0 0.0
      %1261 = vmatprep.subr.mxu0 0.0
      %1262 = vmatpush2.msra.mxu0 0.0
      %1263 = vmatprep.subr.mxu0 0.0
      %1264 = vmatpush2.msra.mxu0 0.0
      %1265 = vmatprep.subr.mxu0 0.0
      %1266 = vmatpush2.msra.mxu0 0.0
      %1267 = vmatprep.subr.mxu0 0.0
      %1268 = vmatpush2.msra.mxu0 0.0
      %1269 = vmatprep.subr.mxu0 0.0
      %1270 = vmatpush2.msra.mxu0 0.0
      %1271 = vmatprep.subr.mxu0 0.0
      %1272 = vmatpush2.msra.mxu0 0.0
      %1273 = vmatprep.subr.mxu0 0.0
      %1274 = vmatpush2.msra.mxu0 0.0
      %1275 = vmatprep.subr.mxu0 0.0
      %1276 = vmatpush2.msra.mxu0 0.0
      %1277 = vmatprep.subr.mxu0 0.0
      %1278 = vmatpush2.msra.mxu0 0.0
      %1279 = vmatprep.subr.mxu0 0.0
      %1280 = vmatpush2.msra.mxu0 0.0
      %1281 = vmatprep.subr.mxu0 0.0
      %1282 = vmatpush2.msra.mxu0 0.0
      %1283 = vmatprep.subr.mxu0 0.0
      %1284 = vmatpush2.msra.mxu0 0.0
      %1285 = vmatprep.subr.mxu0 0.0
      %1286 = vmatpush2.msra.mxu0 0.0
      %1287 = vmatprep.subr.mxu0 0.0
      %1288 = vmatpush2.msra.mxu0 0.0
      %1289 = vmatprep.mubr.f32.mxu0 0.0
      %v1290 = vand.u32 %v79, 4294901760
      %1291 = vmatmul.mubr.f32.gmra.mxu0 %v1290
      %v1292 = vpop.f32.mrf.mxu0
      %v1293 = vadd.f32 %v1028, %v1292
      %v1294 = vpop.f32.mrf.mxu0
      %v1295 = vadd.f32 %v1030, %v1294
      %1296 = vmatprep.mubr.f32.mxu0 0.0
      %v1297 = vand.u32 %v80, 4294901760
      %1298 = vmatmul.mubr.f32.gmra.mxu0 %v1297
      %v1299 = vpop.f32.mrf.mxu0
      %v1300 = vadd.f32 %v1039, %v1299
      %v1301 = vpop.f32.mrf.mxu0
      %v1302 = vadd.f32 %v1041, %v1301
      %1303 = vmatprep.mubr.f32.mxu0 0.0
      %v1304 = vand.u32 %v81, 4294901760
      %1305 = vmatmul.mubr.f32.gmra.mxu0 %v1304
      %v1306 = vpop.f32.mrf.mxu0
      %v1307 = vadd.f32 %v1050, %v1306
      %v1308 = vpop.f32.mrf.mxu0
      %v1309 = vadd.f32 %v1052, %v1308
      %1310 = vmatprep.mubr.f32.mxu0 0.0
      %v1311 = vand.u32 %v82, 4294901760
      %1312 = vmatmul.mubr.f32.gmra.mxu0 %v1311
      %v1313 = vpop.f32.mrf.mxu0
      %v1314 = vadd.f32 %v1061, %v1313
      %v1315 = vpop.f32.mrf.mxu0
      %v1316 = vadd.f32 %v1063, %v1315
      %1317 = vdwg.mxu0
      %v1318 = vand.u32 %v923, 4294901760
      %v1319 = vsub.f32 %v923, %v1318
      %1320 = vmatprep.subr.mxu0 %v1319
      %v1321 = vand.u32 %v922, 4294901760
      %v1322 = vsub.f32 %v922, %v1321
      %1323 = vmatpush1.msra.mxu0 %v1322
      %v1324 = vand.u32 %v921, 4294901760
      %v1325 = vsub.f32 %v921, %v1324
      %1326 = vmatprep.subr.mxu0 %v1325
      %v1327 = vand.u32 %v920, 4294901760
      %v1328 = vsub.f32 %v920, %v1327
      %1329 = vmatpush1.msra.mxu0 %v1328
      %v1330 = vand.u32 %v919, 4294901760
      %v1331 = vsub.f32 %v919, %v1330
      %1332 = vmatprep.subr.mxu0 %v1331
      %v1333 = vand.u32 %v918, 4294901760
      %v1334 = vsub.f32 %v918, %v1333
      %1335 = vmatpush1.msra.mxu0 %v1334
      %v1336 = vand.u32 %v917, 4294901760
      %v1337 = vsub.f32 %v917, %v1336
      %1338 = vmatprep.subr.mxu0 %v1337
      %v1339 = vand.u32 %v916, 4294901760
      %v1340 = vsub.f32 %v916, %v1339
      %1341 = vmatpush1.msra.mxu0 %v1340
      %v1342 = vand.u32 %v915, 4294901760
      %v1343 = vsub.f32 %v915, %v1342
      %1344 = vmatprep.subr.mxu0 %v1343
      %v1345 = vand.u32 %v914, 4294901760
      %v1346 = vsub.f32 %v914, %v1345
      %1347 = vmatpush1.msra.mxu0 %v1346
      %v1348 = vand.u32 %v913, 4294901760
      %v1349 = vsub.f32 %v913, %v1348
      %1350 = vmatprep.subr.mxu0 %v1349
      %v1351 = vand.u32 %v912, 4294901760
      %v1352 = vsub.f32 %v912, %v1351
      %1353 = vmatpush1.msra.mxu0 %v1352
      %v1354 = vand.u32 %v911, 4294901760
      %v1355 = vsub.f32 %v911, %v1354
      %1356 = vmatprep.subr.mxu0 %v1355
      %v1357 = vand.u32 %v910, 4294901760
      %v1358 = vsub.f32 %v910, %v1357
      %1359 = vmatpush1.msra.mxu0 %v1358
      %v1360 = vand.u32 %v909, 4294901760
      %v1361 = vsub.f32 %v909, %v1360
      %1362 = vmatprep.subr.mxu0 %v1361
      %v1363 = vand.u32 %v908, 4294901760
      %v1364 = vsub.f32 %v908, %v1363
      %1365 = vmatpush1.msra.mxu0 %v1364
      %v1366 = vand.u32 %v907, 4294901760
      %v1367 = vsub.f32 %v907, %v1366
      %1368 = vmatprep.subr.mxu0 %v1367
      %v1369 = vand.u32 %v906, 4294901760
      %v1370 = vsub.f32 %v906, %v1369
      %1371 = vmatpush1.msra.mxu0 %v1370
      %v1372 = vand.u32 %v905, 4294901760
      %v1373 = vsub.f32 %v905, %v1372
      %1374 = vmatprep.subr.mxu0 %v1373
      %v1375 = vand.u32 %v904, 4294901760
      %v1376 = vsub.f32 %v904, %v1375
      %1377 = vmatpush1.msra.mxu0 %v1376
      %v1378 = vand.u32 %v903, 4294901760
      %v1379 = vsub.f32 %v903, %v1378
      %1380 = vmatprep.subr.mxu0 %v1379
      %v1381 = vand.u32 %v902, 4294901760
      %v1382 = vsub.f32 %v902, %v1381
      %1383 = vmatpush1.msra.mxu0 %v1382
      %v1384 = vand.u32 %v901, 4294901760
      %v1385 = vsub.f32 %v901, %v1384
      %1386 = vmatprep.subr.mxu0 %v1385
      %v1387 = vand.u32 %v900, 4294901760
      %v1388 = vsub.f32 %v900, %v1387
      %1389 = vmatpush1.msra.mxu0 %v1388
      %v1390 = vand.u32 %v899, 4294901760
      %v1391 = vsub.f32 %v899, %v1390
      %1392 = vmatprep.subr.mxu0 %v1391
      %v1393 = vand.u32 %v898, 4294901760
      %v1394 = vsub.f32 %v898, %v1393
      %1395 = vmatpush1.msra.mxu0 %v1394
      %v1396 = vand.u32 %v897, 4294901760
      %v1397 = vsub.f32 %v897, %v1396
      %1398 = vmatprep.subr.mxu0 %v1397
      %v1399 = vand.u32 %v896, 4294901760
      %v1400 = vsub.f32 %v896, %v1399
      %1401 = vmatpush1.msra.mxu0 %v1400
      %v1402 = vand.u32 %v895, 4294901760
      %v1403 = vsub.f32 %v895, %v1402
      %1404 = vmatprep.subr.mxu0 %v1403
      %v1405 = vand.u32 %v894, 4294901760
      %v1406 = vsub.f32 %v894, %v1405
      %1407 = vmatpush1.msra.mxu0 %v1406
      %v1408 = vand.u32 %v893, 4294901760
      %v1409 = vsub.f32 %v893, %v1408
      %1410 = vmatprep.subr.mxu0 %v1409
      %v1411 = vand.u32 %v892, 4294901760
      %v1412 = vsub.f32 %v892, %v1411
      %1413 = vmatpush1.msra.mxu0 %v1412
      %1414 = vmatprep.subr.mxu0 0.0
      %1415 = vmatpush2.msra.mxu0 0.0
      %1416 = vmatprep.subr.mxu0 0.0
      %1417 = vmatpush2.msra.mxu0 0.0
      %1418 = vmatprep.subr.mxu0 0.0
      %1419 = vmatpush2.msra.mxu0 0.0
      %1420 = vmatprep.subr.mxu0 0.0
      %1421 = vmatpush2.msra.mxu0 0.0
      %1422 = vmatprep.subr.mxu0 0.0
      %1423 = vmatpush2.msra.mxu0 0.0
      %1424 = vmatprep.subr.mxu0 0.0
      %1425 = vmatpush2.msra.mxu0 0.0
      %1426 = vmatprep.subr.mxu0 0.0
      %1427 = vmatpush2.msra.mxu0 0.0
      %1428 = vmatprep.subr.mxu0 0.0
      %1429 = vmatpush2.msra.mxu0 0.0
      %1430 = vmatprep.subr.mxu0 0.0
      %1431 = vmatpush2.msra.mxu0 0.0
      %1432 = vmatprep.subr.mxu0 0.0
      %1433 = vmatpush2.msra.mxu0 0.0
      %1434 = vmatprep.subr.mxu0 0.0
      %1435 = vmatpush2.msra.mxu0 0.0
      %1436 = vmatprep.subr.mxu0 0.0
      %1437 = vmatpush2.msra.mxu0 0.0
      %1438 = vmatprep.subr.mxu0 0.0
      %1439 = vmatpush2.msra.mxu0 0.0
      %1440 = vmatprep.subr.mxu0 0.0
      %1441 = vmatpush2.msra.mxu0 0.0
      %1442 = vmatprep.subr.mxu0 0.0
      %1443 = vmatpush2.msra.mxu0 0.0
      %1444 = vmatprep.subr.mxu0 0.0
      %1445 = vmatpush2.msra.mxu0 0.0
      %1446 = vmatprep.mubr.f32.mxu0 0.0
      %v1447 = vand.u32 %v79, 4294901760
      %v1448 = vsub.f32 %v79, %v1447
      %1449 = vmatmul.mubr.f32.gmra.mxu0 %v1448
      %v1450 = vpop.f32.mrf.mxu0
      %v1451 = vadd.f32 %v1293, %v1450
      %v1452 = vpop.f32.mrf.mxu0
      %v1453 = vadd.f32 %v1295, %v1452
      %1454 = vmatprep.mubr.f32.mxu0 0.0
      %v1455 = vand.u32 %v80, 4294901760
      %v1456 = vsub.f32 %v80, %v1455
      %1457 = vmatmul.mubr.f32.gmra.mxu0 %v1456
      %v1458 = vpop.f32.mrf.mxu0
      %v1459 = vadd.f32 %v1300, %v1458
      %v1460 = vpop.f32.mrf.mxu0
      %v1461 = vadd.f32 %v1302, %v1460
      %1462 = vmatprep.mubr.f32.mxu0 0.0
      %v1463 = vand.u32 %v81, 4294901760
      %v1464 = vsub.f32 %v81, %v1463
      %1465 = vmatmul.mubr.f32.gmra.mxu0 %v1464
      %v1466 = vpop.f32.mrf.mxu0
      %v1467 = vadd.f32 %v1307, %v1466
      %v1468 = vpop.f32.mrf.mxu0
      %v1469 = vadd.f32 %v1309, %v1468
      %1470 = vmatprep.mubr.f32.mxu0 0.0
      %v1471 = vand.u32 %v82, 4294901760
      %v1472 = vsub.f32 %v82, %v1471
      %1473 = vmatmul.mubr.f32.gmra.mxu0 %v1472
      %v1474 = vpop.f32.mrf.mxu0
      %v1475 = vadd.f32 %v1314, %v1474
      %v1476 = vpop.f32.mrf.mxu0
      %v1477 = vadd.f32 %v1316, %v1476
      %1478 = vdwg.mxu0
      %v1479 = vand.u32 %v923, 4294901760
      %1480 = vmatprep.subr.mxu0 %v1479
      %v1481 = vand.u32 %v922, 4294901760
      %1482 = vmatpush1.msra.mxu0 %v1481
      %v1483 = vand.u32 %v921, 4294901760
      %1484 = vmatprep.subr.mxu0 %v1483
      %v1485 = vand.u32 %v920, 4294901760
      %1486 = vmatpush1.msra.mxu0 %v1485
      %v1487 = vand.u32 %v919, 4294901760
      %1488 = vmatprep.subr.mxu0 %v1487
      %v1489 = vand.u32 %v918, 4294901760
      %1490 = vmatpush1.msra.mxu0 %v1489
      %v1491 = vand.u32 %v917, 4294901760
      %1492 = vmatprep.subr.mxu0 %v1491
      %v1493 = vand.u32 %v916, 4294901760
      %1494 = vmatpush1.msra.mxu0 %v1493
      %v1495 = vand.u32 %v915, 4294901760
      %1496 = vmatprep.subr.mxu0 %v1495
      %v1497 = vand.u32 %v914, 4294901760
      %1498 = vmatpush1.msra.mxu0 %v1497
      %v1499 = vand.u32 %v913, 4294901760
      %1500 = vmatprep.subr.mxu0 %v1499
      %v1501 = vand.u32 %v912, 4294901760
      %1502 = vmatpush1.msra.mxu0 %v1501
      %v1503 = vand.u32 %v911, 4294901760
      %1504 = vmatprep.subr.mxu0 %v1503
      %v1505 = vand.u32 %v910, 4294901760
      %1506 = vmatpush1.msra.mxu0 %v1505
      %v1507 = vand.u32 %v909, 4294901760
      %1508 = vmatprep.subr.mxu0 %v1507
      %v1509 = vand.u32 %v908, 4294901760
      %1510 = vmatpush1.msra.mxu0 %v1509
      %v1511 = vand.u32 %v907, 4294901760
      %1512 = vmatprep.subr.mxu0 %v1511
      %v1513 = vand.u32 %v906, 4294901760
      %1514 = vmatpush1.msra.mxu0 %v1513
      %v1515 = vand.u32 %v905, 4294901760
      %1516 = vmatprep.subr.mxu0 %v1515
      %v1517 = vand.u32 %v904, 4294901760
      %1518 = vmatpush1.msra.mxu0 %v1517
      %v1519 = vand.u32 %v903, 4294901760
      %1520 = vmatprep.subr.mxu0 %v1519
      %v1521 = vand.u32 %v902, 4294901760
      %1522 = vmatpush1.msra.mxu0 %v1521
      %v1523 = vand.u32 %v901, 4294901760
      %1524 = vmatprep.subr.mxu0 %v1523
      %v1525 = vand.u32 %v900, 4294901760
      %1526 = vmatpush1.msra.mxu0 %v1525
      %v1527 = vand.u32 %v899, 4294901760
      %1528 = vmatprep.subr.mxu0 %v1527
      %v1529 = vand.u32 %v898, 4294901760
      %1530 = vmatpush1.msra.mxu0 %v1529
      %v1531 = vand.u32 %v897, 4294901760
      %1532 = vmatprep.subr.mxu0 %v1531
      %v1533 = vand.u32 %v896, 4294901760
      %1534 = vmatpush1.msra.mxu0 %v1533
      %v1535 = vand.u32 %v895, 4294901760
      %1536 = vmatprep.subr.mxu0 %v1535
      %v1537 = vand.u32 %v894, 4294901760
      %1538 = vmatpush1.msra.mxu0 %v1537
      %v1539 = vand.u32 %v893, 4294901760
      %1540 = vmatprep.subr.mxu0 %v1539
      %v1541 = vand.u32 %v892, 4294901760
      %1542 = vmatpush1.msra.mxu0 %v1541
      %1543 = vmatprep.subr.mxu0 0.0
      %1544 = vmatpush2.msra.mxu0 0.0
      %1545 = vmatprep.subr.mxu0 0.0
      %1546 = vmatpush2.msra.mxu0 0.0
      %1547 = vmatprep.subr.mxu0 0.0
      %1548 = vmatpush2.msra.mxu0 0.0
      %1549 = vmatprep.subr.mxu0 0.0
      %1550 = vmatpush2.msra.mxu0 0.0
      %1551 = vmatprep.subr.mxu0 0.0
      %1552 = vmatpush2.msra.mxu0 0.0
      %1553 = vmatprep.subr.mxu0 0.0
      %1554 = vmatpush2.msra.mxu0 0.0
      %1555 = vmatprep.subr.mxu0 0.0
      %1556 = vmatpush2.msra.mxu0 0.0
      %1557 = vmatprep.subr.mxu0 0.0
      %1558 = vmatpush2.msra.mxu0 0.0
      %1559 = vmatprep.subr.mxu0 0.0
      %1560 = vmatpush2.msra.mxu0 0.0
      %1561 = vmatprep.subr.mxu0 0.0
      %1562 = vmatpush2.msra.mxu0 0.0
      %1563 = vmatprep.subr.mxu0 0.0
      %1564 = vmatpush2.msra.mxu0 0.0
      %1565 = vmatprep.subr.mxu0 0.0
      %1566 = vmatpush2.msra.mxu0 0.0
      %1567 = vmatprep.subr.mxu0 0.0
      %1568 = vmatpush2.msra.mxu0 0.0
      %1569 = vmatprep.subr.mxu0 0.0
      %1570 = vmatpush2.msra.mxu0 0.0
      %1571 = vmatprep.subr.mxu0 0.0
      %1572 = vmatpush2.msra.mxu0 0.0
      %1573 = vmatprep.subr.mxu0 0.0
      %1574 = vmatpush2.msra.mxu0 0.0
      %1575 = vmatprep.mubr.f32.mxu0 0.0
      %v1576 = vand.u32 %v79, 4294901760
      %v1577 = vsub.f32 %v79, %v1576
      %v1578 = vand.u32 %v1577, 4294901760
      %1579 = vmatmul.mubr.f32.gmra.mxu0 %v1578
      %v1580 = vpop.f32.mrf.mxu0
      %v1581 = vadd.f32 %v1451, %v1580
      %v1582 = vpop.f32.mrf.mxu0
      %v1583 = vadd.f32 %v1453, %v1582
      %1584 = vmatprep.mubr.f32.mxu0 0.0
      %v1585 = vand.u32 %v80, 4294901760
      %v1586 = vsub.f32 %v80, %v1585
      %v1587 = vand.u32 %v1586, 4294901760
      %1588 = vmatmul.mubr.f32.gmra.mxu0 %v1587
      %v1589 = vpop.f32.mrf.mxu0
      %v1590 = vadd.f32 %v1459, %v1589
      %v1591 = vpop.f32.mrf.mxu0
      %v1592 = vadd.f32 %v1461, %v1591
      %1593 = vmatprep.mubr.f32.mxu0 0.0
      %v1594 = vand.u32 %v81, 4294901760
      %v1595 = vsub.f32 %v81, %v1594
      %v1596 = vand.u32 %v1595, 4294901760
      %1597 = vmatmul.mubr.f32.gmra.mxu0 %v1596
      %v1598 = vpop.f32.mrf.mxu0
      %v1599 = vadd.f32 %v1467, %v1598
      %v1600 = vpop.f32.mrf.mxu0
      %v1601 = vadd.f32 %v1469, %v1600
      %1602 = vmatprep.mubr.f32.mxu0 0.0
      %v1603 = vand.u32 %v82, 4294901760
      %v1604 = vsub.f32 %v82, %v1603
      %v1605 = vand.u32 %v1604, 4294901760
      %1606 = vmatmul.mubr.f32.gmra.mxu0 %v1605
      %v1607 = vpop.f32.mrf.mxu0
      %v1608 = vadd.f32 %v1475, %v1607
      %v1609 = vpop.f32.mrf.mxu0
      %v1610 = vadd.f32 %v1477, %v1609
      %1611 = vdwg.mxu0
      %v1612 = vand.u32 %v923, 4294901760
      %v1613 = vsub.f32 %v923, %v1612
      %v1614 = vand.u32 %v1613, 4294901760
      %1615 = vmatprep.subr.mxu0 %v1614
      %v1616 = vand.u32 %v922, 4294901760
      %v1617 = vsub.f32 %v922, %v1616
      %v1618 = vand.u32 %v1617, 4294901760
      %1619 = vmatpush1.msra.mxu0 %v1618
      %v1620 = vand.u32 %v921, 4294901760
      %v1621 = vsub.f32 %v921, %v1620
      %v1622 = vand.u32 %v1621, 4294901760
      %1623 = vmatprep.subr.mxu0 %v1622
      %v1624 = vand.u32 %v920, 4294901760
      %v1625 = vsub.f32 %v920, %v1624
      %v1626 = vand.u32 %v1625, 4294901760
      %1627 = vmatpush1.msra.mxu0 %v1626
      %v1628 = vand.u32 %v919, 4294901760
      %v1629 = vsub.f32 %v919, %v1628
      %v1630 = vand.u32 %v1629, 4294901760
      %1631 = vmatprep.subr.mxu0 %v1630
      %v1632 = vand.u32 %v918, 4294901760
      %v1633 = vsub.f32 %v918, %v1632
      %v1634 = vand.u32 %v1633, 4294901760
      %1635 = vmatpush1.msra.mxu0 %v1634
      %v1636 = vand.u32 %v917, 4294901760
      %v1637 = vsub.f32 %v917, %v1636
      %v1638 = vand.u32 %v1637, 4294901760
      %1639 = vmatprep.subr.mxu0 %v1638
      %v1640 = vand.u32 %v916, 4294901760
      %v1641 = vsub.f32 %v916, %v1640
      %v1642 = vand.u32 %v1641, 4294901760
      %1643 = vmatpush1.msra.mxu0 %v1642
      %v1644 = vand.u32 %v915, 4294901760
      %v1645 = vsub.f32 %v915, %v1644
      %v1646 = vand.u32 %v1645, 4294901760
      %1647 = vmatprep.subr.mxu0 %v1646
      %v1648 = vand.u32 %v914, 4294901760
      %v1649 = vsub.f32 %v914, %v1648
      %v1650 = vand.u32 %v1649, 4294901760
      %1651 = vmatpush1.msra.mxu0 %v1650
      %v1652 = vand.u32 %v913, 4294901760
      %v1653 = vsub.f32 %v913, %v1652
      %v1654 = vand.u32 %v1653, 4294901760
      %1655 = vmatprep.subr.mxu0 %v1654
      %v1656 = vand.u32 %v912, 4294901760
      %v1657 = vsub.f32 %v912, %v1656
      %v1658 = vand.u32 %v1657, 4294901760
      %1659 = vmatpush1.msra.mxu0 %v1658
      %v1660 = vand.u32 %v911, 4294901760
      %v1661 = vsub.f32 %v911, %v1660
      %v1662 = vand.u32 %v1661, 4294901760
      %1663 = vmatprep.subr.mxu0 %v1662
      %v1664 = vand.u32 %v910, 4294901760
      %v1665 = vsub.f32 %v910, %v1664
      %v1666 = vand.u32 %v1665, 4294901760
      %1667 = vmatpush1.msra.mxu0 %v1666
      %v1668 = vand.u32 %v909, 4294901760
      %v1669 = vsub.f32 %v909, %v1668
      %v1670 = vand.u32 %v1669, 4294901760
      %1671 = vmatprep.subr.mxu0 %v1670
      %v1672 = vand.u32 %v908, 4294901760
      %v1673 = vsub.f32 %v908, %v1672
      %v1674 = vand.u32 %v1673, 4294901760
      %1675 = vmatpush1.msra.mxu0 %v1674
      %v1676 = vand.u32 %v907, 4294901760
      %v1677 = vsub.f32 %v907, %v1676
      %v1678 = vand.u32 %v1677, 4294901760
      %1679 = vmatprep.subr.mxu0 %v1678
      %v1680 = vand.u32 %v906, 4294901760
      %v1681 = vsub.f32 %v906, %v1680
      %v1682 = vand.u32 %v1681, 4294901760
      %1683 = vmatpush1.msra.mxu0 %v1682
      %v1684 = vand.u32 %v905, 4294901760
      %v1685 = vsub.f32 %v905, %v1684
      %v1686 = vand.u32 %v1685, 4294901760
      %1687 = vmatprep.subr.mxu0 %v1686
      %v1688 = vand.u32 %v904, 4294901760
      %v1689 = vsub.f32 %v904, %v1688
      %v1690 = vand.u32 %v1689, 4294901760
      %1691 = vmatpush1.msra.mxu0 %v1690
      %v1692 = vand.u32 %v903, 4294901760
      %v1693 = vsub.f32 %v903, %v1692
      %v1694 = vand.u32 %v1693, 4294901760
      %1695 = vmatprep.subr.mxu0 %v1694
      %v1696 = vand.u32 %v902, 4294901760
      %v1697 = vsub.f32 %v902, %v1696
      %v1698 = vand.u32 %v1697, 4294901760
      %1699 = vmatpush1.msra.mxu0 %v1698
      %v1700 = vand.u32 %v901, 4294901760
      %v1701 = vsub.f32 %v901, %v1700
      %v1702 = vand.u32 %v1701, 4294901760
      %1703 = vmatprep.subr.mxu0 %v1702
      %v1704 = vand.u32 %v900, 4294901760
      %v1705 = vsub.f32 %v900, %v1704
      %v1706 = vand.u32 %v1705, 4294901760
      %1707 = vmatpush1.msra.mxu0 %v1706
      %v1708 = vand.u32 %v899, 4294901760
      %v1709 = vsub.f32 %v899, %v1708
      %v1710 = vand.u32 %v1709, 4294901760
      %1711 = vmatprep.subr.mxu0 %v1710
      %v1712 = vand.u32 %v898, 4294901760
      %v1713 = vsub.f32 %v898, %v1712
      %v1714 = vand.u32 %v1713, 4294901760
      %1715 = vmatpush1.msra.mxu0 %v1714
      %v1716 = vand.u32 %v897, 4294901760
      %v1717 = vsub.f32 %v897, %v1716
      %v1718 = vand.u32 %v1717, 4294901760
      %1719 = vmatprep.subr.mxu0 %v1718
      %v1720 = vand.u32 %v896, 4294901760
      %v1721 = vsub.f32 %v896, %v1720
      %v1722 = vand.u32 %v1721, 4294901760
      %1723 = vmatpush1.msra.mxu0 %v1722
      %v1724 = vand.u32 %v895, 4294901760
      %v1725 = vsub.f32 %v895, %v1724
      %v1726 = vand.u32 %v1725, 4294901760
      %1727 = vmatprep.subr.mxu0 %v1726
      %v1728 = vand.u32 %v894, 4294901760
      %v1729 = vsub.f32 %v894, %v1728
      %v1730 = vand.u32 %v1729, 4294901760
      %1731 = vmatpush1.msra.mxu0 %v1730
      %v1732 = vand.u32 %v893, 4294901760
      %v1733 = vsub.f32 %v893, %v1732
      %v1734 = vand.u32 %v1733, 4294901760
      %1735 = vmatprep.subr.mxu0 %v1734
      %v1736 = vand.u32 %v892, 4294901760
      %v1737 = vsub.f32 %v892, %v1736
      %v1738 = vand.u32 %v1737, 4294901760
      %1739 = vmatpush1.msra.mxu0 %v1738
      %1740 = vmatprep.subr.mxu0 0.0
      %1741 = vmatpush2.msra.mxu0 0.0
      %1742 = vmatprep.subr.mxu0 0.0
      %1743 = vmatpush2.msra.mxu0 0.0
      %1744 = vmatprep.subr.mxu0 0.0
      %1745 = vmatpush2.msra.mxu0 0.0
      %1746 = vmatprep.subr.mxu0 0.0
      %1747 = vmatpush2.msra.mxu0 0.0
      %1748 = vmatprep.subr.mxu0 0.0
      %1749 = vmatpush2.msra.mxu0 0.0
      %1750 = vmatprep.subr.mxu0 0.0
      %1751 = vmatpush2.msra.mxu0 0.0
      %1752 = vmatprep.subr.mxu0 0.0
      %1753 = vmatpush2.msra.mxu0 0.0
      %1754 = vmatprep.subr.mxu0 0.0
      %1755 = vmatpush2.msra.mxu0 0.0
      %1756 = vmatprep.subr.mxu0 0.0
      %1757 = vmatpush2.msra.mxu0 0.0
      %1758 = vmatprep.subr.mxu0 0.0
      %1759 = vmatpush2.msra.mxu0 0.0
      %1760 = vmatprep.subr.mxu0 0.0
      %1761 = vmatpush2.msra.mxu0 0.0
      %1762 = vmatprep.subr.mxu0 0.0
      %1763 = vmatpush2.msra.mxu0 0.0
      %1764 = vmatprep.subr.mxu0 0.0
      %1765 = vmatpush2.msra.mxu0 0.0
      %1766 = vmatprep.subr.mxu0 0.0
      %1767 = vmatpush2.msra.mxu0 0.0
      %1768 = vmatprep.subr.mxu0 0.0
      %1769 = vmatpush2.msra.mxu0 0.0
      %1770 = vmatprep.subr.mxu0 0.0
      %1771 = vmatpush2.msra.mxu0 0.0
      %1772 = vmatprep.mubr.f32.mxu0 0.0
      %v1773 = vand.u32 %v79, 4294901760
      %1774 = vmatmul.mubr.f32.gmra.mxu0 %v1773
      %v1775 = vpop.f32.mrf.mxu0
      %v1776 = vadd.f32 %v1581, %v1775
      %v1777 = vpop.f32.mrf.mxu0
      %v1778 = vadd.f32 %v1583, %v1777
      %1779 = vmatprep.mubr.f32.mxu0 0.0
      %v1780 = vand.u32 %v80, 4294901760
      %1781 = vmatmul.mubr.f32.gmra.mxu0 %v1780
      %v1782 = vpop.f32.mrf.mxu0
      %v1783 = vadd.f32 %v1590, %v1782
      %v1784 = vpop.f32.mrf.mxu0
      %v1785 = vadd.f32 %v1592, %v1784
      %1786 = vmatprep.mubr.f32.mxu0 0.0
      %v1787 = vand.u32 %v81, 4294901760
      %1788 = vmatmul.mubr.f32.gmra.mxu0 %v1787
      %v1789 = vpop.f32.mrf.mxu0
      %v1790 = vadd.f32 %v1599, %v1789
      %v1791 = vpop.f32.mrf.mxu0
      %v1792 = vadd.f32 %v1601, %v1791
      %1793 = vmatprep.mubr.f32.mxu0 0.0
      %v1794 = vand.u32 %v82, 4294901760
      %1795 = vmatmul.mubr.f32.gmra.mxu0 %v1794
      %v1796 = vpop.f32.mrf.mxu0
      %v1797 = vadd.f32 %v1608, %v1796
      %v1798 = vpop.f32.mrf.mxu0
      %v1799 = vadd.f32 %v1610, %v1798
      %1800 = vdwg.mxu0
      %v1801 = vand.u32 %v923, 4294901760
      %1802 = vmatprep.subr.mxu0 %v1801
      %v1803 = vand.u32 %v922, 4294901760
      %1804 = vmatpush1.msra.mxu0 %v1803
      %v1805 = vand.u32 %v921, 4294901760
      %1806 = vmatprep.subr.mxu0 %v1805
      %v1807 = vand.u32 %v920, 4294901760
      %1808 = vmatpush1.msra.mxu0 %v1807
      %v1809 = vand.u32 %v919, 4294901760
      %1810 = vmatprep.subr.mxu0 %v1809
      %v1811 = vand.u32 %v918, 4294901760
      %1812 = vmatpush1.msra.mxu0 %v1811
      %v1813 = vand.u32 %v917, 4294901760
      %1814 = vmatprep.subr.mxu0 %v1813
      %v1815 = vand.u32 %v916, 4294901760
      %1816 = vmatpush1.msra.mxu0 %v1815
      %v1817 = vand.u32 %v915, 4294901760
      %1818 = vmatprep.subr.mxu0 %v1817
      %v1819 = vand.u32 %v914, 4294901760
      %1820 = vmatpush1.msra.mxu0 %v1819
      %v1821 = vand.u32 %v913, 4294901760
      %1822 = vmatprep.subr.mxu0 %v1821
      %v1823 = vand.u32 %v912, 4294901760
      %1824 = vmatpush1.msra.mxu0 %v1823
      %v1825 = vand.u32 %v911, 4294901760
      %1826 = vmatprep.subr.mxu0 %v1825
      %v1827 = vand.u32 %v910, 4294901760
      %1828 = vmatpush1.msra.mxu0 %v1827
      %v1829 = vand.u32 %v909, 4294901760
      %1830 = vmatprep.subr.mxu0 %v1829
      %v1831 = vand.u32 %v908, 4294901760
      %1832 = vmatpush1.msra.mxu0 %v1831
      %v1833 = vand.u32 %v907, 4294901760
      %1834 = vmatprep.subr.mxu0 %v1833
      %v1835 = vand.u32 %v906, 4294901760
      %1836 = vmatpush1.msra.mxu0 %v1835
      %v1837 = vand.u32 %v905, 4294901760
      %1838 = vmatprep.subr.mxu0 %v1837
      %v1839 = vand.u32 %v904, 4294901760
      %1840 = vmatpush1.msra.mxu0 %v1839
      %v1841 = vand.u32 %v903, 4294901760
      %1842 = vmatprep.subr.mxu0 %v1841
      %v1843 = vand.u32 %v902, 4294901760
      %1844 = vmatpush1.msra.mxu0 %v1843
      %v1845 = vand.u32 %v901, 4294901760
      %1846 = vmatprep.subr.mxu0 %v1845
      %v1847 = vand.u32 %v900, 4294901760
      %1848 = vmatpush1.msra.mxu0 %v1847
      %v1849 = vand.u32 %v899, 4294901760
      %1850 = vmatprep.subr.mxu0 %v1849
      %v1851 = vand.u32 %v898, 4294901760
      %1852 = vmatpush1.msra.mxu0 %v1851
      %v1853 = vand.u32 %v897, 4294901760
      %1854 = vmatprep.subr.mxu0 %v1853
      %v1855 = vand.u32 %v896, 4294901760
      %1856 = vmatpush1.msra.mxu0 %v1855
      %v1857 = vand.u32 %v895, 4294901760
      %1858 = vmatprep.subr.mxu0 %v1857
      %v1859 = vand.u32 %v894, 4294901760
      %1860 = vmatpush1.msra.mxu0 %v1859
      %v1861 = vand.u32 %v893, 4294901760
      %1862 = vmatprep.subr.mxu0 %v1861
      %v1863 = vand.u32 %v892, 4294901760
      %1864 = vmatpush1.msra.mxu0 %v1863
      %1865 = vmatprep.subr.mxu0 0.0
      %1866 = vmatpush2.msra.mxu0 0.0
      %1867 = vmatprep.subr.mxu0 0.0
      %1868 = vmatpush2.msra.mxu0 0.0
      %1869 = vmatprep.subr.mxu0 0.0
      %1870 = vmatpush2.msra.mxu0 0.0
      %1871 = vmatprep.subr.mxu0 0.0
      %1872 = vmatpush2.msra.mxu0 0.0
      %1873 = vmatprep.subr.mxu0 0.0
      %1874 = vmatpush2.msra.mxu0 0.0
      %1875 = vmatprep.subr.mxu0 0.0
      %1876 = vmatpush2.msra.mxu0 0.0
      %1877 = vmatprep.subr.mxu0 0.0
      %1878 = vmatpush2.msra.mxu0 0.0
      %1879 = vmatprep.subr.mxu0 0.0
      %1880 = vmatpush2.msra.mxu0 0.0
      %1881 = vmatprep.subr.mxu0 0.0
      %1882 = vmatpush2.msra.mxu0 0.0
      %1883 = vmatprep.subr.mxu0 0.0
      %1884 = vmatpush2.msra.mxu0 0.0
      %1885 = vmatprep.subr.mxu0 0.0
      %1886 = vmatpush2.msra.mxu0 0.0
      %1887 = vmatprep.subr.mxu0 0.0
      %1888 = vmatpush2.msra.mxu0 0.0
      %1889 = vmatprep.subr.mxu0 0.0
      %1890 = vmatpush2.msra.mxu0 0.0
      %1891 = vmatprep.subr.mxu0 0.0
      %1892 = vmatpush2.msra.mxu0 0.0
      %1893 = vmatprep.subr.mxu0 0.0
      %1894 = vmatpush2.msra.mxu0 0.0
      %1895 = vmatprep.subr.mxu0 0.0
      %1896 = vmatpush2.msra.mxu0 0.0
      %1897 = vmatprep.mubr.f32.mxu0 0.0
      %v1898 = vand.u32 %v79, 4294901760
      %1899 = vmatmul.mubr.f32.gmra.mxu0 %v1898
      %v1900 = vpop.f32.mrf.mxu0
      %v1901 = vadd.f32 %v1776, %v1900
      %v1902 = vpop.f32.mrf.mxu0
      %v1903 = vadd.f32 %v1778, %v1902
      %1904 = vmatprep.mubr.f32.mxu0 0.0
      %v1905 = vand.u32 %v80, 4294901760
      %1906 = vmatmul.mubr.f32.gmra.mxu0 %v1905
      %v1907 = vpop.f32.mrf.mxu0
      %v1908 = vadd.f32 %v1783, %v1907
      %v1909 = vpop.f32.mrf.mxu0
      %v1910 = vadd.f32 %v1785, %v1909
      %1911 = vmatprep.mubr.f32.mxu0 0.0
      %v1912 = vand.u32 %v81, 4294901760
      %1913 = vmatmul.mubr.f32.gmra.mxu0 %v1912
      %v1914 = vpop.f32.mrf.mxu0
      %v1915 = vadd.f32 %v1790, %v1914
      %v1916 = vpop.f32.mrf.mxu0
      %v1917 = vadd.f32 %v1792, %v1916
      %1918 = vmatprep.mubr.f32.mxu0 0.0
      %v1919 = vand.u32 %v82, 4294901760
      %1920 = vmatmul.mubr.f32.gmra.mxu0 %v1919
      %v1921 = vpop.f32.mrf.mxu0
      %v1922 = vadd.f32 %v1797, %v1921
      %v1923 = vpop.f32.mrf.mxu0
      %v1924 = vadd.f32 %v1799, %v1923
      %1925 = vdwg.mxu0
      %v1926 = vadd.f32 %v884, %v1901
      %v1927 = vadd.f32 %v885, %v1903
      %v1928 = vadd.f32 %v886, %v1908
      %v1929 = vadd.f32 %v887, %v1910
      %v1930 = vadd.f32 %v888, %v1915
      %v1931 = vadd.f32 %v889, %v1917
      %v1932 = vadd.f32 %v890, %v1922
      %v1933 = vadd.f32 %v891, %v1924
      %1934 = vst [vmem:[#allocation3] sm:$0xff] %v1926
      %vm1935 = vcmask 261120
      %1936 = vst.msk [vmem:[#allocation3 + $0x8] sm:$0xff] %vm1935, %v1927
      %1937 = vst [vmem:[#allocation3 + $0x10] sm:$0xff] %v1928
      %1938 = vst.msk [vmem:[#allocation3 + $0x18] sm:$0xff] %vm1935, %v1929
      %1939 = vst [vmem:[#allocation3 + $0x20] sm:$0xff] %v1930
      %1940 = vst.msk [vmem:[#allocation3 + $0x28] sm:$0xff] %vm1935, %v1931
      %1941 = vst [vmem:[#allocation3 + $0x30] sm:$0xff] %v1932
      %1942 = vst.msk [vmem:[#allocation3 + $0x38] sm:$0xff] %vm1935, %v1933
    $region37: #{tpu_custom_call.1} parent=1 // pred_fallthru
      _
    // Predicated region
    $region38: #{tpu_custom_call.1} parent=1 // pred_check
      _
    $region39: #{tpu_custom_call.1} parent=1 // pred_check_branch
      %1944 = sbr.rel (%p66) target = $region41
    $region40: #{tpu_custom_call.1} parent=1 // pred_region
      %v1945 = vld [vmem:[#allocation3] sm:$0xff]
      %v1946 = vld [vmem:[#allocation3 + $0x8] sm:$0xff]
      %v1947 = vld [vmem:[#allocation3 + $0x10] sm:$0xff]
      %v1948 = vld [vmem:[#allocation3 + $0x18] sm:$0xff]
      %v1949 = vld [vmem:[#allocation3 + $0x20] sm:$0xff]
      %v1950 = vld [vmem:[#allocation3 + $0x28] sm:$0xff]
      %v1951 = vld [vmem:[#allocation3 + $0x30] sm:$0xff]
      %v1952 = vld [vmem:[#allocation3 + $0x38] sm:$0xff]
      %1953 = vst [vmem:[#allocation7] sm:$0xff] %v1945
      %1954 = vst [vmem:[#allocation7 + $0x8] sm:$0xff] %v1947
      %1955 = vst [vmem:[#allocation7 + $0x10] sm:$0xff] %v1949
      %1956 = vst [vmem:[#allocation7 + $0x18] sm:$0xff] %v1951
      %v1957 = vlaneseq
      %v1958 = vand.u32 %v1957, 127
      %vm1959 = vcmp.lt.s32.totalorder %v1958, 4
      %v1960 = vsel %vm1959, %v1945, -inf
      %v1961 = vsel %vm1959, %v1947, -inf
      %v1962 = vsel %vm1959, %v1949, -inf
      %v1963 = vsel %vm1959, %v1951, -inf
      %1964 = vmax.xlane.f32.xlu0 %v1960
      %v1965 = vpop.xlane.xlu0 %1964
      %1966 = vmax.xlane.f32.xlu0 %v1961
      %v1967 = vpop.xlane.xlu0 %1966
      %1968 = vmax.xlane.f32.xlu0 %v1962
      %v1969 = vpop.xlane.xlu0 %1968
      %1970 = vmax.xlane.f32.xlu0 %v1963
      %v1971 = vpop.xlane.xlu0 %1970
      %vm1972 = vcmp.eq.f32.partialorder %v1960, %v1965
      %vm1973 = vcmp.eq.f32.partialorder %v1961, %v1967
      %vm1974 = vcmp.eq.f32.partialorder %v1962, %v1969
      %vm1975 = vcmp.eq.f32.partialorder %v1963, %v1971
      %v1976 = vsel %vm1972, %v1958, 128
      %v1977 = vsel %vm1973, %v1958, 128
      %v1978 = vsel %vm1974, %v1958, 128
      %v1979 = vsel %vm1975, %v1958, 128
      %v1980 = vand.u32 %v1976, 65535
      %v1981 = vshra.s32 %v1976, 16
      %v1982 = vcvt.s32.f32 %v1980
      %v1983 = vcvt.s32.f32 %v1981
      %1984 = vmin.xlane.f32.xlu0 %v1983
      %v1985 = vpop.xlane.xlu0 %1984
      %vm1986 = vcmp.eq.f32.partialorder %v1983, %v1985
      %v1987 = vsel %vm1986, %v1982, inf
      %1988 = vmin.xlane.f32.xlu0 %v1987
      %v1989 = vpop.xlane.xlu0 %1988
      %v1990 = vcvt.f32.s32 %v1989
      %v1991 = vcvt.f32.s32 %v1985
      %v1992 = vshll.u32 %v1991, 16
      %v1993 = vadd.s32 %v1992, %v1990
      %v1994 = vand.u32 %v1977, 65535
      %v1995 = vshra.s32 %v1977, 16
      %v1996 = vcvt.s32.f32 %v1994
      %v1997 = vcvt.s32.f32 %v1995
      %1998 = vmin.xlane.f32.xlu0 %v1997
      %v1999 = vpop.xlane.xlu0 %1998
      %vm2000 = vcmp.eq.f32.partialorder %v1997, %v1999
      %v2001 = vsel %vm2000, %v1996, inf
      %2002 = vmin.xlane.f32.xlu0 %v2001
      %v2003 = vpop.xlane.xlu0 %2002
      %v2004 = vcvt.f32.s32 %v2003
      %v2005 = vcvt.f32.s32 %v1999
      %v2006 = vshll.u32 %v2005, 16
      %v2007 = vadd.s32 %v2006, %v2004
      %v2008 = vand.u32 %v1978, 65535
      %v2009 = vshra.s32 %v1978, 16
      %v2010 = vcvt.s32.f32 %v2008
      %v2011 = vcvt.s32.f32 %v2009
      %2012 = vmin.xlane.f32.xlu0 %v2011
      %v2013 = vpop.xlane.xlu0 %2012
      %vm2014 = vcmp.eq.f32.partialorder %v2011, %v2013
      %v2015 = vsel %vm2014, %v2010, inf
      %2016 = vmin.xlane.f32.xlu0 %v2015
      %v2017 = vpop.xlane.xlu0 %2016
      %v2018 = vcvt.f32.s32 %v2017
      %v2019 = vcvt.f32.s32 %v2013
      %v2020 = vshll.u32 %v2019, 16
      %v2021 = vadd.s32 %v2020, %v2018
      %v2022 = vand.u32 %v1979, 65535
      %v2023 = vshra.s32 %v1979, 16
      %v2024 = vcvt.s32.f32 %v2022
      %v2025 = vcvt.s32.f32 %v2023
      %2026 = vmin.xlane.f32.xlu0 %v2025
      %v2027 = vpop.xlane.xlu0 %2026
      %vm2028 = vcmp.eq.f32.partialorder %v2025, %v2027
      %v2029 = vsel %vm2028, %v2024, inf
      %2030 = vmin.xlane.f32.xlu0 %v2029
      %v2031 = vpop.xlane.xlu0 %2030
      %v2032 = vcvt.f32.s32 %v2031
      %v2033 = vcvt.f32.s32 %v2027
      %v2034 = vshll.u32 %v2033, 16
      %v2035 = vadd.s32 %v2034, %v2032
      %vm2036 = vcmp.eq.s32.totalorder %v1958, %v1993
      %vm2037 = vcmp.eq.s32.totalorder %v1958, %v2007
      %vm2038 = vcmp.eq.s32.totalorder %v1958, %v2021
      %vm2039 = vcmp.eq.s32.totalorder %v1958, %v2035
      %v2040 = vsel %vm2036, -inf, %v1960
      %v2041 = vsel %vm2037, -inf, %v1961
      %v2042 = vsel %vm2038, -inf, %v1962
      %v2043 = vsel %vm2039, -inf, %v1963
      %2044 = vmax.xlane.f32.xlu0 %v2040
      %v2045 = vpop.xlane.xlu0 %2044
      %2046 = vmax.xlane.f32.xlu0 %v2041
      %v2047 = vpop.xlane.xlu0 %2046
      %2048 = vmax.xlane.f32.xlu0 %v2042
      %v2049 = vpop.xlane.xlu0 %2048
      %2050 = vmax.xlane.f32.xlu0 %v2043
      %v2051 = vpop.xlane.xlu0 %2050
      %vm2052 = vcmp.eq.f32.partialorder %v2040, %v2045
      %vm2053 = vcmp.eq.f32.partialorder %v2041, %v2047
      %vm2054 = vcmp.eq.f32.partialorder %v2042, %v2049
      %vm2055 = vcmp.eq.f32.partialorder %v2043, %v2051
      %v2056 = vsel %vm2052, %v1958, 128
      %v2057 = vsel %vm2053, %v1958, 128
      %v2058 = vsel %vm2054, %v1958, 128
      %v2059 = vsel %vm2055, %v1958, 128
      %v2060 = vand.u32 %v2056, 65535
      %v2061 = vshra.s32 %v2056, 16
      %v2062 = vcvt.s32.f32 %v2060
      %v2063 = vcvt.s32.f32 %v2061
      %2064 = vmin.xlane.f32.xlu0 %v2063
      %v2065 = vpop.xlane.xlu0 %2064
      %vm2066 = vcmp.eq.f32.partialorder %v2063, %v2065
      %v2067 = vsel %vm2066, %v2062, inf
      %2068 = vmin.xlane.f32.xlu0 %v2067
      %v2069 = vpop.xlane.xlu0 %2068
      %v2070 = vcvt.f32.s32 %v2069
      %v2071 = vcvt.f32.s32 %v2065
      %v2072 = vshll.u32 %v2071, 16
      %v2073 = vadd.s32 %v2072, %v2070
      %v2074 = vand.u32 %v2057, 65535
      %v2075 = vshra.s32 %v2057, 16
      %v2076 = vcvt.s32.f32 %v2074
      %v2077 = vcvt.s32.f32 %v2075
      %2078 = vmin.xlane.f32.xlu0 %v2077
      %v2079 = vpop.xlane.xlu0 %2078
      %vm2080 = vcmp.eq.f32.partialorder %v2077, %v2079
      %v2081 = vsel %vm2080, %v2076, inf
      %2082 = vmin.xlane.f32.xlu0 %v2081
      %v2083 = vpop.xlane.xlu0 %2082
      %v2084 = vcvt.f32.s32 %v2083
      %v2085 = vcvt.f32.s32 %v2079
      %v2086 = vshll.u32 %v2085, 16
      %v2087 = vadd.s32 %v2086, %v2084
      %v2088 = vand.u32 %v2058, 65535
      %v2089 = vshra.s32 %v2058, 16
      %v2090 = vcvt.s32.f32 %v2088
      %v2091 = vcvt.s32.f32 %v2089
      %2092 = vmin.xlane.f32.xlu0 %v2091
      %v2093 = vpop.xlane.xlu0 %2092
      %vm2094 = vcmp.eq.f32.partialorder %v2091, %v2093
      %v2095 = vsel %vm2094, %v2090, inf
      %2096 = vmin.xlane.f32.xlu0 %v2095
      %v2097 = vpop.xlane.xlu0 %2096
      %v2098 = vcvt.f32.s32 %v2097
      %v2099 = vcvt.f32.s32 %v2093
      %v2100 = vshll.u32 %v2099, 16
      %v2101 = vadd.s32 %v2100, %v2098
      %v2102 = vand.u32 %v2059, 65535
      %v2103 = vshra.s32 %v2059, 16
      %v2104 = vcvt.s32.f32 %v2102
      %v2105 = vcvt.s32.f32 %v2103
      %2106 = vmin.xlane.f32.xlu0 %v2105
      %v2107 = vpop.xlane.xlu0 %2106
      %vm2108 = vcmp.eq.f32.partialorder %v2105, %v2107
      %v2109 = vsel %vm2108, %v2104, inf
      %2110 = vmin.xlane.f32.xlu0 %v2109
      %v2111 = vpop.xlane.xlu0 %2110
      %v2112 = vcvt.f32.s32 %v2111
      %v2113 = vcvt.f32.s32 %v2107
      %v2114 = vshll.u32 %v2113, 16
      %v2115 = vadd.s32 %v2114, %v2112
      %vm2116 = vcmp.eq.s32.totalorder %v1958, %v2073
      %vm2117 = vcmp.eq.s32.totalorder %v1958, %v2087
      %vm2118 = vcmp.eq.s32.totalorder %v1958, %v2101
      %vm2119 = vcmp.eq.s32.totalorder %v1958, %v2115
      %v2120 = vsub.f32 %v2045, %v1965
      %v2121 = vsub.f32 %v2047, %v1967
      %v2122 = vsub.f32 %v2049, %v1969
      %v2123 = vsub.f32 %v2051, %v1971
      %v2124 = vmul.f32 %v2120, 1.442695
      %v2125 = vpow.pop %v2124
      %v2126 = vmul.f32 %v2121, 1.442695
      %v2127 = vpow.pop %v2126
      %v2128 = vmul.f32 %v2122, 1.442695
      %v2129 = vpow.pop %v2128
      %v2130 = vmul.f32 %v2123, 1.442695
      %v2131 = vpow.pop %v2130
      %v2132 = vadd.f32 %v2125, 1.0
      %v2133 = vadd.f32 %v2127, 1.0
      %v2134 = vadd.f32 %v2129, 1.0
      %v2135 = vadd.f32 %v2131, 1.0
      %v2136 = vrcp.pop %v2132
      %v2137 = vmul.f32 1.0, %v2136
      %v2138 = vrcp.pop %v2133
      %v2139 = vmul.f32 1.0, %v2138
      %v2140 = vrcp.pop %v2134
      %v2141 = vmul.f32 1.0, %v2140
      %v2142 = vrcp.pop %v2135
      %v2143 = vmul.f32 1.0, %v2142
      %v2144 = vmul.f32 %v2125, %v2137
      %v2145 = vmul.f32 %v2127, %v2139
      %v2146 = vmul.f32 %v2129, %v2141
      %v2147 = vmul.f32 %v2131, %v2143
      %v2148 = vsel %vm2116, %v2144, 0.0
      %v2149 = vsel %vm2117, %v2145, 0.0
      %v2150 = vsel %vm2118, %v2146, 0.0
      %v2151 = vsel %vm2119, %v2147, 0.0
      %v2152 = vsel %vm2036, %v2137, %v2148
      %v2153 = vsel %vm2037, %v2139, %v2149
      %v2154 = vsel %vm2038, %v2141, %v2150
      %v2155 = vsel %vm2039, %v2143, %v2151
      %v2156 = vld [vmem:[%s5] sm:$0xff]
      %v2157 = vld [vmem:[%s5 + $0x8] sm:$0xff]
      %v2158 = vld [vmem:[%s5 + $0x10] sm:$0xff]
      %v2159 = vld [vmem:[%s5 + $0x18] sm:$0xff]
      %v2160 = vld [vmem:[%s5 + $0x20] sm:$0xff]
      %v2161 = vld [vmem:[%s5 + $0x28] sm:$0xff]
      %v2162 = vld [vmem:[%s5 + $0x30] sm:$0xff]
      %v2163 = vld [vmem:[%s5 + $0x38] sm:$0xff]
      %v2164 = vld [vmem:[%s5 + $0x40] sm:$0xff]
      %v2165 = vld [vmem:[%s5 + $0x48] sm:$0xff]
      %v2166 = vld [vmem:[%s5 + $0x50] sm:$0xff]
      %v2167 = vld [vmem:[%s5 + $0x58] sm:$0xff]
      %v2168 = vld [vmem:[%s5 + $0x60] sm:$0xff]
      %v2169 = vld [vmem:[%s5 + $0x68] sm:$0xff]
      %v2170 = vld [vmem:[%s5 + $0x70] sm:$0xff]
      %v2171 = vld [vmem:[%s5 + $0x78] sm:$0xff]
      %2172 = vmatprep.subr.mxu0 0.0
      %v2173 = vand.u32 %v2171, 4294901760
      %2174 = vmatpush1.msra.mxu0 %v2173
      %2175 = vmatprep.subr.mxu0 0.0
      %v2176 = vand.u32 %v2170, 4294901760
      %2177 = vmatpush1.msra.mxu0 %v2176
      %2178 = vmatprep.subr.mxu0 0.0
      %v2179 = vand.u32 %v2169, 4294901760
      %2180 = vmatpush1.msra.mxu0 %v2179
      %2181 = vmatprep.subr.mxu0 0.0
      %v2182 = vand.u32 %v2168, 4294901760
      %2183 = vmatpush1.msra.mxu0 %v2182
      %2184 = vmatprep.subr.mxu0 0.0
      %v2185 = vand.u32 %v2167, 4294901760
      %2186 = vmatpush1.msra.mxu0 %v2185
      %2187 = vmatprep.subr.mxu0 0.0
      %v2188 = vand.u32 %v2166, 4294901760
      %2189 = vmatpush1.msra.mxu0 %v2188
      %2190 = vmatprep.subr.mxu0 0.0
      %v2191 = vand.u32 %v2165, 4294901760
      %2192 = vmatpush1.msra.mxu0 %v2191
      %2193 = vmatprep.subr.mxu0 0.0
      %v2194 = vand.u32 %v2164, 4294901760
      %2195 = vmatpush1.msra.mxu0 %v2194
      %2196 = vmatprep.subr.mxu0 0.0
      %v2197 = vand.u32 %v2163, 4294901760
      %2198 = vmatpush1.msra.mxu0 %v2197
      %2199 = vmatprep.subr.mxu0 0.0
      %v2200 = vand.u32 %v2162, 4294901760
      %2201 = vmatpush1.msra.mxu0 %v2200
      %2202 = vmatprep.subr.mxu0 0.0
      %v2203 = vand.u32 %v2161, 4294901760
      %2204 = vmatpush1.msra.mxu0 %v2203
      %2205 = vmatprep.subr.mxu0 0.0
      %v2206 = vand.u32 %v2160, 4294901760
      %2207 = vmatpush1.msra.mxu0 %v2206
      %2208 = vmatprep.subr.mxu0 0.0
      %v2209 = vand.u32 %v2159, 4294901760
      %2210 = vmatpush1.msra.mxu0 %v2209
      %2211 = vmatprep.subr.mxu0 0.0
      %v2212 = vand.u32 %v2158, 4294901760
      %2213 = vmatpush1.msra.mxu0 %v2212
      %2214 = vmatprep.subr.mxu0 0.0
      %v2215 = vand.u32 %v2157, 4294901760
      %2216 = vmatpush1.msra.mxu0 %v2215
      %2217 = vmatprep.subr.mxu0 0.0
      %v2218 = vand.u32 %v2156, 4294901760
      %2219 = vmatpush1.msra.mxu0 %v2218
      %2220 = vmatprep.subr.mxu0 0.0
      %2221 = vmatpush2.msra.mxu0 0.0
      %2222 = vmatprep.subr.mxu0 0.0
      %2223 = vmatpush2.msra.mxu0 0.0
      %2224 = vmatprep.subr.mxu0 0.0
      %2225 = vmatpush2.msra.mxu0 0.0
      %2226 = vmatprep.subr.mxu0 0.0
      %2227 = vmatpush2.msra.mxu0 0.0
      %2228 = vmatprep.subr.mxu0 0.0
      %2229 = vmatpush2.msra.mxu0 0.0
      %2230 = vmatprep.subr.mxu0 0.0
      %2231 = vmatpush2.msra.mxu0 0.0
      %2232 = vmatprep.subr.mxu0 0.0
      %2233 = vmatpush2.msra.mxu0 0.0
      %2234 = vmatprep.subr.mxu0 0.0
      %2235 = vmatpush2.msra.mxu0 0.0
      %2236 = vmatprep.subr.mxu0 0.0
      %2237 = vmatpush2.msra.mxu0 0.0
      %2238 = vmatprep.subr.mxu0 0.0
      %2239 = vmatpush2.msra.mxu0 0.0
      %2240 = vmatprep.subr.mxu0 0.0
      %2241 = vmatpush2.msra.mxu0 0.0
      %2242 = vmatprep.subr.mxu0 0.0
      %2243 = vmatpush2.msra.mxu0 0.0
      %2244 = vmatprep.subr.mxu0 0.0
      %2245 = vmatpush2.msra.mxu0 0.0
      %2246 = vmatprep.subr.mxu0 0.0
      %2247 = vmatpush2.msra.mxu0 0.0
      %2248 = vmatprep.subr.mxu0 0.0
      %2249 = vmatpush2.msra.mxu0 0.0
      %2250 = vmatprep.subr.mxu0 0.0
      %2251 = vmatpush2.msra.mxu0 0.0
      %2252 = vmatprep.mubr.f32.mxu0 0.0
      %v2253 = vand.u32 %v2152, 4294901760
      %v2254 = vsub.f32 %v2152, %v2253
      %v2255 = vand.u32 %v2254, 4294901760
      %v2256 = vsub.f32 %v2254, %v2255
      %v2257 = vand.u32 %v2256, 4294901760
      %2258 = vmatmul.mubr.f32.gmra.mxu0 %v2257
      %v2259 = vpop.f32.mrf.mxu0
      %v2260 = vadd.f32 0.0, %v2259
      %v2261 = vpop.f32.mrf.mxu0
      %2262 = vmatprep.mubr.f32.mxu0 0.0
      %v2263 = vand.u32 %v2153, 4294901760
      %v2264 = vsub.f32 %v2153, %v2263
      %v2265 = vand.u32 %v2264, 4294901760
      %v2266 = vsub.f32 %v2264, %v2265
      %v2267 = vand.u32 %v2266, 4294901760
      %2268 = vmatmul.mubr.f32.gmra.mxu0 %v2267
      %v2269 = vpop.f32.mrf.mxu0
      %v2270 = vadd.f32 0.0, %v2269
      %v2271 = vpop.f32.mrf.mxu0
      %2272 = vmatprep.mubr.f32.mxu0 0.0
      %v2273 = vand.u32 %v2154, 4294901760
      %v2274 = vsub.f32 %v2154, %v2273
      %v2275 = vand.u32 %v2274, 4294901760
      %v2276 = vsub.f32 %v2274, %v2275
      %v2277 = vand.u32 %v2276, 4294901760
      %2278 = vmatmul.mubr.f32.gmra.mxu0 %v2277
      %v2279 = vpop.f32.mrf.mxu0
      %v2280 = vadd.f32 0.0, %v2279
      %v2281 = vpop.f32.mrf.mxu0
      %2282 = vmatprep.mubr.f32.mxu0 0.0
      %v2283 = vand.u32 %v2155, 4294901760
      %v2284 = vsub.f32 %v2155, %v2283
      %v2285 = vand.u32 %v2284, 4294901760
      %v2286 = vsub.f32 %v2284, %v2285
      %v2287 = vand.u32 %v2286, 4294901760
      %2288 = vmatmul.mubr.f32.gmra.mxu0 %v2287
      %v2289 = vpop.f32.mrf.mxu0
      %v2290 = vadd.f32 0.0, %v2289
      %v2291 = vpop.f32.mrf.mxu0
      %2292 = vdwg.mxu0
      %2293 = vmatprep.subr.mxu0 0.0
      %v2294 = vand.u32 %v2171, 4294901760
      %v2295 = vsub.f32 %v2171, %v2294
      %v2296 = vand.u32 %v2295, 4294901760
      %v2297 = vsub.f32 %v2295, %v2296
      %v2298 = vand.u32 %v2297, 4294901760
      %2299 = vmatpush1.msra.mxu0 %v2298
      %2300 = vmatprep.subr.mxu0 0.0
      %v2301 = vand.u32 %v2170, 4294901760
      %v2302 = vsub.f32 %v2170, %v2301
      %v2303 = vand.u32 %v2302, 4294901760
      %v2304 = vsub.f32 %v2302, %v2303
      %v2305 = vand.u32 %v2304, 4294901760
      %2306 = vmatpush1.msra.mxu0 %v2305
      %2307 = vmatprep.subr.mxu0 0.0
      %v2308 = vand.u32 %v2169, 4294901760
      %v2309 = vsub.f32 %v2169, %v2308
      %v2310 = vand.u32 %v2309, 4294901760
      %v2311 = vsub.f32 %v2309, %v2310
      %v2312 = vand.u32 %v2311, 4294901760
      %2313 = vmatpush1.msra.mxu0 %v2312
      %2314 = vmatprep.subr.mxu0 0.0
      %v2315 = vand.u32 %v2168, 4294901760
      %v2316 = vsub.f32 %v2168, %v2315
      %v2317 = vand.u32 %v2316, 4294901760
      %v2318 = vsub.f32 %v2316, %v2317
      %v2319 = vand.u32 %v2318, 4294901760
      %2320 = vmatpush1.msra.mxu0 %v2319
      %2321 = vmatprep.subr.mxu0 0.0
      %v2322 = vand.u32 %v2167, 4294901760
      %v2323 = vsub.f32 %v2167, %v2322
      %v2324 = vand.u32 %v2323, 4294901760
      %v2325 = vsub.f32 %v2323, %v2324
      %v2326 = vand.u32 %v2325, 4294901760
      %2327 = vmatpush1.msra.mxu0 %v2326
      %2328 = vmatprep.subr.mxu0 0.0
      %v2329 = vand.u32 %v2166, 4294901760
      %v2330 = vsub.f32 %v2166, %v2329
      %v2331 = vand.u32 %v2330, 4294901760
      %v2332 = vsub.f32 %v2330, %v2331
      %v2333 = vand.u32 %v2332, 4294901760
      %2334 = vmatpush1.msra.mxu0 %v2333
      %2335 = vmatprep.subr.mxu0 0.0
      %v2336 = vand.u32 %v2165, 4294901760
      %v2337 = vsub.f32 %v2165, %v2336
      %v2338 = vand.u32 %v2337, 4294901760
      %v2339 = vsub.f32 %v2337, %v2338
      %v2340 = vand.u32 %v2339, 4294901760
      %2341 = vmatpush1.msra.mxu0 %v2340
      %2342 = vmatprep.subr.mxu0 0.0
      %v2343 = vand.u32 %v2164, 4294901760
      %v2344 = vsub.f32 %v2164, %v2343
      %v2345 = vand.u32 %v2344, 4294901760
      %v2346 = vsub.f32 %v2344, %v2345
      %v2347 = vand.u32 %v2346, 4294901760
      %2348 = vmatpush1.msra.mxu0 %v2347
      %2349 = vmatprep.subr.mxu0 0.0
      %v2350 = vand.u32 %v2163, 4294901760
      %v2351 = vsub.f32 %v2163, %v2350
      %v2352 = vand.u32 %v2351, 4294901760
      %v2353 = vsub.f32 %v2351, %v2352
      %v2354 = vand.u32 %v2353, 4294901760
      %2355 = vmatpush1.msra.mxu0 %v2354
      %2356 = vmatprep.subr.mxu0 0.0
      %v2357 = vand.u32 %v2162, 4294901760
      %v2358 = vsub.f32 %v2162, %v2357
      %v2359 = vand.u32 %v2358, 4294901760
      %v2360 = vsub.f32 %v2358, %v2359
      %v2361 = vand.u32 %v2360, 4294901760
      %2362 = vmatpush1.msra.mxu0 %v2361
      %2363 = vmatprep.subr.mxu0 0.0
      %v2364 = vand.u32 %v2161, 4294901760
      %v2365 = vsub.f32 %v2161, %v2364
      %v2366 = vand.u32 %v2365, 4294901760
      %v2367 = vsub.f32 %v2365, %v2366
      %v2368 = vand.u32 %v2367, 4294901760
      %2369 = vmatpush1.msra.mxu0 %v2368
      %2370 = vmatprep.subr.mxu0 0.0
      %v2371 = vand.u32 %v2160, 4294901760
      %v2372 = vsub.f32 %v2160, %v2371
      %v2373 = vand.u32 %v2372, 4294901760
      %v2374 = vsub.f32 %v2372, %v2373
      %v2375 = vand.u32 %v2374, 4294901760
      %2376 = vmatpush1.msra.mxu0 %v2375
      %2377 = vmatprep.subr.mxu0 0.0
      %v2378 = vand.u32 %v2159, 4294901760
      %v2379 = vsub.f32 %v2159, %v2378
      %v2380 = vand.u32 %v2379, 4294901760
      %v2381 = vsub.f32 %v2379, %v2380
      %v2382 = vand.u32 %v2381, 4294901760
      %2383 = vmatpush1.msra.mxu0 %v2382
      %2384 = vmatprep.subr.mxu0 0.0
      %v2385 = vand.u32 %v2158, 4294901760
      %v2386 = vsub.f32 %v2158, %v2385
      %v2387 = vand.u32 %v2386, 4294901760
      %v2388 = vsub.f32 %v2386, %v2387
      %v2389 = vand.u32 %v2388, 4294901760
      %2390 = vmatpush1.msra.mxu0 %v2389
      %2391 = vmatprep.subr.mxu0 0.0
      %v2392 = vand.u32 %v2157, 4294901760
      %v2393 = vsub.f32 %v2157, %v2392
      %v2394 = vand.u32 %v2393, 4294901760
      %v2395 = vsub.f32 %v2393, %v2394
      %v2396 = vand.u32 %v2395, 4294901760
      %2397 = vmatpush1.msra.mxu0 %v2396
      %2398 = vmatprep.subr.mxu0 0.0
      %v2399 = vand.u32 %v2156, 4294901760
      %v2400 = vsub.f32 %v2156, %v2399
      %v2401 = vand.u32 %v2400, 4294901760
      %v2402 = vsub.f32 %v2400, %v2401
      %v2403 = vand.u32 %v2402, 4294901760
      %2404 = vmatpush1.msra.mxu0 %v2403
      %2405 = vmatprep.subr.mxu0 0.0
      %2406 = vmatpush2.msra.mxu0 0.0
      %2407 = vmatprep.subr.mxu0 0.0
      %2408 = vmatpush2.msra.mxu0 0.0
      %2409 = vmatprep.subr.mxu0 0.0
      %2410 = vmatpush2.msra.mxu0 0.0
      %2411 = vmatprep.subr.mxu0 0.0
      %2412 = vmatpush2.msra.mxu0 0.0
      %2413 = vmatprep.subr.mxu0 0.0
      %2414 = vmatpush2.msra.mxu0 0.0
      %2415 = vmatprep.subr.mxu0 0.0
      %2416 = vmatpush2.msra.mxu0 0.0
      %2417 = vmatprep.subr.mxu0 0.0
      %2418 = vmatpush2.msra.mxu0 0.0
      %2419 = vmatprep.subr.mxu0 0.0
      %2420 = vmatpush2.msra.mxu0 0.0
      %2421 = vmatprep.subr.mxu0 0.0
      %2422 = vmatpush2.msra.mxu0 0.0
      %2423 = vmatprep.subr.mxu0 0.0
      %2424 = vmatpush2.msra.mxu0 0.0
      %2425 = vmatprep.subr.mxu0 0.0
      %2426 = vmatpush2.msra.mxu0 0.0
      %2427 = vmatprep.subr.mxu0 0.0
      %2428 = vmatpush2.msra.mxu0 0.0
      %2429 = vmatprep.subr.mxu0 0.0
      %2430 = vmatpush2.msra.mxu0 0.0
      %2431 = vmatprep.subr.mxu0 0.0
      %2432 = vmatpush2.msra.mxu0 0.0
      %2433 = vmatprep.subr.mxu0 0.0
      %2434 = vmatpush2.msra.mxu0 0.0
      %2435 = vmatprep.subr.mxu0 0.0
      %2436 = vmatpush2.msra.mxu0 0.0
      %2437 = vmatprep.mubr.f32.mxu0 0.0
      %v2438 = vand.u32 %v2152, 4294901760
      %2439 = vmatmul.mubr.f32.gmra.mxu0 %v2438
      %v2440 = vpop.f32.mrf.mxu0
      %v2441 = vadd.f32 %v2260, %v2440
      %v2442 = vpop.f32.mrf.mxu0
      %2443 = vmatprep.mubr.f32.mxu0 0.0
      %v2444 = vand.u32 %v2153, 4294901760
      %2445 = vmatmul.mubr.f32.gmra.mxu0 %v2444
      %v2446 = vpop.f32.mrf.mxu0
      %v2447 = vadd.f32 %v2270, %v2446
      %v2448 = vpop.f32.mrf.mxu0
      %2449 = vmatprep.mubr.f32.mxu0 0.0
      %v2450 = vand.u32 %v2154, 4294901760
      %2451 = vmatmul.mubr.f32.gmra.mxu0 %v2450
      %v2452 = vpop.f32.mrf.mxu0
      %v2453 = vadd.f32 %v2280, %v2452
      %v2454 = vpop.f32.mrf.mxu0
      %2455 = vmatprep.mubr.f32.mxu0 0.0
      %v2456 = vand.u32 %v2155, 4294901760
      %2457 = vmatmul.mubr.f32.gmra.mxu0 %v2456
      %v2458 = vpop.f32.mrf.mxu0
      %v2459 = vadd.f32 %v2290, %v2458
      %v2460 = vpop.f32.mrf.mxu0
      %2461 = vdwg.mxu0
      %2462 = vmatprep.subr.mxu0 0.0
      %v2463 = vand.u32 %v2171, 4294901760
      %v2464 = vsub.f32 %v2171, %v2463
      %2465 = vmatpush1.msra.mxu0 %v2464
      %2466 = vmatprep.subr.mxu0 0.0
      %v2467 = vand.u32 %v2170, 4294901760
      %v2468 = vsub.f32 %v2170, %v2467
      %2469 = vmatpush1.msra.mxu0 %v2468
      %2470 = vmatprep.subr.mxu0 0.0
      %v2471 = vand.u32 %v2169, 4294901760
      %v2472 = vsub.f32 %v2169, %v2471
      %2473 = vmatpush1.msra.mxu0 %v2472
      %2474 = vmatprep.subr.mxu0 0.0
      %v2475 = vand.u32 %v2168, 4294901760
      %v2476 = vsub.f32 %v2168, %v2475
      %2477 = vmatpush1.msra.mxu0 %v2476
      %2478 = vmatprep.subr.mxu0 0.0
      %v2479 = vand.u32 %v2167, 4294901760
      %v2480 = vsub.f32 %v2167, %v2479
      %2481 = vmatpush1.msra.mxu0 %v2480
      %2482 = vmatprep.subr.mxu0 0.0
      %v2483 = vand.u32 %v2166, 4294901760
      %v2484 = vsub.f32 %v2166, %v2483
      %2485 = vmatpush1.msra.mxu0 %v2484
      %2486 = vmatprep.subr.mxu0 0.0
      %v2487 = vand.u32 %v2165, 4294901760
      %v2488 = vsub.f32 %v2165, %v2487
      %2489 = vmatpush1.msra.mxu0 %v2488
      %2490 = vmatprep.subr.mxu0 0.0
      %v2491 = vand.u32 %v2164, 4294901760
      %v2492 = vsub.f32 %v2164, %v2491
      %2493 = vmatpush1.msra.mxu0 %v2492
      %2494 = vmatprep.subr.mxu0 0.0
      %v2495 = vand.u32 %v2163, 4294901760
      %v2496 = vsub.f32 %v2163, %v2495
      %2497 = vmatpush1.msra.mxu0 %v2496
      %2498 = vmatprep.subr.mxu0 0.0
      %v2499 = vand.u32 %v2162, 4294901760
      %v2500 = vsub.f32 %v2162, %v2499
      %2501 = vmatpush1.msra.mxu0 %v2500
      %2502 = vmatprep.subr.mxu0 0.0
      %v2503 = vand.u32 %v2161, 4294901760
      %v2504 = vsub.f32 %v2161, %v2503
      %2505 = vmatpush1.msra.mxu0 %v2504
      %2506 = vmatprep.subr.mxu0 0.0
      %v2507 = vand.u32 %v2160, 4294901760
      %v2508 = vsub.f32 %v2160, %v2507
      %2509 = vmatpush1.msra.mxu0 %v2508
      %2510 = vmatprep.subr.mxu0 0.0
      %v2511 = vand.u32 %v2159, 4294901760
      %v2512 = vsub.f32 %v2159, %v2511
      %2513 = vmatpush1.msra.mxu0 %v2512
      %2514 = vmatprep.subr.mxu0 0.0
      %v2515 = vand.u32 %v2158, 4294901760
      %v2516 = vsub.f32 %v2158, %v2515
      %2517 = vmatpush1.msra.mxu0 %v2516
      %2518 = vmatprep.subr.mxu0 0.0
      %v2519 = vand.u32 %v2157, 4294901760
      %v2520 = vsub.f32 %v2157, %v2519
      %2521 = vmatpush1.msra.mxu0 %v2520
      %2522 = vmatprep.subr.mxu0 0.0
      %v2523 = vand.u32 %v2156, 4294901760
      %v2524 = vsub.f32 %v2156, %v2523
      %2525 = vmatpush1.msra.mxu0 %v2524
      %2526 = vmatprep.subr.mxu0 0.0
      %2527 = vmatpush2.msra.mxu0 0.0
      %2528 = vmatprep.subr.mxu0 0.0
      %2529 = vmatpush2.msra.mxu0 0.0
      %2530 = vmatprep.subr.mxu0 0.0
      %2531 = vmatpush2.msra.mxu0 0.0
      %2532 = vmatprep.subr.mxu0 0.0
      %2533 = vmatpush2.msra.mxu0 0.0
      %2534 = vmatprep.subr.mxu0 0.0
      %2535 = vmatpush2.msra.mxu0 0.0
      %2536 = vmatprep.subr.mxu0 0.0
      %2537 = vmatpush2.msra.mxu0 0.0
      %2538 = vmatprep.subr.mxu0 0.0
      %2539 = vmatpush2.msra.mxu0 0.0
      %2540 = vmatprep.subr.mxu0 0.0
      %2541 = vmatpush2.msra.mxu0 0.0
      %2542 = vmatprep.subr.mxu0 0.0
      %2543 = vmatpush2.msra.mxu0 0.0
      %2544 = vmatprep.subr.mxu0 0.0
      %2545 = vmatpush2.msra.mxu0 0.0
      %2546 = vmatprep.subr.mxu0 0.0
      %2547 = vmatpush2.msra.mxu0 0.0
      %2548 = vmatprep.subr.mxu0 0.0
      %2549 = vmatpush2.msra.mxu0 0.0
      %2550 = vmatprep.subr.mxu0 0.0
      %2551 = vmatpush2.msra.mxu0 0.0
      %2552 = vmatprep.subr.mxu0 0.0
      %2553 = vmatpush2.msra.mxu0 0.0
      %2554 = vmatprep.subr.mxu0 0.0
      %2555 = vmatpush2.msra.mxu0 0.0
      %2556 = vmatprep.subr.mxu0 0.0
      %2557 = vmatpush2.msra.mxu0 0.0
      %2558 = vmatprep.mubr.f32.mxu0 0.0
      %v2559 = vand.u32 %v2152, 4294901760
      %v2560 = vsub.f32 %v2152, %v2559
      %2561 = vmatmul.mubr.f32.gmra.mxu0 %v2560
      %v2562 = vpop.f32.mrf.mxu0
      %v2563 = vadd.f32 %v2441, %v2562
      %v2564 = vpop.f32.mrf.mxu0
      %2565 = vmatprep.mubr.f32.mxu0 0.0
      %v2566 = vand.u32 %v2153, 4294901760
      %v2567 = vsub.f32 %v2153, %v2566
      %2568 = vmatmul.mubr.f32.gmra.mxu0 %v2567
      %v2569 = vpop.f32.mrf.mxu0
      %v2570 = vadd.f32 %v2447, %v2569
      %v2571 = vpop.f32.mrf.mxu0
      %2572 = vmatprep.mubr.f32.mxu0 0.0
      %v2573 = vand.u32 %v2154, 4294901760
      %v2574 = vsub.f32 %v2154, %v2573
      %2575 = vmatmul.mubr.f32.gmra.mxu0 %v2574
      %v2576 = vpop.f32.mrf.mxu0
      %v2577 = vadd.f32 %v2453, %v2576
      %v2578 = vpop.f32.mrf.mxu0
      %2579 = vmatprep.mubr.f32.mxu0 0.0
      %v2580 = vand.u32 %v2155, 4294901760
      %v2581 = vsub.f32 %v2155, %v2580
      %2582 = vmatmul.mubr.f32.gmra.mxu0 %v2581
      %v2583 = vpop.f32.mrf.mxu0
      %v2584 = vadd.f32 %v2459, %v2583
      %v2585 = vpop.f32.mrf.mxu0
      %2586 = vdwg.mxu0
      %2587 = vmatprep.subr.mxu0 0.0
      %v2588 = vand.u32 %v2171, 4294901760
      %2589 = vmatpush1.msra.mxu0 %v2588
      %2590 = vmatprep.subr.mxu0 0.0
      %v2591 = vand.u32 %v2170, 4294901760
      %2592 = vmatpush1.msra.mxu0 %v2591
      %2593 = vmatprep.subr.mxu0 0.0
      %v2594 = vand.u32 %v2169, 4294901760
      %2595 = vmatpush1.msra.mxu0 %v2594
      %2596 = vmatprep.subr.mxu0 0.0
      %v2597 = vand.u32 %v2168, 4294901760
      %2598 = vmatpush1.msra.mxu0 %v2597
      %2599 = vmatprep.subr.mxu0 0.0
      %v2600 = vand.u32 %v2167, 4294901760
      %2601 = vmatpush1.msra.mxu0 %v2600
      %2602 = vmatprep.subr.mxu0 0.0
      %v2603 = vand.u32 %v2166, 4294901760
      %2604 = vmatpush1.msra.mxu0 %v2603
      %2605 = vmatprep.subr.mxu0 0.0
      %v2606 = vand.u32 %v2165, 4294901760
      %2607 = vmatpush1.msra.mxu0 %v2606
      %2608 = vmatprep.subr.mxu0 0.0
      %v2609 = vand.u32 %v2164, 4294901760
      %2610 = vmatpush1.msra.mxu0 %v2609
      %2611 = vmatprep.subr.mxu0 0.0
      %v2612 = vand.u32 %v2163, 4294901760
      %2613 = vmatpush1.msra.mxu0 %v2612
      %2614 = vmatprep.subr.mxu0 0.0
      %v2615 = vand.u32 %v2162, 4294901760
      %2616 = vmatpush1.msra.mxu0 %v2615
      %2617 = vmatprep.subr.mxu0 0.0
      %v2618 = vand.u32 %v2161, 4294901760
      %2619 = vmatpush1.msra.mxu0 %v2618
      %2620 = vmatprep.subr.mxu0 0.0
      %v2621 = vand.u32 %v2160, 4294901760
      %2622 = vmatpush1.msra.mxu0 %v2621
      %2623 = vmatprep.subr.mxu0 0.0
      %v2624 = vand.u32 %v2159, 4294901760
      %2625 = vmatpush1.msra.mxu0 %v2624
      %2626 = vmatprep.subr.mxu0 0.0
      %v2627 = vand.u32 %v2158, 4294901760
      %2628 = vmatpush1.msra.mxu0 %v2627
      %2629 = vmatprep.subr.mxu0 0.0
      %v2630 = vand.u32 %v2157, 4294901760
      %2631 = vmatpush1.msra.mxu0 %v2630
      %2632 = vmatprep.subr.mxu0 0.0
      %v2633 = vand.u32 %v2156, 4294901760
      %2634 = vmatpush1.msra.mxu0 %v2633
      %2635 = vmatprep.subr.mxu0 0.0
      %2636 = vmatpush2.msra.mxu0 0.0
      %2637 = vmatprep.subr.mxu0 0.0
      %2638 = vmatpush2.msra.mxu0 0.0
      %2639 = vmatprep.subr.mxu0 0.0
      %2640 = vmatpush2.msra.mxu0 0.0
      %2641 = vmatprep.subr.mxu0 0.0
      %2642 = vmatpush2.msra.mxu0 0.0
      %2643 = vmatprep.subr.mxu0 0.0
      %2644 = vmatpush2.msra.mxu0 0.0
      %2645 = vmatprep.subr.mxu0 0.0
      %2646 = vmatpush2.msra.mxu0 0.0
      %2647 = vmatprep.subr.mxu0 0.0
      %2648 = vmatpush2.msra.mxu0 0.0
      %2649 = vmatprep.subr.mxu0 0.0
      %2650 = vmatpush2.msra.mxu0 0.0
      %2651 = vmatprep.subr.mxu0 0.0
      %2652 = vmatpush2.msra.mxu0 0.0
      %2653 = vmatprep.subr.mxu0 0.0
      %2654 = vmatpush2.msra.mxu0 0.0
      %2655 = vmatprep.subr.mxu0 0.0
      %2656 = vmatpush2.msra.mxu0 0.0
      %2657 = vmatprep.subr.mxu0 0.0
      %2658 = vmatpush2.msra.mxu0 0.0
      %2659 = vmatprep.subr.mxu0 0.0
      %2660 = vmatpush2.msra.mxu0 0.0
      %2661 = vmatprep.subr.mxu0 0.0
      %2662 = vmatpush2.msra.mxu0 0.0
      %2663 = vmatprep.subr.mxu0 0.0
      %2664 = vmatpush2.msra.mxu0 0.0
      %2665 = vmatprep.subr.mxu0 0.0
      %2666 = vmatpush2.msra.mxu0 0.0
      %2667 = vmatprep.mubr.f32.mxu0 0.0
      %v2668 = vand.u32 %v2152, 4294901760
      %v2669 = vsub.f32 %v2152, %v2668
      %v2670 = vand.u32 %v2669, 4294901760
      %2671 = vmatmul.mubr.f32.gmra.mxu0 %v2670
      %v2672 = vpop.f32.mrf.mxu0
      %v2673 = vadd.f32 %v2563, %v2672
      %v2674 = vpop.f32.mrf.mxu0
      %2675 = vmatprep.mubr.f32.mxu0 0.0
      %v2676 = vand.u32 %v2153, 4294901760
      %v2677 = vsub.f32 %v2153, %v2676
      %v2678 = vand.u32 %v2677, 4294901760
      %2679 = vmatmul.mubr.f32.gmra.mxu0 %v2678
      %v2680 = vpop.f32.mrf.mxu0
      %v2681 = vadd.f32 %v2570, %v2680
      %v2682 = vpop.f32.mrf.mxu0
      %2683 = vmatprep.mubr.f32.mxu0 0.0
      %v2684 = vand.u32 %v2154, 4294901760
      %v2685 = vsub.f32 %v2154, %v2684
      %v2686 = vand.u32 %v2685, 4294901760
      %2687 = vmatmul.mubr.f32.gmra.mxu0 %v2686
      %v2688 = vpop.f32.mrf.mxu0
      %v2689 = vadd.f32 %v2577, %v2688
      %v2690 = vpop.f32.mrf.mxu0
      %2691 = vmatprep.mubr.f32.mxu0 0.0
      %v2692 = vand.u32 %v2155, 4294901760
      %v2693 = vsub.f32 %v2155, %v2692
      %v2694 = vand.u32 %v2693, 4294901760
      %2695 = vmatmul.mubr.f32.gmra.mxu0 %v2694
      %v2696 = vpop.f32.mrf.mxu0
      %v2697 = vadd.f32 %v2584, %v2696
      %v2698 = vpop.f32.mrf.mxu0
      %2699 = vdwg.mxu0
      %2700 = vmatprep.subr.mxu0 0.0
      %v2701 = vand.u32 %v2171, 4294901760
      %v2702 = vsub.f32 %v2171, %v2701
      %v2703 = vand.u32 %v2702, 4294901760
      %2704 = vmatpush1.msra.mxu0 %v2703
      %2705 = vmatprep.subr.mxu0 0.0
      %v2706 = vand.u32 %v2170, 4294901760
      %v2707 = vsub.f32 %v2170, %v2706
      %v2708 = vand.u32 %v2707, 4294901760
      %2709 = vmatpush1.msra.mxu0 %v2708
      %2710 = vmatprep.subr.mxu0 0.0
      %v2711 = vand.u32 %v2169, 4294901760
      %v2712 = vsub.f32 %v2169, %v2711
      %v2713 = vand.u32 %v2712, 4294901760
      %2714 = vmatpush1.msra.mxu0 %v2713
      %2715 = vmatprep.subr.mxu0 0.0
      %v2716 = vand.u32 %v2168, 4294901760
      %v2717 = vsub.f32 %v2168, %v2716
      %v2718 = vand.u32 %v2717, 4294901760
      %2719 = vmatpush1.msra.mxu0 %v2718
      %2720 = vmatprep.subr.mxu0 0.0
      %v2721 = vand.u32 %v2167, 4294901760
      %v2722 = vsub.f32 %v2167, %v2721
      %v2723 = vand.u32 %v2722, 4294901760
      %2724 = vmatpush1.msra.mxu0 %v2723
      %2725 = vmatprep.subr.mxu0 0.0
      %v2726 = vand.u32 %v2166, 4294901760
      %v2727 = vsub.f32 %v2166, %v2726
      %v2728 = vand.u32 %v2727, 4294901760
      %2729 = vmatpush1.msra.mxu0 %v2728
      %2730 = vmatprep.subr.mxu0 0.0
      %v2731 = vand.u32 %v2165, 4294901760
      %v2732 = vsub.f32 %v2165, %v2731
      %v2733 = vand.u32 %v2732, 4294901760
      %2734 = vmatpush1.msra.mxu0 %v2733
      %2735 = vmatprep.subr.mxu0 0.0
      %v2736 = vand.u32 %v2164, 4294901760
      %v2737 = vsub.f32 %v2164, %v2736
      %v2738 = vand.u32 %v2737, 4294901760
      %2739 = vmatpush1.msra.mxu0 %v2738
      %2740 = vmatprep.subr.mxu0 0.0
      %v2741 = vand.u32 %v2163, 4294901760
      %v2742 = vsub.f32 %v2163, %v2741
      %v2743 = vand.u32 %v2742, 4294901760
      %2744 = vmatpush1.msra.mxu0 %v2743
      %2745 = vmatprep.subr.mxu0 0.0
      %v2746 = vand.u32 %v2162, 4294901760
      %v2747 = vsub.f32 %v2162, %v2746
      %v2748 = vand.u32 %v2747, 4294901760
      %2749 = vmatpush1.msra.mxu0 %v2748
      %2750 = vmatprep.subr.mxu0 0.0
      %v2751 = vand.u32 %v2161, 4294901760
      %v2752 = vsub.f32 %v2161, %v2751
      %v2753 = vand.u32 %v2752, 4294901760
      %2754 = vmatpush1.msra.mxu0 %v2753
      %2755 = vmatprep.subr.mxu0 0.0
      %v2756 = vand.u32 %v2160, 4294901760
      %v2757 = vsub.f32 %v2160, %v2756
      %v2758 = vand.u32 %v2757, 4294901760
      %2759 = vmatpush1.msra.mxu0 %v2758
      %2760 = vmatprep.subr.mxu0 0.0
      %v2761 = vand.u32 %v2159, 4294901760
      %v2762 = vsub.f32 %v2159, %v2761
      %v2763 = vand.u32 %v2762, 4294901760
      %2764 = vmatpush1.msra.mxu0 %v2763
      %2765 = vmatprep.subr.mxu0 0.0
      %v2766 = vand.u32 %v2158, 4294901760
      %v2767 = vsub.f32 %v2158, %v2766
      %v2768 = vand.u32 %v2767, 4294901760
      %2769 = vmatpush1.msra.mxu0 %v2768
      %2770 = vmatprep.subr.mxu0 0.0
      %v2771 = vand.u32 %v2157, 4294901760
      %v2772 = vsub.f32 %v2157, %v2771
      %v2773 = vand.u32 %v2772, 4294901760
      %2774 = vmatpush1.msra.mxu0 %v2773
      %2775 = vmatprep.subr.mxu0 0.0
      %v2776 = vand.u32 %v2156, 4294901760
      %v2777 = vsub.f32 %v2156, %v2776
      %v2778 = vand.u32 %v2777, 4294901760
      %2779 = vmatpush1.msra.mxu0 %v2778
      %2780 = vmatprep.subr.mxu0 0.0
      %2781 = vmatpush2.msra.mxu0 0.0
      %2782 = vmatprep.subr.mxu0 0.0
      %2783 = vmatpush2.msra.mxu0 0.0
      %2784 = vmatprep.subr.mxu0 0.0
      %2785 = vmatpush2.msra.mxu0 0.0
      %2786 = vmatprep.subr.mxu0 0.0
      %2787 = vmatpush2.msra.mxu0 0.0
      %2788 = vmatprep.subr.mxu0 0.0
      %2789 = vmatpush2.msra.mxu0 0.0
      %2790 = vmatprep.subr.mxu0 0.0
      %2791 = vmatpush2.msra.mxu0 0.0
      %2792 = vmatprep.subr.mxu0 0.0
      %2793 = vmatpush2.msra.mxu0 0.0
      %2794 = vmatprep.subr.mxu0 0.0
      %2795 = vmatpush2.msra.mxu0 0.0
      %2796 = vmatprep.subr.mxu0 0.0
      %2797 = vmatpush2.msra.mxu0 0.0
      %2798 = vmatprep.subr.mxu0 0.0
      %2799 = vmatpush2.msra.mxu0 0.0
      %2800 = vmatprep.subr.mxu0 0.0
      %2801 = vmatpush2.msra.mxu0 0.0
      %2802 = vmatprep.subr.mxu0 0.0
      %2803 = vmatpush2.msra.mxu0 0.0
      %2804 = vmatprep.subr.mxu0 0.0
      %2805 = vmatpush2.msra.mxu0 0.0
      %2806 = vmatprep.subr.mxu0 0.0
      %2807 = vmatpush2.msra.mxu0 0.0
      %2808 = vmatprep.subr.mxu0 0.0
      %2809 = vmatpush2.msra.mxu0 0.0
      %2810 = vmatprep.subr.mxu0 0.0
      %2811 = vmatpush2.msra.mxu0 0.0
      %2812 = vmatprep.mubr.f32.mxu0 0.0
      %v2813 = vand.u32 %v2152, 4294901760
      %2814 = vmatmul.mubr.f32.gmra.mxu0 %v2813
      %v2815 = vpop.f32.mrf.mxu0
      %v2816 = vadd.f32 %v2673, %v2815
      %v2817 = vpop.f32.mrf.mxu0
      %2818 = vmatprep.mubr.f32.mxu0 0.0
      %v2819 = vand.u32 %v2153, 4294901760
      %2820 = vmatmul.mubr.f32.gmra.mxu0 %v2819
      %v2821 = vpop.f32.mrf.mxu0
      %v2822 = vadd.f32 %v2681, %v2821
      %v2823 = vpop.f32.mrf.mxu0
      %2824 = vmatprep.mubr.f32.mxu0 0.0
      %v2825 = vand.u32 %v2154, 4294901760
      %2826 = vmatmul.mubr.f32.gmra.mxu0 %v2825
      %v2827 = vpop.f32.mrf.mxu0
      %v2828 = vadd.f32 %v2689, %v2827
      %v2829 = vpop.f32.mrf.mxu0
      %2830 = vmatprep.mubr.f32.mxu0 0.0
      %v2831 = vand.u32 %v2155, 4294901760
      %2832 = vmatmul.mubr.f32.gmra.mxu0 %v2831
      %v2833 = vpop.f32.mrf.mxu0
      %v2834 = vadd.f32 %v2697, %v2833
      %v2835 = vpop.f32.mrf.mxu0
      %2836 = vdwg.mxu0
      %2837 = vmatprep.subr.mxu0 0.0
      %v2838 = vand.u32 %v2171, 4294901760
      %2839 = vmatpush1.msra.mxu0 %v2838
      %2840 = vmatprep.subr.mxu0 0.0
      %v2841 = vand.u32 %v2170, 4294901760
      %2842 = vmatpush1.msra.mxu0 %v2841
      %2843 = vmatprep.subr.mxu0 0.0
      %v2844 = vand.u32 %v2169, 4294901760
      %2845 = vmatpush1.msra.mxu0 %v2844
      %2846 = vmatprep.subr.mxu0 0.0
      %v2847 = vand.u32 %v2168, 4294901760
      %2848 = vmatpush1.msra.mxu0 %v2847
      %2849 = vmatprep.subr.mxu0 0.0
      %v2850 = vand.u32 %v2167, 4294901760
      %2851 = vmatpush1.msra.mxu0 %v2850
      %2852 = vmatprep.subr.mxu0 0.0
      %v2853 = vand.u32 %v2166, 4294901760
      %2854 = vmatpush1.msra.mxu0 %v2853
      %2855 = vmatprep.subr.mxu0 0.0
      %v2856 = vand.u32 %v2165, 4294901760
      %2857 = vmatpush1.msra.mxu0 %v2856
      %2858 = vmatprep.subr.mxu0 0.0
      %v2859 = vand.u32 %v2164, 4294901760
      %2860 = vmatpush1.msra.mxu0 %v2859
      %2861 = vmatprep.subr.mxu0 0.0
      %v2862 = vand.u32 %v2163, 4294901760
      %2863 = vmatpush1.msra.mxu0 %v2862
      %2864 = vmatprep.subr.mxu0 0.0
      %v2865 = vand.u32 %v2162, 4294901760
      %2866 = vmatpush1.msra.mxu0 %v2865
      %2867 = vmatprep.subr.mxu0 0.0
      %v2868 = vand.u32 %v2161, 4294901760
      %2869 = vmatpush1.msra.mxu0 %v2868
      %2870 = vmatprep.subr.mxu0 0.0
      %v2871 = vand.u32 %v2160, 4294901760
      %2872 = vmatpush1.msra.mxu0 %v2871
      %2873 = vmatprep.subr.mxu0 0.0
      %v2874 = vand.u32 %v2159, 4294901760
      %2875 = vmatpush1.msra.mxu0 %v2874
      %2876 = vmatprep.subr.mxu0 0.0
      %v2877 = vand.u32 %v2158, 4294901760
      %2878 = vmatpush1.msra.mxu0 %v2877
      %2879 = vmatprep.subr.mxu0 0.0
      %v2880 = vand.u32 %v2157, 4294901760
      %2881 = vmatpush1.msra.mxu0 %v2880
      %2882 = vmatprep.subr.mxu0 0.0
      %v2883 = vand.u32 %v2156, 4294901760
      %2884 = vmatpush1.msra.mxu0 %v2883
      %2885 = vmatprep.subr.mxu0 0.0
      %2886 = vmatpush2.msra.mxu0 0.0
      %2887 = vmatprep.subr.mxu0 0.0
      %2888 = vmatpush2.msra.mxu0 0.0
      %2889 = vmatprep.subr.mxu0 0.0
      %2890 = vmatpush2.msra.mxu0 0.0
      %2891 = vmatprep.subr.mxu0 0.0
      %2892 = vmatpush2.msra.mxu0 0.0
      %2893 = vmatprep.subr.mxu0 0.0
      %2894 = vmatpush2.msra.mxu0 0.0
      %2895 = vmatprep.subr.mxu0 0.0
      %2896 = vmatpush2.msra.mxu0 0.0
      %2897 = vmatprep.subr.mxu0 0.0
      %2898 = vmatpush2.msra.mxu0 0.0
      %2899 = vmatprep.subr.mxu0 0.0
      %2900 = vmatpush2.msra.mxu0 0.0
      %2901 = vmatprep.subr.mxu0 0.0
      %2902 = vmatpush2.msra.mxu0 0.0
      %2903 = vmatprep.subr.mxu0 0.0
      %2904 = vmatpush2.msra.mxu0 0.0
      %2905 = vmatprep.subr.mxu0 0.0
      %2906 = vmatpush2.msra.mxu0 0.0
      %2907 = vmatprep.subr.mxu0 0.0
      %2908 = vmatpush2.msra.mxu0 0.0
      %2909 = vmatprep.subr.mxu0 0.0
      %2910 = vmatpush2.msra.mxu0 0.0
      %2911 = vmatprep.subr.mxu0 0.0
      %2912 = vmatpush2.msra.mxu0 0.0
      %2913 = vmatprep.subr.mxu0 0.0
      %2914 = vmatpush2.msra.mxu0 0.0
      %2915 = vmatprep.subr.mxu0 0.0
      %2916 = vmatpush2.msra.mxu0 0.0
      %2917 = vmatprep.mubr.f32.mxu0 0.0
      %v2918 = vand.u32 %v2152, 4294901760
      %2919 = vmatmul.mubr.f32.gmra.mxu0 %v2918
      %v2920 = vpop.f32.mrf.mxu0
      %v2921 = vadd.f32 %v2816, %v2920
      %v2922 = vpop.f32.mrf.mxu0
      %2923 = vmatprep.mubr.f32.mxu0 0.0
      %v2924 = vand.u32 %v2153, 4294901760
      %2925 = vmatmul.mubr.f32.gmra.mxu0 %v2924
      %v2926 = vpop.f32.mrf.mxu0
      %v2927 = vadd.f32 %v2822, %v2926
      %v2928 = vpop.f32.mrf.mxu0
      %2929 = vmatprep.mubr.f32.mxu0 0.0
      %v2930 = vand.u32 %v2154, 4294901760
      %2931 = vmatmul.mubr.f32.gmra.mxu0 %v2930
      %v2932 = vpop.f32.mrf.mxu0
      %v2933 = vadd.f32 %v2828, %v2932
      %v2934 = vpop.f32.mrf.mxu0
      %2935 = vmatprep.mubr.f32.mxu0 0.0
      %v2936 = vand.u32 %v2155, 4294901760
      %2937 = vmatmul.mubr.f32.gmra.mxu0 %v2936
      %v2938 = vpop.f32.mrf.mxu0
      %v2939 = vadd.f32 %v2834, %v2938
      %v2940 = vpop.f32.mrf.mxu0
      %2941 = vdwg.mxu0
      %v2942 = vmul.f32 %v1946, %v2921
      %v2943 = vmul.f32 %v1948, %v2927
      %v2944 = vmul.f32 %v1950, %v2933
      %v2945 = vmul.f32 %v1952, %v2939
      %vm2946 = vcmask 261120
      %2947 = vst.msk [vmem:[#allocation4] sm:$0xff] %vm2946, %v2942
      %2948 = vst.msk [vmem:[#allocation4 + $0x8] sm:$0xff] %vm2946, %v2943
      %2949 = vst.msk [vmem:[#allocation4 + $0x10] sm:$0xff] %vm2946, %v2944
      %2950 = vst.msk [vmem:[#allocation4 + $0x18] sm:$0xff] %vm2946, %v2945
    $region41: #{tpu_custom_call.1} parent=1 // pred_fallthru
      _
    // Predicated region
    $region42: #{tpu_custom_call.1} parent=1 // pred_check
      %p2951 = pneg %p57
    $region43: #{tpu_custom_call.1} parent=1 // pred_check_branch
      %2953 = sbr.rel (%p2951) target = $region45
    $region44: #{tpu_custom_call.1} parent=1 // pred_region
      %v2954 = vld [vmem:[#allocation4] sm:$0xff]
      %v2955 = vld [vmem:[#allocation4 + $0x8] sm:$0xff]
      %v2956 = vld [vmem:[#allocation4 + $0x10] sm:$0xff]
      %v2957 = vld [vmem:[#allocation4 + $0x18] sm:$0xff]
      %v2958 = vld [vmem:[%s4] sm:$0xff]
      %v2959 = vld [vmem:[%s4 + $0x8] sm:$0xff]
      %v2960 = vld [vmem:[%s4 + $0x10] sm:$0xff]
      %v2961 = vld [vmem:[%s4 + $0x18] sm:$0xff]
      %vm2962 = vcmask 261120
      %v2964 = vsel %vm2962, %v2954, 0
      %v2967 = vsel %vm2962, %v2955, 0
      %v2970 = vsel %vm2962, %v2956, 0
      %v2973 = vsel %vm2962, %v2957, 0
      %2975 = vmatprep.subr.mxu0 0.0
      %2976 = vmatpush1.msra.mxu0 0.0
      %2977 = vmatprep.subr.mxu0 0.0
      %2978 = vmatpush1.msra.mxu0 0.0
      %2979 = vmatprep.subr.mxu0 0.0
      %2980 = vmatpush1.msra.mxu0 0.0
      %2981 = vmatprep.subr.mxu0 0.0
      %2982 = vmatpush1.msra.mxu0 0.0
      %2983 = vmatprep.subr.mxu0 0.0
      %2984 = vmatpush1.msra.mxu0 0.0
      %2985 = vmatprep.subr.mxu0 0.0
      %2986 = vmatpush1.msra.mxu0 0.0
      %2987 = vmatprep.subr.mxu0 0.0
      %2988 = vmatpush1.msra.mxu0 0.0
      %2989 = vmatprep.subr.mxu0 0.0
      %2990 = vmatpush1.msra.mxu0 0.0
      %2991 = vmatprep.subr.mxu0 0.0
      %2992 = vmatpush1.msra.mxu0 0.0
      %2993 = vmatprep.subr.mxu0 0.0
      %2994 = vmatpush1.msra.mxu0 0.0
      %2995 = vmatprep.subr.mxu0 0.0
      %2996 = vmatpush1.msra.mxu0 0.0
      %2997 = vmatprep.subr.mxu0 0.0
      %2998 = vmatpush1.msra.mxu0 0.0
      %2999 = vmatprep.subr.mxu0 0.0
      %v3000 = vand.u32 %v2961, 4294901760
      %3001 = vmatpush1.msra.mxu0 %v3000
      %3002 = vmatprep.subr.mxu0 0.0
      %v3003 = vand.u32 %v2960, 4294901760
      %3004 = vmatpush1.msra.mxu0 %v3003
      %3005 = vmatprep.subr.mxu0 0.0
      %v3006 = vand.u32 %v2959, 4294901760
      %3007 = vmatpush1.msra.mxu0 %v3006
      %3008 = vmatprep.subr.mxu0 0.0
      %v3009 = vand.u32 %v2958, 4294901760
      %3010 = vmatpush1.msra.mxu0 %v3009
      %3011 = vmatprep.subr.mxu0 0.0
      %3012 = vmatpush2.msra.mxu0 0.0
      %3013 = vmatprep.subr.mxu0 0.0
      %3014 = vmatpush2.msra.mxu0 0.0
      %3015 = vmatprep.subr.mxu0 0.0
      %3016 = vmatpush2.msra.mxu0 0.0
      %3017 = vmatprep.subr.mxu0 0.0
      %3018 = vmatpush2.msra.mxu0 0.0
      %3019 = vmatprep.subr.mxu0 0.0
      %3020 = vmatpush2.msra.mxu0 0.0
      %3021 = vmatprep.subr.mxu0 0.0
      %3022 = vmatpush2.msra.mxu0 0.0
      %3023 = vmatprep.subr.mxu0 0.0
      %3024 = vmatpush2.msra.mxu0 0.0
      %3025 = vmatprep.subr.mxu0 0.0
      %3026 = vmatpush2.msra.mxu0 0.0
      %3027 = vmatprep.subr.mxu0 0.0
      %3028 = vmatpush2.msra.mxu0 0.0
      %3029 = vmatprep.subr.mxu0 0.0
      %3030 = vmatpush2.msra.mxu0 0.0
      %3031 = vmatprep.subr.mxu0 0.0
      %3032 = vmatpush2.msra.mxu0 0.0
      %3033 = vmatprep.subr.mxu0 0.0
      %3034 = vmatpush2.msra.mxu0 0.0
      %3035 = vmatprep.subr.mxu0 0.0
      %3036 = vmatpush2.msra.mxu0 0.0
      %3037 = vmatprep.subr.mxu0 0.0
      %3038 = vmatpush2.msra.mxu0 0.0
      %3039 = vmatprep.subr.mxu0 0.0
      %3040 = vmatpush2.msra.mxu0 0.0
      %3041 = vmatprep.subr.mxu0 0.0
      %3042 = vmatpush2.msra.mxu0 0.0
      %3043 = vmatprep.mubr.f32.mxu0 0.0
      %v3044 = vand.u32 %v2964, 4294901760
      %v3045 = vsub.f32 %v2964, %v3044
      %v3046 = vand.u32 %v3045, 4294901760
      %v3047 = vsub.f32 %v3045, %v3046
      %v3048 = vand.u32 %v3047, 4294901760
      %3049 = vmatmul.mubr.f32.gmra.mxu0 %v3048
      %v3050 = vpop.f32.mrf.mxu0
      %v3051 = vadd.f32 0.0, %v3050
      %v3052 = vpop.f32.mrf.mxu0
      %3053 = vmatprep.mubr.f32.mxu0 0.0
      %v3054 = vand.u32 %v2967, 4294901760
      %v3055 = vsub.f32 %v2967, %v3054
      %v3056 = vand.u32 %v3055, 4294901760
      %v3057 = vsub.f32 %v3055, %v3056
      %v3058 = vand.u32 %v3057, 4294901760
      %3059 = vmatmul.mubr.f32.gmra.mxu0 %v3058
      %v3060 = vpop.f32.mrf.mxu0
      %v3061 = vadd.f32 0.0, %v3060
      %v3062 = vpop.f32.mrf.mxu0
      %3063 = vmatprep.mubr.f32.mxu0 0.0
      %v3064 = vand.u32 %v2970, 4294901760
      %v3065 = vsub.f32 %v2970, %v3064
      %v3066 = vand.u32 %v3065, 4294901760
      %v3067 = vsub.f32 %v3065, %v3066
      %v3068 = vand.u32 %v3067, 4294901760
      %3069 = vmatmul.mubr.f32.gmra.mxu0 %v3068
      %v3070 = vpop.f32.mrf.mxu0
      %v3071 = vadd.f32 0.0, %v3070
      %v3072 = vpop.f32.mrf.mxu0
      %3073 = vmatprep.mubr.f32.mxu0 0.0
      %v3074 = vand.u32 %v2973, 4294901760
      %v3075 = vsub.f32 %v2973, %v3074
      %v3076 = vand.u32 %v3075, 4294901760
      %v3077 = vsub.f32 %v3075, %v3076
      %v3078 = vand.u32 %v3077, 4294901760
      %3079 = vmatmul.mubr.f32.gmra.mxu0 %v3078
      %v3080 = vpop.f32.mrf.mxu0
      %v3081 = vadd.f32 0.0, %v3080
      %v3082 = vpop.f32.mrf.mxu0
      %3083 = vdwg.mxu0
      %3084 = vmatprep.subr.mxu0 0.0
      %3085 = vmatpush1.msra.mxu0 0.0
      %3086 = vmatprep.subr.mxu0 0.0
      %3087 = vmatpush1.msra.mxu0 0.0
      %3088 = vmatprep.subr.mxu0 0.0
      %3089 = vmatpush1.msra.mxu0 0.0
      %3090 = vmatprep.subr.mxu0 0.0
      %3091 = vmatpush1.msra.mxu0 0.0
      %3092 = vmatprep.subr.mxu0 0.0
      %3093 = vmatpush1.msra.mxu0 0.0
      %3094 = vmatprep.subr.mxu0 0.0
      %3095 = vmatpush1.msra.mxu0 0.0
      %3096 = vmatprep.subr.mxu0 0.0
      %3097 = vmatpush1.msra.mxu0 0.0
      %3098 = vmatprep.subr.mxu0 0.0
      %3099 = vmatpush1.msra.mxu0 0.0
      %3100 = vmatprep.subr.mxu0 0.0
      %3101 = vmatpush1.msra.mxu0 0.0
      %3102 = vmatprep.subr.mxu0 0.0
      %3103 = vmatpush1.msra.mxu0 0.0
      %3104 = vmatprep.subr.mxu0 0.0
      %3105 = vmatpush1.msra.mxu0 0.0
      %3106 = vmatprep.subr.mxu0 0.0
      %3107 = vmatpush1.msra.mxu0 0.0
      %3108 = vmatprep.subr.mxu0 0.0
      %v3109 = vand.u32 %v2961, 4294901760
      %v3110 = vsub.f32 %v2961, %v3109
      %v3111 = vand.u32 %v3110, 4294901760
      %v3112 = vsub.f32 %v3110, %v3111
      %v3113 = vand.u32 %v3112, 4294901760
      %3114 = vmatpush1.msra.mxu0 %v3113
      %3115 = vmatprep.subr.mxu0 0.0
      %v3116 = vand.u32 %v2960, 4294901760
      %v3117 = vsub.f32 %v2960, %v3116
      %v3118 = vand.u32 %v3117, 4294901760
      %v3119 = vsub.f32 %v3117, %v3118
      %v3120 = vand.u32 %v3119, 4294901760
      %3121 = vmatpush1.msra.mxu0 %v3120
      %3122 = vmatprep.subr.mxu0 0.0
      %v3123 = vand.u32 %v2959, 4294901760
      %v3124 = vsub.f32 %v2959, %v3123
      %v3125 = vand.u32 %v3124, 4294901760
      %v3126 = vsub.f32 %v3124, %v3125
      %v3127 = vand.u32 %v3126, 4294901760
      %3128 = vmatpush1.msra.mxu0 %v3127
      %3129 = vmatprep.subr.mxu0 0.0
      %v3130 = vand.u32 %v2958, 4294901760
      %v3131 = vsub.f32 %v2958, %v3130
      %v3132 = vand.u32 %v3131, 4294901760
      %v3133 = vsub.f32 %v3131, %v3132
      %v3134 = vand.u32 %v3133, 4294901760
      %3135 = vmatpush1.msra.mxu0 %v3134
      %3136 = vmatprep.subr.mxu0 0.0
      %3137 = vmatpush2.msra.mxu0 0.0
      %3138 = vmatprep.subr.mxu0 0.0
      %3139 = vmatpush2.msra.mxu0 0.0
      %3140 = vmatprep.subr.mxu0 0.0
      %3141 = vmatpush2.msra.mxu0 0.0
      %3142 = vmatprep.subr.mxu0 0.0
      %3143 = vmatpush2.msra.mxu0 0.0
      %3144 = vmatprep.subr.mxu0 0.0
      %3145 = vmatpush2.msra.mxu0 0.0
      %3146 = vmatprep.subr.mxu0 0.0
      %3147 = vmatpush2.msra.mxu0 0.0
      %3148 = vmatprep.subr.mxu0 0.0
      %3149 = vmatpush2.msra.mxu0 0.0
      %3150 = vmatprep.subr.mxu0 0.0
      %3151 = vmatpush2.msra.mxu0 0.0
      %3152 = vmatprep.subr.mxu0 0.0
      %3153 = vmatpush2.msra.mxu0 0.0
      %3154 = vmatprep.subr.mxu0 0.0
      %3155 = vmatpush2.msra.mxu0 0.0
      %3156 = vmatprep.subr.mxu0 0.0
      %3157 = vmatpush2.msra.mxu0 0.0
      %3158 = vmatprep.subr.mxu0 0.0
      %3159 = vmatpush2.msra.mxu0 0.0
      %3160 = vmatprep.subr.mxu0 0.0
      %3161 = vmatpush2.msra.mxu0 0.0
      %3162 = vmatprep.subr.mxu0 0.0
      %3163 = vmatpush2.msra.mxu0 0.0
      %3164 = vmatprep.subr.mxu0 0.0
      %3165 = vmatpush2.msra.mxu0 0.0
      %3166 = vmatprep.subr.mxu0 0.0
      %3167 = vmatpush2.msra.mxu0 0.0
      %3168 = vmatprep.mubr.f32.mxu0 0.0
      %v3169 = vand.u32 %v2964, 4294901760
      %3170 = vmatmul.mubr.f32.gmra.mxu0 %v3169
      %v3171 = vpop.f32.mrf.mxu0
      %v3172 = vadd.f32 %v3051, %v3171
      %v3173 = vpop.f32.mrf.mxu0
      %3174 = vmatprep.mubr.f32.mxu0 0.0
      %v3175 = vand.u32 %v2967, 4294901760
      %3176 = vmatmul.mubr.f32.gmra.mxu0 %v3175
      %v3177 = vpop.f32.mrf.mxu0
      %v3178 = vadd.f32 %v3061, %v3177
      %v3179 = vpop.f32.mrf.mxu0
      %3180 = vmatprep.mubr.f32.mxu0 0.0
      %v3181 = vand.u32 %v2970, 4294901760
      %3182 = vmatmul.mubr.f32.gmra.mxu0 %v3181
      %v3183 = vpop.f32.mrf.mxu0
      %v3184 = vadd.f32 %v3071, %v3183
      %v3185 = vpop.f32.mrf.mxu0
      %3186 = vmatprep.mubr.f32.mxu0 0.0
      %v3187 = vand.u32 %v2973, 4294901760
      %3188 = vmatmul.mubr.f32.gmra.mxu0 %v3187
      %v3189 = vpop.f32.mrf.mxu0
      %v3190 = vadd.f32 %v3081, %v3189
      %v3191 = vpop.f32.mrf.mxu0
      %3192 = vdwg.mxu0
      %3193 = vmatprep.subr.mxu0 0.0
      %3194 = vmatpush1.msra.mxu0 0.0
      %3195 = vmatprep.subr.mxu0 0.0
      %3196 = vmatpush1.msra.mxu0 0.0
      %3197 = vmatprep.subr.mxu0 0.0
      %3198 = vmatpush1.msra.mxu0 0.0
      %3199 = vmatprep.subr.mxu0 0.0
      %3200 = vmatpush1.msra.mxu0 0.0
      %3201 = vmatprep.subr.mxu0 0.0
      %3202 = vmatpush1.msra.mxu0 0.0
      %3203 = vmatprep.subr.mxu0 0.0
      %3204 = vmatpush1.msra.mxu0 0.0
      %3205 = vmatprep.subr.mxu0 0.0
      %3206 = vmatpush1.msra.mxu0 0.0
      %3207 = vmatprep.subr.mxu0 0.0
      %3208 = vmatpush1.msra.mxu0 0.0
      %3209 = vmatprep.subr.mxu0 0.0
      %3210 = vmatpush1.msra.mxu0 0.0
      %3211 = vmatprep.subr.mxu0 0.0
      %3212 = vmatpush1.msra.mxu0 0.0
      %3213 = vmatprep.subr.mxu0 0.0
      %3214 = vmatpush1.msra.mxu0 0.0
      %3215 = vmatprep.subr.mxu0 0.0
      %3216 = vmatpush1.msra.mxu0 0.0
      %3217 = vmatprep.subr.mxu0 0.0
      %v3218 = vand.u32 %v2961, 4294901760
      %v3219 = vsub.f32 %v2961, %v3218
      %3220 = vmatpush1.msra.mxu0 %v3219
      %3221 = vmatprep.subr.mxu0 0.0
      %v3222 = vand.u32 %v2960, 4294901760
      %v3223 = vsub.f32 %v2960, %v3222
      %3224 = vmatpush1.msra.mxu0 %v3223
      %3225 = vmatprep.subr.mxu0 0.0
      %v3226 = vand.u32 %v2959, 4294901760
      %v3227 = vsub.f32 %v2959, %v3226
      %3228 = vmatpush1.msra.mxu0 %v3227
      %3229 = vmatprep.subr.mxu0 0.0
      %v3230 = vand.u32 %v2958, 4294901760
      %v3231 = vsub.f32 %v2958, %v3230
      %3232 = vmatpush1.msra.mxu0 %v3231
      %3233 = vmatprep.subr.mxu0 0.0
      %3234 = vmatpush2.msra.mxu0 0.0
      %3235 = vmatprep.subr.mxu0 0.0
      %3236 = vmatpush2.msra.mxu0 0.0
      %3237 = vmatprep.subr.mxu0 0.0
      %3238 = vmatpush2.msra.mxu0 0.0
      %3239 = vmatprep.subr.mxu0 0.0
      %3240 = vmatpush2.msra.mxu0 0.0
      %3241 = vmatprep.subr.mxu0 0.0
      %3242 = vmatpush2.msra.mxu0 0.0
      %3243 = vmatprep.subr.mxu0 0.0
      %3244 = vmatpush2.msra.mxu0 0.0
      %3245 = vmatprep.subr.mxu0 0.0
      %3246 = vmatpush2.msra.mxu0 0.0
      %3247 = vmatprep.subr.mxu0 0.0
      %3248 = vmatpush2.msra.mxu0 0.0
      %3249 = vmatprep.subr.mxu0 0.0
      %3250 = vmatpush2.msra.mxu0 0.0
      %3251 = vmatprep.subr.mxu0 0.0
      %3252 = vmatpush2.msra.mxu0 0.0
      %3253 = vmatprep.subr.mxu0 0.0
      %3254 = vmatpush2.msra.mxu0 0.0
      %3255 = vmatprep.subr.mxu0 0.0
      %3256 = vmatpush2.msra.mxu0 0.0
      %3257 = vmatprep.subr.mxu0 0.0
      %3258 = vmatpush2.msra.mxu0 0.0
      %3259 = vmatprep.subr.mxu0 0.0
      %3260 = vmatpush2.msra.mxu0 0.0
      %3261 = vmatprep.subr.mxu0 0.0
      %3262 = vmatpush2.msra.mxu0 0.0
      %3263 = vmatprep.subr.mxu0 0.0
      %3264 = vmatpush2.msra.mxu0 0.0
      %3265 = vmatprep.mubr.f32.mxu0 0.0
      %v3266 = vand.u32 %v2964, 4294901760
      %v3267 = vsub.f32 %v2964, %v3266
      %3268 = vmatmul.mubr.f32.gmra.mxu0 %v3267
      %v3269 = vpop.f32.mrf.mxu0
      %v3270 = vadd.f32 %v3172, %v3269
      %v3271 = vpop.f32.mrf.mxu0
      %3272 = vmatprep.mubr.f32.mxu0 0.0
      %v3273 = vand.u32 %v2967, 4294901760
      %v3274 = vsub.f32 %v2967, %v3273
      %3275 = vmatmul.mubr.f32.gmra.mxu0 %v3274
      %v3276 = vpop.f32.mrf.mxu0
      %v3277 = vadd.f32 %v3178, %v3276
      %v3278 = vpop.f32.mrf.mxu0
      %3279 = vmatprep.mubr.f32.mxu0 0.0
      %v3280 = vand.u32 %v2970, 4294901760
      %v3281 = vsub.f32 %v2970, %v3280
      %3282 = vmatmul.mubr.f32.gmra.mxu0 %v3281
      %v3283 = vpop.f32.mrf.mxu0
      %v3284 = vadd.f32 %v3184, %v3283
      %v3285 = vpop.f32.mrf.mxu0
      %3286 = vmatprep.mubr.f32.mxu0 0.0
      %v3287 = vand.u32 %v2973, 4294901760
      %v3288 = vsub.f32 %v2973, %v3287
      %3289 = vmatmul.mubr.f32.gmra.mxu0 %v3288
      %v3290 = vpop.f32.mrf.mxu0
      %v3291 = vadd.f32 %v3190, %v3290
      %v3292 = vpop.f32.mrf.mxu0
      %3293 = vdwg.mxu0
      %3294 = vmatprep.subr.mxu0 0.0
      %3295 = vmatpush1.msra.mxu0 0.0
      %3296 = vmatprep.subr.mxu0 0.0
      %3297 = vmatpush1.msra.mxu0 0.0
      %3298 = vmatprep.subr.mxu0 0.0
      %3299 = vmatpush1.msra.mxu0 0.0
      %3300 = vmatprep.subr.mxu0 0.0
      %3301 = vmatpush1.msra.mxu0 0.0
      %3302 = vmatprep.subr.mxu0 0.0
      %3303 = vmatpush1.msra.mxu0 0.0
      %3304 = vmatprep.subr.mxu0 0.0
      %3305 = vmatpush1.msra.mxu0 0.0
      %3306 = vmatprep.subr.mxu0 0.0
      %3307 = vmatpush1.msra.mxu0 0.0
      %3308 = vmatprep.subr.mxu0 0.0
      %3309 = vmatpush1.msra.mxu0 0.0
      %3310 = vmatprep.subr.mxu0 0.0
      %3311 = vmatpush1.msra.mxu0 0.0
      %3312 = vmatprep.subr.mxu0 0.0
      %3313 = vmatpush1.msra.mxu0 0.0
      %3314 = vmatprep.subr.mxu0 0.0
      %3315 = vmatpush1.msra.mxu0 0.0
      %3316 = vmatprep.subr.mxu0 0.0
      %3317 = vmatpush1.msra.mxu0 0.0
      %3318 = vmatprep.subr.mxu0 0.0
      %v3319 = vand.u32 %v2961, 4294901760
      %3320 = vmatpush1.msra.mxu0 %v3319
      %3321 = vmatprep.subr.mxu0 0.0
      %v3322 = vand.u32 %v2960, 4294901760
      %3323 = vmatpush1.msra.mxu0 %v3322
      %3324 = vmatprep.subr.mxu0 0.0
      %v3325 = vand.u32 %v2959, 4294901760
      %3326 = vmatpush1.msra.mxu0 %v3325
      %3327 = vmatprep.subr.mxu0 0.0
      %v3328 = vand.u32 %v2958, 4294901760
      %3329 = vmatpush1.msra.mxu0 %v3328
      %3330 = vmatprep.subr.mxu0 0.0
      %3331 = vmatpush2.msra.mxu0 0.0
      %3332 = vmatprep.subr.mxu0 0.0
      %3333 = vmatpush2.msra.mxu0 0.0
      %3334 = vmatprep.subr.mxu0 0.0
      %3335 = vmatpush2.msra.mxu0 0.0
      %3336 = vmatprep.subr.mxu0 0.0
      %3337 = vmatpush2.msra.mxu0 0.0
      %3338 = vmatprep.subr.mxu0 0.0
      %3339 = vmatpush2.msra.mxu0 0.0
      %3340 = vmatprep.subr.mxu0 0.0
      %3341 = vmatpush2.msra.mxu0 0.0
      %3342 = vmatprep.subr.mxu0 0.0
      %3343 = vmatpush2.msra.mxu0 0.0
      %3344 = vmatprep.subr.mxu0 0.0
      %3345 = vmatpush2.msra.mxu0 0.0
      %3346 = vmatprep.subr.mxu0 0.0
      %3347 = vmatpush2.msra.mxu0 0.0
      %3348 = vmatprep.subr.mxu0 0.0
      %3349 = vmatpush2.msra.mxu0 0.0
      %3350 = vmatprep.subr.mxu0 0.0
      %3351 = vmatpush2.msra.mxu0 0.0
      %3352 = vmatprep.subr.mxu0 0.0
      %3353 = vmatpush2.msra.mxu0 0.0
      %3354 = vmatprep.subr.mxu0 0.0
      %3355 = vmatpush2.msra.mxu0 0.0
      %3356 = vmatprep.subr.mxu0 0.0
      %3357 = vmatpush2.msra.mxu0 0.0
      %3358 = vmatprep.subr.mxu0 0.0
      %3359 = vmatpush2.msra.mxu0 0.0
      %3360 = vmatprep.subr.mxu0 0.0
      %3361 = vmatpush2.msra.mxu0 0.0
      %3362 = vmatprep.mubr.f32.mxu0 0.0
      %v3363 = vand.u32 %v2964, 4294901760
      %v3364 = vsub.f32 %v2964, %v3363
      %v3365 = vand.u32 %v3364, 4294901760
      %3366 = vmatmul.mubr.f32.gmra.mxu0 %v3365
      %v3367 = vpop.f32.mrf.mxu0
      %v3368 = vadd.f32 %v3270, %v3367
      %v3369 = vpop.f32.mrf.mxu0
      %3370 = vmatprep.mubr.f32.mxu0 0.0
      %v3371 = vand.u32 %v2967, 4294901760
      %v3372 = vsub.f32 %v2967, %v3371
      %v3373 = vand.u32 %v3372, 4294901760
      %3374 = vmatmul.mubr.f32.gmra.mxu0 %v3373
      %v3375 = vpop.f32.mrf.mxu0
      %v3376 = vadd.f32 %v3277, %v3375
      %v3377 = vpop.f32.mrf.mxu0
      %3378 = vmatprep.mubr.f32.mxu0 0.0
      %v3379 = vand.u32 %v2970, 4294901760
      %v3380 = vsub.f32 %v2970, %v3379
      %v3381 = vand.u32 %v3380, 4294901760
      %3382 = vmatmul.mubr.f32.gmra.mxu0 %v3381
      %v3383 = vpop.f32.mrf.mxu0
      %v3384 = vadd.f32 %v3284, %v3383
      %v3385 = vpop.f32.mrf.mxu0
      %3386 = vmatprep.mubr.f32.mxu0 0.0
      %v3387 = vand.u32 %v2973, 4294901760
      %v3388 = vsub.f32 %v2973, %v3387
      %v3389 = vand.u32 %v3388, 4294901760
      %3390 = vmatmul.mubr.f32.gmra.mxu0 %v3389
      %v3391 = vpop.f32.mrf.mxu0
      %v3392 = vadd.f32 %v3291, %v3391
      %v3393 = vpop.f32.mrf.mxu0
      %3394 = vdwg.mxu0
      %3395 = vmatprep.subr.mxu0 0.0
      %3396 = vmatpush1.msra.mxu0 0.0
      %3397 = vmatprep.subr.mxu0 0.0
      %3398 = vmatpush1.msra.mxu0 0.0
      %3399 = vmatprep.subr.mxu0 0.0
      %3400 = vmatpush1.msra.mxu0 0.0
      %3401 = vmatprep.subr.mxu0 0.0
      %3402 = vmatpush1.msra.mxu0 0.0
      %3403 = vmatprep.subr.mxu0 0.0
      %3404 = vmatpush1.msra.mxu0 0.0
      %3405 = vmatprep.subr.mxu0 0.0
      %3406 = vmatpush1.msra.mxu0 0.0
      %3407 = vmatprep.subr.mxu0 0.0
      %3408 = vmatpush1.msra.mxu0 0.0
      %3409 = vmatprep.subr.mxu0 0.0
      %3410 = vmatpush1.msra.mxu0 0.0
      %3411 = vmatprep.subr.mxu0 0.0
      %3412 = vmatpush1.msra.mxu0 0.0
      %3413 = vmatprep.subr.mxu0 0.0
      %3414 = vmatpush1.msra.mxu0 0.0
      %3415 = vmatprep.subr.mxu0 0.0
      %3416 = vmatpush1.msra.mxu0 0.0
      %3417 = vmatprep.subr.mxu0 0.0
      %3418 = vmatpush1.msra.mxu0 0.0
      %3419 = vmatprep.subr.mxu0 0.0
      %v3420 = vand.u32 %v2961, 4294901760
      %v3421 = vsub.f32 %v2961, %v3420
      %v3422 = vand.u32 %v3421, 4294901760
      %3423 = vmatpush1.msra.mxu0 %v3422
      %3424 = vmatprep.subr.mxu0 0.0
      %v3425 = vand.u32 %v2960, 4294901760
      %v3426 = vsub.f32 %v2960, %v3425
      %v3427 = vand.u32 %v3426, 4294901760
      %3428 = vmatpush1.msra.mxu0 %v3427
      %3429 = vmatprep.subr.mxu0 0.0
      %v3430 = vand.u32 %v2959, 4294901760
      %v3431 = vsub.f32 %v2959, %v3430
      %v3432 = vand.u32 %v3431, 4294901760
      %3433 = vmatpush1.msra.mxu0 %v3432
      %3434 = vmatprep.subr.mxu0 0.0
      %v3435 = vand.u32 %v2958, 4294901760
      %v3436 = vsub.f32 %v2958, %v3435
      %v3437 = vand.u32 %v3436, 4294901760
      %3438 = vmatpush1.msra.mxu0 %v3437
      %3439 = vmatprep.subr.mxu0 0.0
      %3440 = vmatpush2.msra.mxu0 0.0
      %3441 = vmatprep.subr.mxu0 0.0
      %3442 = vmatpush2.msra.mxu0 0.0
      %3443 = vmatprep.subr.mxu0 0.0
      %3444 = vmatpush2.msra.mxu0 0.0
      %3445 = vmatprep.subr.mxu0 0.0
      %3446 = vmatpush2.msra.mxu0 0.0
      %3447 = vmatprep.subr.mxu0 0.0
      %3448 = vmatpush2.msra.mxu0 0.0
      %3449 = vmatprep.subr.mxu0 0.0
      %3450 = vmatpush2.msra.mxu0 0.0
      %3451 = vmatprep.subr.mxu0 0.0
      %3452 = vmatpush2.msra.mxu0 0.0
      %3453 = vmatprep.subr.mxu0 0.0
      %3454 = vmatpush2.msra.mxu0 0.0
      %3455 = vmatprep.subr.mxu0 0.0
      %3456 = vmatpush2.msra.mxu0 0.0
      %3457 = vmatprep.subr.mxu0 0.0
      %3458 = vmatpush2.msra.mxu0 0.0
      %3459 = vmatprep.subr.mxu0 0.0
      %3460 = vmatpush2.msra.mxu0 0.0
      %3461 = vmatprep.subr.mxu0 0.0
      %3462 = vmatpush2.msra.mxu0 0.0
      %3463 = vmatprep.subr.mxu0 0.0
      %3464 = vmatpush2.msra.mxu0 0.0
      %3465 = vmatprep.subr.mxu0 0.0
      %3466 = vmatpush2.msra.mxu0 0.0
      %3467 = vmatprep.subr.mxu0 0.0
      %3468 = vmatpush2.msra.mxu0 0.0
      %3469 = vmatprep.subr.mxu0 0.0
      %3470 = vmatpush2.msra.mxu0 0.0
      %3471 = vmatprep.mubr.f32.mxu0 0.0
      %v3472 = vand.u32 %v2964, 4294901760
      %3473 = vmatmul.mubr.f32.gmra.mxu0 %v3472
      %v3474 = vpop.f32.mrf.mxu0
      %v3475 = vadd.f32 %v3368, %v3474
      %v3476 = vpop.f32.mrf.mxu0
      %3477 = vmatprep.mubr.f32.mxu0 0.0
      %v3478 = vand.u32 %v2967, 4294901760
      %3479 = vmatmul.mubr.f32.gmra.mxu0 %v3478
      %v3480 = vpop.f32.mrf.mxu0
      %v3481 = vadd.f32 %v3376, %v3480
      %v3482 = vpop.f32.mrf.mxu0
      %3483 = vmatprep.mubr.f32.mxu0 0.0
      %v3484 = vand.u32 %v2970, 4294901760
      %3485 = vmatmul.mubr.f32.gmra.mxu0 %v3484
      %v3486 = vpop.f32.mrf.mxu0
      %v3487 = vadd.f32 %v3384, %v3486
      %v3488 = vpop.f32.mrf.mxu0
      %3489 = vmatprep.mubr.f32.mxu0 0.0
      %v3490 = vand.u32 %v2973, 4294901760
      %3491 = vmatmul.mubr.f32.gmra.mxu0 %v3490
      %v3492 = vpop.f32.mrf.mxu0
      %v3493 = vadd.f32 %v3392, %v3492
      %v3494 = vpop.f32.mrf.mxu0
      %3495 = vdwg.mxu0
      %3496 = vmatprep.subr.mxu0 0.0
      %3497 = vmatpush1.msra.mxu0 0.0
      %3498 = vmatprep.subr.mxu0 0.0
      %3499 = vmatpush1.msra.mxu0 0.0
      %3500 = vmatprep.subr.mxu0 0.0
      %3501 = vmatpush1.msra.mxu0 0.0
      %3502 = vmatprep.subr.mxu0 0.0
      %3503 = vmatpush1.msra.mxu0 0.0
      %3504 = vmatprep.subr.mxu0 0.0
      %3505 = vmatpush1.msra.mxu0 0.0
      %3506 = vmatprep.subr.mxu0 0.0
      %3507 = vmatpush1.msra.mxu0 0.0
      %3508 = vmatprep.subr.mxu0 0.0
      %3509 = vmatpush1.msra.mxu0 0.0
      %3510 = vmatprep.subr.mxu0 0.0
      %3511 = vmatpush1.msra.mxu0 0.0
      %3512 = vmatprep.subr.mxu0 0.0
      %3513 = vmatpush1.msra.mxu0 0.0
      %3514 = vmatprep.subr.mxu0 0.0
      %3515 = vmatpush1.msra.mxu0 0.0
      %3516 = vmatprep.subr.mxu0 0.0
      %3517 = vmatpush1.msra.mxu0 0.0
      %3518 = vmatprep.subr.mxu0 0.0
      %3519 = vmatpush1.msra.mxu0 0.0
      %3520 = vmatprep.subr.mxu0 0.0
      %v3521 = vand.u32 %v2961, 4294901760
      %3522 = vmatpush1.msra.mxu0 %v3521
      %3523 = vmatprep.subr.mxu0 0.0
      %v3524 = vand.u32 %v2960, 4294901760
      %3525 = vmatpush1.msra.mxu0 %v3524
      %3526 = vmatprep.subr.mxu0 0.0
      %v3527 = vand.u32 %v2959, 4294901760
      %3528 = vmatpush1.msra.mxu0 %v3527
      %3529 = vmatprep.subr.mxu0 0.0
      %v3530 = vand.u32 %v2958, 4294901760
      %3531 = vmatpush1.msra.mxu0 %v3530
      %3532 = vmatprep.subr.mxu0 0.0
      %3533 = vmatpush2.msra.mxu0 0.0
      %3534 = vmatprep.subr.mxu0 0.0
      %3535 = vmatpush2.msra.mxu0 0.0
      %3536 = vmatprep.subr.mxu0 0.0
      %3537 = vmatpush2.msra.mxu0 0.0
      %3538 = vmatprep.subr.mxu0 0.0
      %3539 = vmatpush2.msra.mxu0 0.0
      %3540 = vmatprep.subr.mxu0 0.0
      %3541 = vmatpush2.msra.mxu0 0.0
      %3542 = vmatprep.subr.mxu0 0.0
      %3543 = vmatpush2.msra.mxu0 0.0
      %3544 = vmatprep.subr.mxu0 0.0
      %3545 = vmatpush2.msra.mxu0 0.0
      %3546 = vmatprep.subr.mxu0 0.0
      %3547 = vmatpush2.msra.mxu0 0.0
      %3548 = vmatprep.subr.mxu0 0.0
      %3549 = vmatpush2.msra.mxu0 0.0
      %3550 = vmatprep.subr.mxu0 0.0
      %3551 = vmatpush2.msra.mxu0 0.0
      %3552 = vmatprep.subr.mxu0 0.0
      %3553 = vmatpush2.msra.mxu0 0.0
      %3554 = vmatprep.subr.mxu0 0.0
      %3555 = vmatpush2.msra.mxu0 0.0
      %3556 = vmatprep.subr.mxu0 0.0
      %3557 = vmatpush2.msra.mxu0 0.0
      %3558 = vmatprep.subr.mxu0 0.0
      %3559 = vmatpush2.msra.mxu0 0.0
      %3560 = vmatprep.subr.mxu0 0.0
      %3561 = vmatpush2.msra.mxu0 0.0
      %3562 = vmatprep.subr.mxu0 0.0
      %3563 = vmatpush2.msra.mxu0 0.0
      %3564 = vmatprep.mubr.f32.mxu0 0.0
      %v3565 = vand.u32 %v2964, 4294901760
      %3566 = vmatmul.mubr.f32.gmra.mxu0 %v3565
      %v3567 = vpop.f32.mrf.mxu0
      %v3568 = vadd.f32 %v3475, %v3567
      %v3569 = vpop.f32.mrf.mxu0
      %3570 = vmatprep.mubr.f32.mxu0 0.0
      %v3571 = vand.u32 %v2967, 4294901760
      %3572 = vmatmul.mubr.f32.gmra.mxu0 %v3571
      %v3573 = vpop.f32.mrf.mxu0
      %v3574 = vadd.f32 %v3481, %v3573
      %v3575 = vpop.f32.mrf.mxu0
      %3576 = vmatprep.mubr.f32.mxu0 0.0
      %v3577 = vand.u32 %v2970, 4294901760
      %3578 = vmatmul.mubr.f32.gmra.mxu0 %v3577
      %v3579 = vpop.f32.mrf.mxu0
      %v3580 = vadd.f32 %v3487, %v3579
      %v3581 = vpop.f32.mrf.mxu0
      %3582 = vmatprep.mubr.f32.mxu0 0.0
      %v3583 = vand.u32 %v2973, 4294901760
      %3584 = vmatmul.mubr.f32.gmra.mxu0 %v3583
      %v3585 = vpop.f32.mrf.mxu0
      %v3586 = vadd.f32 %v3493, %v3585
      %v3587 = vpop.f32.mrf.mxu0
      %3588 = vdwg.mxu0
      %v3589 = vld [vmem:[#allocation2] sm:$0xff]
      %v3590 = vld [vmem:[#allocation2 + $0x8] sm:$0xff]
      %v3591 = vld [vmem:[#allocation2 + $0x10] sm:$0xff]
      %v3592 = vld [vmem:[#allocation2 + $0x18] sm:$0xff]
      %v3593 = vadd.f32 %v3589, %v3568
      %v3594 = vadd.f32 %v3590, %v3574
      %v3595 = vadd.f32 %v3591, %v3580
      %v3596 = vadd.f32 %v3592, %v3586
      %v3597 = vld [vmem:[%s2] sm:$0x1]
      %v3599 = vlaneseq
      %v3600 = vshrl.u32 %v3599, 7
      %v3601 = vsub.s32 0, %v3600
      %v3602 = vrot.slane %v3597, %v3601
      %v3604 = vadd.f32 %v3593, %v3602
      %v3605 = vadd.f32 %v3594, %v3602
      %v3606 = vadd.f32 %v3595, %v3602
      %v3607 = vadd.f32 %v3596, %v3602
      %3608 = vst [vmem:[#allocation5] sm:$0xff] %v3604
      %3609 = vst [vmem:[#allocation5 + $0x8] sm:$0xff] %v3605
      %3610 = vst [vmem:[#allocation5 + $0x10] sm:$0xff] %v3606
      %3611 = vst [vmem:[#allocation5 + $0x18] sm:$0xff] %v3607
    $region45: #{tpu_custom_call.1} parent=1 // pred_fallthru
      _
    // Predicated region
    $region46: #{tpu_custom_call.1} parent=1 // pred_check
      _
    $region47: #{tpu_custom_call.1} parent=1 // pred_check_branch
      %3613 = sbr.rel (0) target = $region49
    $region48: #{tpu_custom_call.1} parent=1 // pred_region
      %s3615 = ssub.s32 512, 512
      %3616 = vsyncadd [#allocation6], %s3615
      %s3617 = sshll.u32 [#allocation5], 4
      %s3618 = int_to_ptr.vmem [resolvable:$true] %s3617
      %3623 = dma.vmem_to_hbm [thread:$0]  %s3618, 512, %s6, [#allocation6], 128, 128, 8
    $region49: #{tpu_custom_call.1} parent=1 // pred_fallthru
      _
    // Predicated region
    $region50: #{tpu_custom_call.1} parent=1 // pred_check
      _
    $region51: #{tpu_custom_call.1} parent=1 // pred_check_branch
      %3625 = sbr.rel (0) target = $region53
    $region52: #{tpu_custom_call.1} parent=1 // pred_region
      %s3627 = ssub.s32 512, 512
      %3628 = vsyncadd [#allocation8], %s3627
      %s3629 = sshll.u32 [#allocation7], 4
      %s3630 = int_to_ptr.vmem [resolvable:$true] %s3629
      %3635 = dma.vmem_to_hbm [thread:$0]  %s3630, 512, %s7, [#allocation8], 128, 128, 8
    $region53: #{tpu_custom_call.1} parent=1 // pred_fallthru
      _
    // Predicated region
    $region54: #{tpu_custom_call.1} parent=1 // pred_check
      _
    $region55: #{tpu_custom_call.1} parent=1 // pred_check_branch
      %3637 = sbr.rel (0) target = $region57
    $region56: #{tpu_custom_call.1} parent=1 // pred_region
      %3638 = dma.done [#allocation6], 512
    $region57: #{tpu_custom_call.1} parent=1 // pred_fallthru
      _
    // Predicated region
    $region58: #{tpu_custom_call.1} parent=1 // pred_check
      _
    $region59: #{tpu_custom_call.1} parent=1 // pred_check_branch
      %3640 = sbr.rel (0) target = $region61
    $region60: #{tpu_custom_call.1} parent=1 // pred_region
      %3641 = dma.done [#allocation8], 512
    $region61: #{tpu_custom_call.1} parent=1 // pred_fallthru
      _
    %3642 = vsyncpa [#allocation6], 1
    %3643 = vsyncpa [#allocation8], 1

</llo_original>
